<compile_context>
chip_gen: v5e
topology: v5e:2x2
jax: 0.10.0
libtpu: 0.0.40
codegen_flags: <defaults>
</compile_context>

<pallas_src>
import functools

import jax
import jax.numpy as jnp
from jax.experimental import pallas as pl
from jax.experimental.pallas import tpu as pltpu

LN_EPS = 1e-5  # PyTorch nn.LayerNorm default


def _detect_budgets():
    """Chip-aware tile/VMEM budgets (larger tiles on 128-MiB-VMEM parts)."""
    try:
        vmem = pltpu.get_tpu_info().vmem_capacity_bytes
    except Exception:
        vmem = 64 * 1024 * 1024  # conservative (v7x per-TC)
    if vmem >= 100 * 1024 * 1024:          # v5e / v6e
        return 1024, 96 * 1024 * 1024
    return 512, 48 * 1024 * 1024           # v7x


MAX_ROWS, VMEM_LIMIT = _detect_budgets()


# ----------------------------------------------------------------------------
# In-kernel helpers (operate on VMEM-resident jnp values, f32 math)
# ----------------------------------------------------------------------------
def _layernorm(x, gamma, beta):
    mean = jnp.mean(x, axis=-1, keepdims=True)
    var = jnp.mean((x - mean) ** 2, axis=-1, keepdims=True)
    return (x - mean) * jax.lax.rsqrt(var + LN_EPS) * gamma + beta


def _gelu(x):
    # tanh-approx GELU; kept in f32 (v5e has no bf16 VPU/EUP, and it limits
    # numerical drift vs the erf reference).
    c = jnp.float32(0.7978845608028654)  # sqrt(2/pi)
    return 0.5 * x * (1.0 + jnp.tanh(c * (x + 0.044715 * x * x * x)))


def _round_up(v, m):
    return -(-v // m) * m


def _choose_tb(bn, n, max_rows=None):
    """Largest divisor of bn with TB*N <= max_rows, keeping >= 2 grid steps."""
    max_rows = MAX_ROWS if max_rows is None else max_rows
    tb = 1
    for d in range(1, bn + 1):
        if bn % d == 0 and d * n <= max_rows and (bn // d >= 2 or bn == 1):
            tb = d
    return tb


def _choose_tm(m, max_rows=None):
    """MLP row-tile: multiple of 8, >= 2 grid steps when m is big enough."""
    max_rows = MAX_ROWS if max_rows is None else max_rows
    if m <= 8:
        return m                       # single full block (full-dim is legal)
    half = -(-m // 2)                  # >= 2 grid steps for megacore
    tm = _round_up(half, 8)            # sublane-aligned rows
    return max(8, min(tm, max_rows))


# ----------------------------------------------------------------------------
# Kernel 1: fused LayerNorm + multi-head self-attention (qkv_bias=False) + proj
#           (+ optional temporal_fc + residual epilogue for the temporal path)
#   grid = (Bn // TB,), TB sequences per grid step.
# ----------------------------------------------------------------------------
def attn_kernel(x_ref, g_ref, b_ref, wqkv_ref, wproj_ref, bproj_ref, *rest,
                num_heads, fuse_fc):
    if fuse_fc:
        wfc_ref, bfc_ref, o_ref, qkv_scr = rest
    else:
        o_ref, qkv_scr = rest

    TB, N, C = x_ref.shape
    hd = C // num_heads

    xn = _layernorm(x_ref[...].reshape(TB * N, C), g_ref[...], b_ref[...])
    xn = xn.astype(jnp.bfloat16)

    # qkv projection over all TB*N tokens at once (attention scale already
    # folded into the q columns of wqkv); result lands in a bf16 VMEM scratch
    # so the head loop reads cheap ref slices instead of a huge live value.
    qkv_scr[...] = (
        jnp.dot(xn, wqkv_ref[...], preferred_element_type=jnp.float32)
        .reshape(TB, N, 3 * C).astype(jnp.bfloat16))

    # Per-head attention with the output projection K-split into the loop:
    # no per-head lane-masked scratch stores, no concat.
    # TODO(synk): batch heads into a single einsum once multi-batch dot_general
    #             lowering is verified for this layout.
    o = jnp.zeros((TB * N, C), jnp.float32)
    for h in range(num_heads):                          # static, small head count
        qh = qkv_scr[:, :, h * hd:(h + 1) * hd]                       # (TB, N, hd)
        kh = qkv_scr[:, :, C + h * hd:C + (h + 1) * hd]
        vh = qkv_scr[:, :, 2 * C + h * hd:2 * C + (h + 1) * hd]
        s = jnp.einsum('bqd,bkd->bqk', qh, kh,
                       preferred_element_type=jnp.float32)            # (TB, N, N)
        s = s - jnp.max(s, axis=-1, keepdims=True)
        p = jnp.exp(s)
        p = p / jnp.sum(p, axis=-1, keepdims=True)       # exact softmax division
        oh = jnp.einsum('bqk,bkd->bqd', p.astype(jnp.bfloat16), vh,
                        preferred_element_type=jnp.float32)           # (TB, N, hd)
        o = o + jnp.dot(oh.reshape(TB * N, hd).astype(jnp.bfloat16),
                        wproj_ref[h * hd:(h + 1) * hd, :],
                        preferred_element_type=jnp.float32)
    o = o + bproj_ref[...]

    if fuse_fc:  # temporal path: temporal_fc + residual fused in the epilogue
        o = (jnp.dot(o.astype(jnp.bfloat16), wfc_ref[...],
                     preferred_element_type=jnp.float32) + bfc_ref[...])
        o = o.reshape(TB, N, C) + x_ref[...]   # residual; re-read from VMEM
    else:
        o = o.reshape(TB, N, C)
    o_ref[...] = o.astype(o_ref.dtype)


def attention(x, gamma, beta, wqkv, wproj, bproj, num_heads,
              wfc=None, bfc=None, out_dtype=jnp.float32):
    Bn, N, C = x.shape
    fuse_fc = wfc is not None
    TB = _choose_tb(Bn, N)
    grid = (Bn // TB,)

    kernel = functools.partial(attn_kernel, num_heads=num_heads, fuse_fc=fuse_fc)
    in_specs = [
        pl.BlockSpec((TB, N, C), lambda i: (i, 0, 0)),
        pl.BlockSpec((1, C), lambda i: (0, 0)),
        pl.BlockSpec((1, C), lambda i: (0, 0)),
        pl.BlockSpec((C, 3 * C), lambda i: (0, 0)),
        pl.BlockSpec((C, C), lambda i: (0, 0)),
        pl.BlockSpec((1, C), lambda i: (0, 0)),
    ]
    args = [x, gamma, beta, wqkv, wproj, bproj]
    if fuse_fc:
        in_specs += [pl.BlockSpec((C, C), lambda i: (0, 0)),
                     pl.BlockSpec((1, C), lambda i: (0, 0))]
        args += [wfc, bfc]

    return pl.pallas_call(
        kernel,
        out_shape=jax.ShapeDtypeStruct((Bn, N, C), out_dtype),
        grid=grid,
        in_specs=in_specs,
        out_specs=pl.BlockSpec((TB, N, C), lambda i: (i, 0, 0)),
        scratch_shapes=[pltpu.VMEM((TB, N, 3 * C), jnp.bfloat16)],
        compiler_params=pltpu.CompilerParams(
            dimension_semantics=("parallel",),
            vmem_limit_bytes=VMEM_LIMIT),
    )(*args)


# ----------------------------------------------------------------------------
# Kernel 2: fused residual-sum (two streams) + LayerNorm(norm2) + MLP
#           (fc1 -> GELU -> fc2) + residual, row-tiled, parallel grid axis.
# ----------------------------------------------------------------------------
def mlp_kernel(a_ref, b_ref, g_ref, be_ref, w1_ref, b1_ref, w2_ref, b2_ref,
               o_ref):
    # residual base x = a + b is formed in-kernel (saves an HBM round trip)
    x = a_ref[...].astype(jnp.float32) + b_ref[...].astype(jnp.float32)
    xn = _layernorm(x, g_ref[...], be_ref[...]).astype(jnp.bfloat16)
    h = jnp.dot(xn, w1_ref[...], preferred_element_type=jnp.float32) + b1_ref[...]
    h = _gelu(h).astype(jnp.bfloat16)
    y = jnp.dot(h, w2_ref[...], preferred_element_type=jnp.float32) + b2_ref[...]
    o_ref[...] = x + y                       # residual fused, f32


def mlp_residual(a2d, b2d, params):
    M, C = a2d.shape
    hidden = params["w1"].shape[1]
    TM = _choose_tm(M)
    grid = (pl.cdiv(M, TM),)
    return pl.pallas_call(
        mlp_kernel,
        out_shape=jax.ShapeDtypeStruct((M, C), jnp.float32),
        grid=grid,
        in_specs=[
            pl.BlockSpec((TM, C), lambda i: (i, 0)),
            pl.BlockSpec((TM, C), lambda i: (i, 0)),
            pl.BlockSpec((1, C), lambda i: (0, 0)),
            pl.BlockSpec((1, C), lambda i: (0, 0)),
            pl.BlockSpec((C, hidden), lambda i: (0, 0)),
            pl.BlockSpec((1, hidden), lambda i: (0, 0)),
            pl.BlockSpec((hidden, C), lambda i: (0, 0)),
            pl.BlockSpec((1, C), lambda i: (0, 0)),
        ],
        out_specs=pl.BlockSpec((TM, C), lambda i: (i, 0)),
        compiler_params=pltpu.CompilerParams(
            dimension_semantics=("parallel",),
            vmem_limit_bytes=VMEM_LIMIT),
    )(a2d, b2d, params["norm2_g"], params["norm2_b"],
      params["w1"], params["b1"], params["w2"], params["b2"])


# ----------------------------------------------------------------------------
# Block.forward (divided_space_time) -- glue reshapes/transposes in plain JAX
# ----------------------------------------------------------------------------
def block_forward(x, params, B, T, W, num_heads):
    _, Np, C = x.shape
    num_spatial = (Np - 1) // T
    H = num_spatial // W

    # --- temporal attention + temporal_fc + residual (one fused kernel) ----
    xt_r = x[:, 1:, :].reshape(B * H * W, T, C)        # 'b (h w t) m -> (b h w) t m'
    xt = attention(xt_r,
                   params["t_norm_g"], params["t_norm_b"],
                   params["t_wqkv"], params["t_wproj"], params["t_bproj"],
                   num_heads,
                   wfc=params["tfc_w"], bfc=params["tfc_b"],
                   out_dtype=jnp.float32)
    xt = xt.reshape(B, H * W * T, C)                   # residual already included

    # --- spatial attention --------------------------------------------------
    init_cls = x[:, 0:1, :]                            # (B, 1, C)
    cls_tok = jnp.tile(init_cls, (1, T, 1)).reshape(B * T, 1, C)
    # TODO(synk): fold this permutation + concat into the spatial attention
    #             BlockSpec index_map (grid over (B, T)); kept in XLA for now.
    xs = (xt.reshape(B, H, W, T, C)
            .transpose(0, 3, 1, 2, 4)
            .reshape(B * T, H * W, C))                 # 'b (h w t) m -> (b t) (h w) m'
    xs = jnp.concatenate([cls_tok, xs], axis=1)        # (B*T, 1+H*W, C)
    res_spatial = attention(xs,
                            params["norm1_g"], params["norm1_b"],
                            params["s_wqkv"], params["s_wproj"], params["s_bproj"],
                            num_heads, out_dtype=jnp.bfloat16)
    cls_out = (res_spatial[:, 0, :].astype(jnp.float32)
               .reshape(B, T, C).mean(axis=1, keepdims=True)
               .astype(jnp.bfloat16))
    res_sp = (res_spatial[:, 1:, :]
              .reshape(B, T, H, W, C)
              .transpose(0, 2, 3, 1, 4)
              .reshape(B, H * W * T, C))               # '(b t) (h w) m -> b (h w t) m'

    # --- MLP (residual sum of the two streams is fused into the kernel) -----
    a = jnp.concatenate([init_cls, xt], axis=1)        # (B, Np, C) f32
    b = jnp.concatenate([cls_out, res_sp], axis=1)     # (B, Np, C) bf16
    out = mlp_residual(a.reshape(B * Np, C), b.reshape(B * Np, C), params)
    return out.reshape(B, Np, C)


# ----------------------------------------------------------------------------
# Parameter init (matches the nn.Module shapes; weights pre-transposed to
# (in, out)) and device-side preparation (bf16 cast + scale folding).
# ----------------------------------------------------------------------------
def init_params(key, dim, mlp_ratio=4.0):
    hidden = int(dim * mlp_ratio)
    std = 0.02
    ks = jax.random.split(key, 7)
    p = {
        "norm1_g": jnp.ones((1, dim)),   "norm1_b": jnp.zeros((1, dim)),
        "t_norm_g": jnp.ones((1, dim)),  "t_norm_b": jnp.zeros((1, dim)),
        "norm2_g": jnp.ones((1, dim)),   "norm2_b": jnp.zeros((1, dim)),
        "s_wqkv": jax.random.normal(ks[0], (dim, 3 * dim)) * std,   # qkv_bias=False
        "s_wproj": jax.random.normal(ks[1], (dim, dim)) * std,
        "s_bproj": jnp.zeros((1, dim)),
        "t_wqkv": jax.random.normal(ks[2], (dim, 3 * dim)) * std,
        "t_wproj": jax.random.normal(ks[3], (dim, dim)) * std,
        "t_bproj": jnp.zeros((1, dim)),
        "tfc_w": jax.random.normal(ks[4], (dim, dim)) * std,
        "tfc_b": jnp.zeros((1, dim)),
        "w1": jax.random.normal(ks[5], (dim, hidden)) * std,
        "b1": jnp.zeros((1, hidden)),
        "w2": jax.random.normal(ks[6], (hidden, dim)) * std,
        "b2": jnp.zeros((1, dim)),
    }
    return {k: v.astype(jnp.float32) for k, v in p.items()}


def prepare_params(params, dim, num_heads):
    """Fold attention scale into q columns of wqkv and cast matmul weights to bf16.

    Norm params and biases stay in f32 (added after f32 accumulation)."""
    scale = float((dim // num_heads) ** (-0.5))

    def fold(wqkv):
        return jnp.concatenate([wqkv[:, :dim] * scale, wqkv[:, dim:]], axis=1)

    p = dict(params)
    p["s_wqkv"] = fold(params["s_wqkv"]).astype(jnp.bfloat16)
    p["t_wqkv"] = fold(params["t_wqkv"]).astype(jnp.bfloat16)
    for k in ("s_wproj", "t_wproj", "tfc_w", "w1", "w2"):
        p[k] = params[k].astype(jnp.bfloat16)
    return p


if __name__ == "__main__":
    dim, num_heads = 32, 4
    B, T, H, W = 2, 4, 2, 2
    N = 1 + H * W * T                     # 17 tokens: [cls] + H*W*T patch tokens

    key = jax.random.PRNGKey(0)
    k_x, k_p = jax.random.split(key)
    x = jax.random.normal(k_x, (B, N, dim), dtype=jnp.float32)
    params = prepare_params(init_params(k_p, dim), dim, num_heads)

    fwd = jax.jit(functools.partial(block_forward, B=B, T=T, W=W,
                                    num_heads=num_heads))
    out = fwd(x, params)
    jax.block_until_ready(out)
    assert out.shape == (B, N, dim) and out.dtype == jnp.float32
    print("KERNEL_OK")
</pallas_src>

<mosaic_0001>
module attributes {stable_mosaic.version = 11 : i64} {
  func.func @attn_kernel(%arg0: i32, %arg1: memref<4x4x32xf32, #tpu.memory_space<vmem>>, %arg2: memref<1x32xf32, #tpu.memory_space<vmem>>, %arg3: memref<1x32xf32, #tpu.memory_space<vmem>>, %arg4: memref<32x96xbf16, #tpu.memory_space<vmem>>, %arg5: memref<32x32xbf16, #tpu.memory_space<vmem>>, %arg6: memref<1x32xf32, #tpu.memory_space<vmem>>, %arg7: memref<32x32xbf16, #tpu.memory_space<vmem>>, %arg8: memref<1x32xf32, #tpu.memory_space<vmem>>, %arg9: memref<4x4x32xf32, #tpu.memory_space<vmem>>, %arg10: memref<4x4x96xbf16, #tpu.memory_space<vmem>>) attributes {dimension_semantics = [#tpu.dimension_semantics<parallel>], iteration_bounds = array<i64: 2>, scalar_prefetch = 0 : i64, scratch_operands = 1 : i64, tpu.core_type = #tpu.core_type<tc>, window_params = [{transform_indices = @transform_0, window_bounds = array<i64: 4, 4, 32>}, {pipeline_mode = #tpu.pipeline_mode<synchronous>, transform_indices = @transform_1, window_bounds = array<i64: 1, 32>}, {pipeline_mode = #tpu.pipeline_mode<synchronous>, transform_indices = @transform_2, window_bounds = array<i64: 1, 32>}, {pipeline_mode = #tpu.pipeline_mode<synchronous>, transform_indices = @transform_3, window_bounds = array<i64: 32, 96>}, {pipeline_mode = #tpu.pipeline_mode<synchronous>, transform_indices = @transform_4, window_bounds = array<i64: 32, 32>}, {pipeline_mode = #tpu.pipeline_mode<synchronous>, transform_indices = @transform_5, window_bounds = array<i64: 1, 32>}, {pipeline_mode = #tpu.pipeline_mode<synchronous>, transform_indices = @transform_6, window_bounds = array<i64: 32, 32>}, {pipeline_mode = #tpu.pipeline_mode<synchronous>, transform_indices = @transform_7, window_bounds = array<i64: 1, 32>}, {transform_indices = @transform_8, window_bounds = array<i64: 4, 4, 32>}]} {
    %c0 = arith.constant 0 : index
    %c0_0 = arith.constant 0 : index
    %c0_1 = arith.constant 0 : index
    %0 = vector.load %arg1[%c0, %c0_0, %c0_1] : memref<4x4x32xf32, #tpu.memory_space<vmem>>, vector<4x4x32xf32>
    %1 = vector.shape_cast %0 : vector<4x4x32xf32> to vector<16x32xf32>
    %c0_2 = arith.constant 0 : index
    %c0_3 = arith.constant 0 : index
    %2 = vector.load %arg2[%c0_2, %c0_3] : memref<1x32xf32, #tpu.memory_space<vmem>>, vector<1x32xf32>
    %c0_4 = arith.constant 0 : index
    %c0_5 = arith.constant 0 : index
    %3 = vector.load %arg3[%c0_4, %c0_5] : memref<1x32xf32, #tpu.memory_space<vmem>>, vector<1x32xf32>
    %cst = arith.constant dense<0.000000e+00> : vector<16xf32>
    %4 = vector.multi_reduction <add>, %1, %cst [1] : vector<16x32xf32> to vector<16xf32>
    %5 = vector.shape_cast %4 : vector<16xf32> to vector<16x1xf32>
    %cst_6 = arith.constant 3.200000e+01 : f32
    %6 = vector.broadcast %cst_6 : f32 to vector<16x1xf32>
    %7 = arith.divf %5, %6 : vector<16x1xf32>
    %8 = vector.broadcast %7 : vector<16x1xf32> to vector<16x32xf32>
    %9 = arith.subf %1, %8 : vector<16x32xf32>
    %10 = arith.mulf %9, %9 : vector<16x32xf32>
    %cst_7 = arith.constant dense<0.000000e+00> : vector<16xf32>
    %11 = vector.multi_reduction <add>, %10, %cst_7 [1] : vector<16x32xf32> to vector<16xf32>
    %12 = vector.shape_cast %11 : vector<16xf32> to vector<16x1xf32>
    %cst_8 = arith.constant 3.200000e+01 : f32
    %13 = vector.broadcast %cst_8 : f32 to vector<16x1xf32>
    %14 = arith.divf %12, %13 : vector<16x1xf32>
    %15 = vector.broadcast %7 : vector<16x1xf32> to vector<16x32xf32>
    %16 = arith.subf %1, %15 : vector<16x32xf32>
    %cst_9 = arith.constant 9.99999974E-6 : f32
    %17 = vector.broadcast %cst_9 : f32 to vector<16x1xf32>
    %18 = arith.addf %14, %17 : vector<16x1xf32>
    %19 = math.rsqrt %18 : vector<16x1xf32>
    %20 = vector.broadcast %19 : vector<16x1xf32> to vector<16x32xf32>
    %21 = arith.mulf %16, %20 : vector<16x32xf32>
    %22 = vector.broadcast %2 : vector<1x32xf32> to vector<16x32xf32>
    %23 = arith.mulf %21, %22 : vector<16x32xf32>
    %24 = vector.broadcast %3 : vector<1x32xf32> to vector<16x32xf32>
    %25 = arith.addf %23, %24 : vector<16x32xf32>
    %26 = arith.truncf %25 : vector<16x32xf32> to vector<16x32xbf16>
    %c0_10 = arith.constant 0 : index
    %c0_11 = arith.constant 0 : index
    %27 = vector.load %arg4[%c0_10, %c0_11] : memref<32x96xbf16, #tpu.memory_space<vmem>>, vector<32x96xbf16>
    %cst_12 = arith.constant dense<0.000000e+00> : vector<16x96xf32>
    %28 = tpu.matmul %26, %27, %cst_12 {dimension_numbers = #tpu.dot_dimension_numbers<[1], [0], [0], [1], [0, 0, 1, 1], [], []>} : vector<16x32xbf16>, vector<32x96xbf16>, vector<16x96xf32> -> vector<16x96xf32>
    %29 = vector.shape_cast %28 : vector<16x96xf32> to vector<4x4x96xf32>
    %30 = arith.truncf %29 : vector<4x4x96xf32> to vector<4x4x96xbf16>
    %c0_13 = arith.constant 0 : index
    %c0_14 = arith.constant 0 : index
    %c0_15 = arith.constant 0 : index
    %31 = vector.load %arg10[%c0_13, %c0_14, %c0_15] : memref<4x4x96xbf16, #tpu.memory_space<vmem>>, vector<4x4x96xbf16>
    tpu.vector_store %arg10[%c0_13, %c0_14, %c0_15], %30 {strides = array<i32>} : memref<4x4x96xbf16, #tpu.memory_space<vmem>>, vector<4x4x96xbf16>,
    %cst_16 = arith.constant 0.000000e+00 : f32
    %32 = vector.broadcast %cst_16 : f32 to vector<16x32xf32>
    %c0_17 = arith.constant 0 : index
    %c0_18 = arith.constant 0 : index
    %c0_19 = arith.constant 0 : index
    %33 = vector.load %arg10[%c0_17, %c0_18, %c0_19] : memref<4x4x96xbf16, #tpu.memory_space<vmem>>, vector<4x4x8xbf16>
    %c0_20 = arith.constant 0 : index
    %c0_21 = arith.constant 0 : index
    %c32 = arith.constant 32 : index
    %34 = vector.load %arg10[%c0_20, %c0_21, %c32] : memref<4x4x96xbf16, #tpu.memory_space<vmem>>, vector<4x4x8xbf16>
    %c0_22 = arith.constant 0 : index
    %c0_23 = arith.constant 0 : index
    %c64 = arith.constant 64 : index
    %35 = vector.load %arg10[%c0_22, %c0_23, %c64] : memref<4x4x96xbf16, #tpu.memory_space<vmem>>, vector<4x4x8xbf16>
    "tpu.trace_start"() <{level = 10 : i32, message = "bqd,bkd->bqk"}> : () -> ()
    %cst_24 = arith.constant dense<0.000000e+00> : vector<4x4x4xf32>
    %36 = tpu.matmul %33, %34, %cst_24 {dimension_numbers = #tpu.dot_dimension_numbers<[2], [2], [1], [1], [0, 0, 0, 1, 1, 1], [0], [0]>} : vector<4x4x8xbf16>, vector<4x4x8xbf16>, vector<4x4x4xf32> -> vector<4x4x4xf32>
    "tpu.trace_stop"() : () -> ()
    %cst_25 = arith.constant dense<0xFF800000> : vector<4x4xf32>
    %37 = vector.multi_reduction <maximumf>, %36, %cst_25 [2] : vector<4x4x4xf32> to vector<4x4xf32>
    %38 = vector.shape_cast %37 : vector<4x4xf32> to vector<4x4x1xf32>
    %39 = vector.broadcast %38 : vector<4x4x1xf32> to vector<4x4x4xf32>
    %40 = arith.subf %36, %39 : vector<4x4x4xf32>
    %41 = math.exp %40 : vector<4x4x4xf32>
    %cst_26 = arith.constant dense<0.000000e+00> : vector<4x4xf32>
    %42 = vector.multi_reduction <add>, %41, %cst_26 [2] : vector<4x4x4xf32> to vector<4x4xf32>
    %43 = vector.shape_cast %42 : vector<4x4xf32> to vector<4x4x1xf32>
    %44 = vector.broadcast %43 : vector<4x4x1xf32> to vector<4x4x4xf32>
    %45 = arith.divf %41, %44 : vector<4x4x4xf32>
    %46 = arith.truncf %45 : vector<4x4x4xf32> to vector<4x4x4xbf16>
    "tpu.trace_start"() <{level = 10 : i32, message = "bqk,bkd->bqd"}> : () -> ()
    %cst_27 = arith.constant dense<0.000000e+00> : vector<4x4x8xf32>
    %47 = tpu.matmul %46, %35, %cst_27 {dimension_numbers = #tpu.dot_dimension_numbers<[2], [1], [1], [2], [0, 0, 0, 1, 1, 2], [0], [0]>} : vector<4x4x4xbf16>, vector<4x4x8xbf16>, vector<4x4x8xf32> -> vector<4x4x8xf32>
    "tpu.trace_stop"() : () -> ()
    %48 = vector.shape_cast %47 : vector<4x4x8xf32> to vector<16x8xf32>
    %49 = arith.truncf %48 : vector<16x8xf32> to vector<16x8xbf16>
    %c0_28 = arith.constant 0 : index
    %c0_29 = arith.constant 0 : index
    %50 = vector.load %arg5[%c0_28, %c0_29] : memref<32x32xbf16, #tpu.memory_space<vmem>>, vector<8x32xbf16>
    %cst_30 = arith.constant dense<0.000000e+00> : vector<16x32xf32>
    %51 = tpu.matmul %49, %50, %cst_30 {dimension_numbers = #tpu.dot_dimension_numbers<[1], [0], [0], [1], [0, 0, 1, 1], [], []>} : vector<16x8xbf16>, vector<8x32xbf16>, vector<16x32xf32> -> vector<16x32xf32>
    %52 = arith.addf %32, %51 : vector<16x32xf32>
    %c0_31 = arith.constant 0 : index
    %c0_32 = arith.constant 0 : index
    %c8 = arith.constant 8 : index
    %53 = vector.load %arg10[%c0_31, %c0_32, %c8] : memref<4x4x96xbf16, #tpu.memory_space<vmem>>, vector<4x4x8xbf16>
    %c0_33 = arith.constant 0 : index
    %c0_34 = arith.constant 0 : index
    %c40 = arith.constant 40 : index
    %54 = vector.load %arg10[%c0_33, %c0_34, %c40] : memref<4x4x96xbf16, #tpu.memory_space<vmem>>, vector<4x4x8xbf16>
    %c0_35 = arith.constant 0 : index
    %c0_36 = arith.constant 0 : index
    %c72 = arith.constant 72 : index
    %55 = vector.load %arg10[%c0_35, %c0_36, %c72] : memref<4x4x96xbf16, #tpu.memory_space<vmem>>, vector<4x4x8xbf16>
    "tpu.trace_start"() <{level = 10 : i32, message = "bqd,bkd->bqk"}> : () -> ()
    %cst_37 = arith.constant dense<0.000000e+00> : vector<4x4x4xf32>
    %56 = tpu.matmul %53, %54, %cst_37 {dimension_numbers = #tpu.dot_dimension_numbers<[2], [2], [1], [1], [0, 0, 0, 1, 1, 1], [0], [0]>} : vector<4x4x8xbf16>, vector<4x4x8xbf16>, vector<4x4x4xf32> -> vector<4x4x4xf32>
    "tpu.trace_stop"() : () -> ()
    %cst_38 = arith.constant dense<0xFF800000> : vector<4x4xf32>
    %57 = vector.multi_reduction <maximumf>, %56, %cst_38 [2] : vector<4x4x4xf32> to vector<4x4xf32>
    %58 = vector.shape_cast %57 : vector<4x4xf32> to vector<4x4x1xf32>
    %59 = vector.broadcast %58 : vector<4x4x1xf32> to vector<4x4x4xf32>
    %60 = arith.subf %56, %59 : vector<4x4x4xf32>
    %61 = math.exp %60 : vector<4x4x4xf32>
    %cst_39 = arith.constant dense<0.000000e+00> : vector<4x4xf32>
    %62 = vector.multi_reduction <add>, %61, %cst_39 [2] : vector<4x4x4xf32> to vector<4x4xf32>
    %63 = vector.shape_cast %62 : vector<4x4xf32> to vector<4x4x1xf32>
    %64 = vector.broadcast %63 : vector<4x4x1xf32> to vector<4x4x4xf32>
    %65 = arith.divf %61, %64 : vector<4x4x4xf32>
    %66 = arith.truncf %65 : vector<4x4x4xf32> to vector<4x4x4xbf16>
    "tpu.trace_start"() <{level = 10 : i32, message = "bqk,bkd->bqd"}> : () -> ()
    %cst_40 = arith.constant dense<0.000000e+00> : vector<4x4x8xf32>
    %67 = tpu.matmul %66, %55, %cst_40 {dimension_numbers = #tpu.dot_dimension_numbers<[2], [1], [1], [2], [0, 0, 0, 1, 1, 2], [0], [0]>} : vector<4x4x4xbf16>, vector<4x4x8xbf16>, vector<4x4x8xf32> -> vector<4x4x8xf32>
    "tpu.trace_stop"() : () -> ()
    %68 = vector.shape_cast %67 : vector<4x4x8xf32> to vector<16x8xf32>
    %69 = arith.truncf %68 : vector<16x8xf32> to vector<16x8xbf16>
    %c8_41 = arith.constant 8 : index
    %c0_42 = arith.constant 0 : index
    %70 = vector.load %arg5[%c8_41, %c0_42] : memref<32x32xbf16, #tpu.memory_space<vmem>>, vector<8x32xbf16>
    %cst_43 = arith.constant dense<0.000000e+00> : vector<16x32xf32>
    %71 = tpu.matmul %69, %70, %cst_43 {dimension_numbers = #tpu.dot_dimension_numbers<[1], [0], [0], [1], [0, 0, 1, 1], [], []>} : vector<16x8xbf16>, vector<8x32xbf16>, vector<16x32xf32> -> vector<16x32xf32>
    %72 = arith.addf %52, %71 : vector<16x32xf32>
    %c0_44 = arith.constant 0 : index
    %c0_45 = arith.constant 0 : index
    %c16 = arith.constant 16 : index
    %73 = vector.load %arg10[%c0_44, %c0_45, %c16] : memref<4x4x96xbf16, #tpu.memory_space<vmem>>, vector<4x4x8xbf16>
    %c0_46 = arith.constant 0 : index
    %c0_47 = arith.constant 0 : index
    %c48 = arith.constant 48 : index
    %74 = vector.load %arg10[%c0_46, %c0_47, %c48] : memref<4x4x96xbf16, #tpu.memory_space<vmem>>, vector<4x4x8xbf16>
    %c0_48 = arith.constant 0 : index
    %c0_49 = arith.constant 0 : index
    %c80 = arith.constant 80 : index
    %75 = vector.load %arg10[%c0_48, %c0_49, %c80] : memref<4x4x96xbf16, #tpu.memory_space<vmem>>, vector<4x4x8xbf16>
    "tpu.trace_start"() <{level = 10 : i32, message = "bqd,bkd->bqk"}> : () -> ()
    %cst_50 = arith.constant dense<0.000000e+00> : vector<4x4x4xf32>
    %76 = tpu.matmul %73, %74, %cst_50 {dimension_numbers = #tpu.dot_dimension_numbers<[2], [2], [1], [1], [0, 0, 0, 1, 1, 1], [0], [0]>} : vector<4x4x8xbf16>, vector<4x4x8xbf16>, vector<4x4x4xf32> -> vector<4x4x4xf32>
    "tpu.trace_stop"() : () -> ()
    %cst_51 = arith.constant dense<0xFF800000> : vector<4x4xf32>
    %77 = vector.multi_reduction <maximumf>, %76, %cst_51 [2] : vector<4x4x4xf32> to vector<4x4xf32>
    %78 = vector.shape_cast %77 : vector<4x4xf32> to vector<4x4x1xf32>
    %79 = vector.broadcast %78 : vector<4x4x1xf32> to vector<4x4x4xf32>
    %80 = arith.subf %76, %79 : vector<4x4x4xf32>
    %81 = math.exp %80 : vector<4x4x4xf32>
    %cst_52 = arith.constant dense<0.000000e+00> : vector<4x4xf32>
    %82 = vector.multi_reduction <add>, %81, %cst_52 [2] : vector<4x4x4xf32> to vector<4x4xf32>
    %83 = vector.shape_cast %82 : vector<4x4xf32> to vector<4x4x1xf32>
    %84 = vector.broadcast %83 : vector<4x4x1xf32> to vector<4x4x4xf32>
    %85 = arith.divf %81, %84 : vector<4x4x4xf32>
    %86 = arith.truncf %85 : vector<4x4x4xf32> to vector<4x4x4xbf16>
    "tpu.trace_start"() <{level = 10 : i32, message = "bqk,bkd->bqd"}> : () -> ()
    %cst_53 = arith.constant dense<0.000000e+00> : vector<4x4x8xf32>
    %87 = tpu.matmul %86, %75, %cst_53 {dimension_numbers = #tpu.dot_dimension_numbers<[2], [1], [1], [2], [0, 0, 0, 1, 1, 2], [0], [0]>} : vector<4x4x4xbf16>, vector<4x4x8xbf16>, vector<4x4x8xf32> -> vector<4x4x8xf32>
    "tpu.trace_stop"() : () -> ()
    %88 = vector.shape_cast %87 : vector<4x4x8xf32> to vector<16x8xf32>
    %89 = arith.truncf %88 : vector<16x8xf32> to vector<16x8xbf16>
    %c16_54 = arith.constant 16 : index
    %c0_55 = arith.constant 0 : index
    %90 = vector.load %arg5[%c16_54, %c0_55] : memref<32x32xbf16, #tpu.memory_space<vmem>>, vector<8x32xbf16>
    %cst_56 = arith.constant dense<0.000000e+00> : vector<16x32xf32>
    %91 = tpu.matmul %89, %90, %cst_56 {dimension_numbers = #tpu.dot_dimension_numbers<[1], [0], [0], [1], [0, 0, 1, 1], [], []>} : vector<16x8xbf16>, vector<8x32xbf16>, vector<16x32xf32> -> vector<16x32xf32>
    %92 = arith.addf %72, %91 : vector<16x32xf32>
    %c0_57 = arith.constant 0 : index
    %c0_58 = arith.constant 0 : index
    %c24 = arith.constant 24 : index
    %93 = vector.load %arg10[%c0_57, %c0_58, %c24] : memref<4x4x96xbf16, #tpu.memory_space<vmem>>, vector<4x4x8xbf16>
    %c0_59 = arith.constant 0 : index
    %c0_60 = arith.constant 0 : index
    %c56 = arith.constant 56 : index
    %94 = vector.load %arg10[%c0_59, %c0_60, %c56] : memref<4x4x96xbf16, #tpu.memory_space<vmem>>, vector<4x4x8xbf16>
    %c0_61 = arith.constant 0 : index
    %c0_62 = arith.constant 0 : index
    %c88 = arith.constant 88 : index
    %95 = vector.load %arg10[%c0_61, %c0_62, %c88] : memref<4x4x96xbf16, #tpu.memory_space<vmem>>, vector<4x4x8xbf16>
    "tpu.trace_start"() <{level = 10 : i32, message = "bqd,bkd->bqk"}> : () -> ()
    %cst_63 = arith.constant dense<0.000000e+00> : vector<4x4x4xf32>
    %96 = tpu.matmul %93, %94, %cst_63 {dimension_numbers = #tpu.dot_dimension_numbers<[2], [2], [1], [1], [0, 0, 0, 1, 1, 1], [0], [0]>} : vector<4x4x8xbf16>, vector<4x4x8xbf16>, vector<4x4x4xf32> -> vector<4x4x4xf32>
    "tpu.trace_stop"() : () -> ()
    %cst_64 = arith.constant dense<0xFF800000> : vector<4x4xf32>
    %97 = vector.multi_reduction <maximumf>, %96, %cst_64 [2] : vector<4x4x4xf32> to vector<4x4xf32>
    %98 = vector.shape_cast %97 : vector<4x4xf32> to vector<4x4x1xf32>
    %99 = vector.broadcast %98 : vector<4x4x1xf32> to vector<4x4x4xf32>
    %100 = arith.subf %96, %99 : vector<4x4x4xf32>
    %101 = math.exp %100 : vector<4x4x4xf32>
    %cst_65 = arith.constant dense<0.000000e+00> : vector<4x4xf32>
    %102 = vector.multi_reduction <add>, %101, %cst_65 [2] : vector<4x4x4xf32> to vector<4x4xf32>
    %103 = vector.shape_cast %102 : vector<4x4xf32> to vector<4x4x1xf32>
    %104 = vector.broadcast %103 : vector<4x4x1xf32> to vector<4x4x4xf32>
    %105 = arith.divf %101, %104 : vector<4x4x4xf32>
    %106 = arith.truncf %105 : vector<4x4x4xf32> to vector<4x4x4xbf16>
    "tpu.trace_start"() <{level = 10 : i32, message = "bqk,bkd->bqd"}> : () -> ()
    %cst_66 = arith.constant dense<0.000000e+00> : vector<4x4x8xf32>
    %107 = tpu.matmul %106, %95, %cst_66 {dimension_numbers = #tpu.dot_dimension_numbers<[2], [1], [1], [2], [0, 0, 0, 1, 1, 2], [0], [0]>} : vector<4x4x4xbf16>, vector<4x4x8xbf16>, vector<4x4x8xf32> -> vector<4x4x8xf32>
    "tpu.trace_stop"() : () -> ()
    %108 = vector.shape_cast %107 : vector<4x4x8xf32> to vector<16x8xf32>
    %109 = arith.truncf %108 : vector<16x8xf32> to vector<16x8xbf16>
    %c24_67 = arith.constant 24 : index
    %c0_68 = arith.constant 0 : index
    %110 = vector.load %arg5[%c24_67, %c0_68] : memref<32x32xbf16, #tpu.memory_space<vmem>>, vector<8x32xbf16>
    %cst_69 = arith.constant dense<0.000000e+00> : vector<16x32xf32>
    %111 = tpu.matmul %109, %110, %cst_69 {dimension_numbers = #tpu.dot_dimension_numbers<[1], [0], [0], [1], [0, 0, 1, 1], [], []>} : vector<16x8xbf16>, vector<8x32xbf16>, vector<16x32xf32> -> vector<16x32xf32>
    %112 = arith.addf %92, %111 : vector<16x32xf32>
    %c0_70 = arith.constant 0 : index
    %c0_71 = arith.constant 0 : index
    %113 = vector.load %arg6[%c0_70, %c0_71] : memref<1x32xf32, #tpu.memory_space<vmem>>, vector<1x32xf32>
    %114 = vector.broadcast %113 : vector<1x32xf32> to vector<16x32xf32>
    %115 = arith.addf %112, %114 : vector<16x32xf32>
    %116 = arith.truncf %115 : vector<16x32xf32> to vector<16x32xbf16>
    %c0_72 = arith.constant 0 : index
    %c0_73 = arith.constant 0 : index
    %117 = vector.load %arg7[%c0_72, %c0_73] : memref<32x32xbf16, #tpu.memory_space<vmem>>, vector<32x32xbf16>
    %cst_74 = arith.constant dense<0.000000e+00> : vector<16x32xf32>
    %118 = tpu.matmul %116, %117, %cst_74 {dimension_numbers = #tpu.dot_dimension_numbers<[1], [0], [0], [1], [0, 0, 1, 1], [], []>} : vector<16x32xbf16>, vector<32x32xbf16>, vector<16x32xf32> -> vector<16x32xf32>
    %c0_75 = arith.constant 0 : index
    %c0_76 = arith.constant 0 : index
    %119 = vector.load %arg8[%c0_75, %c0_76] : memref<1x32xf32, #tpu.memory_space<vmem>>, vector<1x32xf32>
    %120 = vector.broadcast %119 : vector<1x32xf32> to vector<16x32xf32>
    %121 = arith.addf %118, %120 : vector<16x32xf32>
    %122 = vector.shape_cast %121 : vector<16x32xf32> to vector<4x4x32xf32>
    %c0_77 = arith.constant 0 : index
    %c0_78 = arith.constant 0 : index
    %c0_79 = arith.constant 0 : index
    %123 = vector.load %arg1[%c0_77, %c0_78, %c0_79] : memref<4x4x32xf32, #tpu.memory_space<vmem>>, vector<4x4x32xf32>
    %124 = arith.addf %122, %123 : vector<4x4x32xf32>
    %c0_80 = arith.constant 0 : index
    %c0_81 = arith.constant 0 : index
    %c0_82 = arith.constant 0 : index
    %125 = vector.load %arg9[%c0_80, %c0_81, %c0_82] : memref<4x4x32xf32, #tpu.memory_space<vmem>>, vector<4x4x32xf32>
    tpu.vector_store %arg9[%c0_80, %c0_81, %c0_82], %124 {strides = array<i32>} : memref<4x4x32xf32, #tpu.memory_space<vmem>>, vector<4x4x32xf32>,
    return
  }
  func.func @transform_0(%arg0: i32) -> (i32, i32, i32) {
    %c0_i32 = arith.constant 0 : i32
    %c0_i32_0 = arith.constant 0 : i32
    %c0_i32_1 = arith.constant 0 : i32
    return %arg0, %c0_i32, %c0_i32_0 : i32, i32, i32
  }
  func.func @transform_1(%arg0: i32) -> (i32, i32) {
    %c0_i32 = arith.constant 0 : i32
    %c0_i32_0 = arith.constant 0 : i32
    %c0_i32_1 = arith.constant 0 : i32
    return %c0_i32, %c0_i32_0 : i32, i32
  }
  func.func @transform_2(%arg0: i32) -> (i32, i32) {
    %c0_i32 = arith.constant 0 : i32
    %c0_i32_0 = arith.constant 0 : i32
    %c0_i32_1 = arith.constant 0 : i32
    return %c0_i32, %c0_i32_0 : i32, i32
  }
  func.func @transform_3(%arg0: i32) -> (i32, i32) {
    %c0_i32 = arith.constant 0 : i32
    %c0_i32_0 = arith.constant 0 : i32
    %c0_i32_1 = arith.constant 0 : i32
    return %c0_i32, %c0_i32_0 : i32, i32
  }
  func.func @transform_4(%arg0: i32) -> (i32, i32) {
    %c0_i32 = arith.constant 0 : i32
    %c0_i32_0 = arith.constant 0 : i32
    %c0_i32_1 = arith.constant 0 : i32
    return %c0_i32, %c0_i32_0 : i32, i32
  }
  func.func @transform_5(%arg0: i32) -> (i32, i32) {
    %c0_i32 = arith.constant 0 : i32
    %c0_i32_0 = arith.constant 0 : i32
    %c0_i32_1 = arith.constant 0 : i32
    return %c0_i32, %c0_i32_0 : i32, i32
  }
  func.func @transform_6(%arg0: i32) -> (i32, i32) {
    %c0_i32 = arith.constant 0 : i32
    %c0_i32_0 = arith.constant 0 : i32
    %c0_i32_1 = arith.constant 0 : i32
    return %c0_i32, %c0_i32_0 : i32, i32
  }
  func.func @transform_7(%arg0: i32) -> (i32, i32) {
    %c0_i32 = arith.constant 0 : i32
    %c0_i32_0 = arith.constant 0 : i32
    %c0_i32_1 = arith.constant 0 : i32
    return %c0_i32, %c0_i32_0 : i32, i32
  }
  func.func @transform_8(%arg0: i32) -> (i32, i32, i32) {
    %c0_i32 = arith.constant 0 : i32
    %c0_i32_0 = arith.constant 0 : i32
    %c0_i32_1 = arith.constant 0 : i32
    return %arg0, %c0_i32, %c0_i32_0 : i32, i32, i32
  }
}

module attributes {stable_mosaic.version = 11 : i64} {
  func.func @attn_kernel(%arg0: i32, %arg1: memref<4x5x32xf32, #tpu.memory_space<vmem>>, %arg2: memref<1x32xf32, #tpu.memory_space<vmem>>, %arg3: memref<1x32xf32, #tpu.memory_space<vmem>>, %arg4: memref<32x96xbf16, #tpu.memory_space<vmem>>, %arg5: memref<32x32xbf16, #tpu.memory_space<vmem>>, %arg6: memref<1x32xf32, #tpu.memory_space<vmem>>, %arg7: memref<4x5x32xbf16, #tpu.memory_space<vmem>>, %arg8: memref<4x5x96xbf16, #tpu.memory_space<vmem>>) attributes {dimension_semantics = [#tpu.dimension_semantics<parallel>], iteration_bounds = array<i64: 2>, scalar_prefetch = 0 : i64, scratch_operands = 1 : i64, tpu.core_type = #tpu.core_type<tc>, window_params = [{transform_indices = @transform_0, window_bounds = array<i64: 4, 5, 32>}, {pipeline_mode = #tpu.pipeline_mode<synchronous>, transform_indices = @transform_1, window_bounds = array<i64: 1, 32>}, {pipeline_mode = #tpu.pipeline_mode<synchronous>, transform_indices = @transform_2, window_bounds = array<i64: 1, 32>}, {pipeline_mode = #tpu.pipeline_mode<synchronous>, transform_indices = @transform_3, window_bounds = array<i64: 32, 96>}, {pipeline_mode = #tpu.pipeline_mode<synchronous>, transform_indices = @transform_4, window_bounds = array<i64: 32, 32>}, {pipeline_mode = #tpu.pipeline_mode<synchronous>, transform_indices = @transform_5, window_bounds = array<i64: 1, 32>}, {transform_indices = @transform_6, window_bounds = array<i64: 4, 5, 32>}]} {
    %c0 = arith.constant 0 : index
    %c0_0 = arith.constant 0 : index
    %c0_1 = arith.constant 0 : index
    %0 = vector.load %arg1[%c0, %c0_0, %c0_1] : memref<4x5x32xf32, #tpu.memory_space<vmem>>, vector<4x5x32xf32>
    %1 = vector.shape_cast %0 : vector<4x5x32xf32> to vector<20x32xf32>
    %c0_2 = arith.constant 0 : index
    %c0_3 = arith.constant 0 : index
    %2 = vector.load %arg2[%c0_2, %c0_3] : memref<1x32xf32, #tpu.memory_space<vmem>>, vector<1x32xf32>
    %c0_4 = arith.constant 0 : index
    %c0_5 = arith.constant 0 : index
    %3 = vector.load %arg3[%c0_4, %c0_5] : memref<1x32xf32, #tpu.memory_space<vmem>>, vector<1x32xf32>
    %cst = arith.constant dense<0.000000e+00> : vector<20xf32>
    %4 = vector.multi_reduction <add>, %1, %cst [1] : vector<20x32xf32> to vector<20xf32>
    %5 = vector.shape_cast %4 : vector<20xf32> to vector<20x1xf32>
    %cst_6 = arith.constant 3.200000e+01 : f32
    %6 = vector.broadcast %cst_6 : f32 to vector<20x1xf32>
    %7 = arith.divf %5, %6 : vector<20x1xf32>
    %8 = vector.broadcast %7 : vector<20x1xf32> to vector<20x32xf32>
    %9 = arith.subf %1, %8 : vector<20x32xf32>
    %10 = arith.mulf %9, %9 : vector<20x32xf32>
    %cst_7 = arith.constant dense<0.000000e+00> : vector<20xf32>
    %11 = vector.multi_reduction <add>, %10, %cst_7 [1] : vector<20x32xf32> to vector<20xf32>
    %12 = vector.shape_cast %11 : vector<20xf32> to vector<20x1xf32>
    %cst_8 = arith.constant 3.200000e+01 : f32
    %13 = vector.broadcast %cst_8 : f32 to vector<20x1xf32>
    %14 = arith.divf %12, %13 : vector<20x1xf32>
    %15 = vector.broadcast %7 : vector<20x1xf32> to vector<20x32xf32>
    %16 = arith.subf %1, %15 : vector<20x32xf32>
    %cst_9 = arith.constant 9.99999974E-6 : f32
    %17 = vector.broadcast %cst_9 : f32 to vector<20x1xf32>
    %18 = arith.addf %14, %17 : vector<20x1xf32>
    %19 = math.rsqrt %18 : vector<20x1xf32>
    %20 = vector.broadcast %19 : vector<20x1xf32> to vector<20x32xf32>
    %21 = arith.mulf %16, %20 : vector<20x32xf32>
    %22 = vector.broadcast %2 : vector<1x32xf32> to vector<20x32xf32>
    %23 = arith.mulf %21, %22 : vector<20x32xf32>
    %24 = vector.broadcast %3 : vector<1x32xf32> to vector<20x32xf32>
    %25 = arith.addf %23, %24 : vector<20x32xf32>
    %26 = arith.truncf %25 : vector<20x32xf32> to vector<20x32xbf16>
    %c0_10 = arith.constant 0 : index
    %c0_11 = arith.constant 0 : index
    %27 = vector.load %arg4[%c0_10, %c0_11] : memref<32x96xbf16, #tpu.memory_space<vmem>>, vector<32x96xbf16>
    %cst_12 = arith.constant dense<0.000000e+00> : vector<20x96xf32>
    %28 = tpu.matmul %26, %27, %cst_12 {dimension_numbers = #tpu.dot_dimension_numbers<[1], [0], [0], [1], [0, 0, 1, 1], [], []>} : vector<20x32xbf16>, vector<32x96xbf16>, vector<20x96xf32> -> vector<20x96xf32>
    %29 = vector.shape_cast %28 : vector<20x96xf32> to vector<4x5x96xf32>
    %30 = arith.truncf %29 : vector<4x5x96xf32> to vector<4x5x96xbf16>
    %c0_13 = arith.constant 0 : index
    %c0_14 = arith.constant 0 : index
    %c0_15 = arith.constant 0 : index
    %31 = vector.load %arg8[%c0_13, %c0_14, %c0_15] : memref<4x5x96xbf16, #tpu.memory_space<vmem>>, vector<4x5x96xbf16>
    tpu.vector_store %arg8[%c0_13, %c0_14, %c0_15], %30 {strides = array<i32>} : memref<4x5x96xbf16, #tpu.memory_space<vmem>>, vector<4x5x96xbf16>,
    %cst_16 = arith.constant 0.000000e+00 : f32
    %32 = vector.broadcast %cst_16 : f32 to vector<20x32xf32>
    %c0_17 = arith.constant 0 : index
    %c0_18 = arith.constant 0 : index
    %c0_19 = arith.constant 0 : index
    %33 = vector.load %arg8[%c0_17, %c0_18, %c0_19] : memref<4x5x96xbf16, #tpu.memory_space<vmem>>, vector<4x5x8xbf16>
    %c0_20 = arith.constant 0 : index
    %c0_21 = arith.constant 0 : index
    %c32 = arith.constant 32 : index
    %34 = vector.load %arg8[%c0_20, %c0_21, %c32] : memref<4x5x96xbf16, #tpu.memory_space<vmem>>, vector<4x5x8xbf16>
    %c0_22 = arith.constant 0 : index
    %c0_23 = arith.constant 0 : index
    %c64 = arith.constant 64 : index
    %35 = vector.load %arg8[%c0_22, %c0_23, %c64] : memref<4x5x96xbf16, #tpu.memory_space<vmem>>, vector<4x5x8xbf16>
    "tpu.trace_start"() <{level = 10 : i32, message = "bqd,bkd->bqk"}> : () -> ()
    %cst_24 = arith.constant dense<0.000000e+00> : vector<4x5x5xf32>
    %36 = tpu.matmul %33, %34, %cst_24 {dimension_numbers = #tpu.dot_dimension_numbers<[2], [2], [1], [1], [0, 0, 0, 1, 1, 1], [0], [0]>} : vector<4x5x8xbf16>, vector<4x5x8xbf16>, vector<4x5x5xf32> -> vector<4x5x5xf32>
    "tpu.trace_stop"() : () -> ()
    %cst_25 = arith.constant dense<0xFF800000> : vector<4x5xf32>
    %37 = vector.multi_reduction <maximumf>, %36, %cst_25 [2] : vector<4x5x5xf32> to vector<4x5xf32>
    %38 = vector.shape_cast %37 : vector<4x5xf32> to vector<4x5x1xf32>
    %39 = vector.broadcast %38 : vector<4x5x1xf32> to vector<4x5x5xf32>
    %40 = arith.subf %36, %39 : vector<4x5x5xf32>
    %41 = math.exp %40 : vector<4x5x5xf32>
    %cst_26 = arith.constant dense<0.000000e+00> : vector<4x5xf32>
    %42 = vector.multi_reduction <add>, %41, %cst_26 [2] : vector<4x5x5xf32> to vector<4x5xf32>
    %43 = vector.shape_cast %42 : vector<4x5xf32> to vector<4x5x1xf32>
    %44 = vector.broadcast %43 : vector<4x5x1xf32> to vector<4x5x5xf32>
    %45 = arith.divf %41, %44 : vector<4x5x5xf32>
    %46 = arith.truncf %45 : vector<4x5x5xf32> to vector<4x5x5xbf16>
    "tpu.trace_start"() <{level = 10 : i32, message = "bqk,bkd->bqd"}> : () -> ()
    %cst_27 = arith.constant dense<0.000000e+00> : vector<4x5x8xf32>
    %47 = tpu.matmul %46, %35, %cst_27 {dimension_numbers = #tpu.dot_dimension_numbers<[2], [1], [1], [2], [0, 0, 0, 1, 1, 2], [0], [0]>} : vector<4x5x5xbf16>, vector<4x5x8xbf16>, vector<4x5x8xf32> -> vector<4x5x8xf32>
    "tpu.trace_stop"() : () -> ()
    %48 = vector.shape_cast %47 : vector<4x5x8xf32> to vector<20x8xf32>
    %49 = arith.truncf %48 : vector<20x8xf32> to vector<20x8xbf16>
    %c0_28 = arith.constant 0 : index
    %c0_29 = arith.constant 0 : index
    %50 = vector.load %arg5[%c0_28, %c0_29] : memref<32x32xbf16, #tpu.memory_space<vmem>>, vector<8x32xbf16>
    %cst_30 = arith.constant dense<0.000000e+00> : vector<20x32xf32>
    %51 = tpu.matmul %49, %50, %cst_30 {dimension_numbers = #tpu.dot_dimension_numbers<[1], [0], [0], [1], [0, 0, 1, 1], [], []>} : vector<20x8xbf16>, vector<8x32xbf16>, vector<20x32xf32> -> vector<20x32xf32>
    %52 = arith.addf %32, %51 : vector<20x32xf32>
    %c0_31 = arith.constant 0 : index
    %c0_32 = arith.constant 0 : index
    %c8 = arith.constant 8 : index
    %53 = vector.load %arg8[%c0_31, %c0_32, %c8] : memref<4x5x96xbf16, #tpu.memory_space<vmem>>, vector<4x5x8xbf16>
    %c0_33 = arith.constant 0 : index
    %c0_34 = arith.constant 0 : index
    %c40 = arith.constant 40 : index
    %54 = vector.load %arg8[%c0_33, %c0_34, %c40] : memref<4x5x96xbf16, #tpu.memory_space<vmem>>, vector<4x5x8xbf16>
    %c0_35 = arith.constant 0 : index
    %c0_36 = arith.constant 0 : index
    %c72 = arith.constant 72 : index
    %55 = vector.load %arg8[%c0_35, %c0_36, %c72] : memref<4x5x96xbf16, #tpu.memory_space<vmem>>, vector<4x5x8xbf16>
    "tpu.trace_start"() <{level = 10 : i32, message = "bqd,bkd->bqk"}> : () -> ()
    %cst_37 = arith.constant dense<0.000000e+00> : vector<4x5x5xf32>
    %56 = tpu.matmul %53, %54, %cst_37 {dimension_numbers = #tpu.dot_dimension_numbers<[2], [2], [1], [1], [0, 0, 0, 1, 1, 1], [0], [0]>} : vector<4x5x8xbf16>, vector<4x5x8xbf16>, vector<4x5x5xf32> -> vector<4x5x5xf32>
    "tpu.trace_stop"() : () -> ()
    %cst_38 = arith.constant dense<0xFF800000> : vector<4x5xf32>
    %57 = vector.multi_reduction <maximumf>, %56, %cst_38 [2] : vector<4x5x5xf32> to vector<4x5xf32>
    %58 = vector.shape_cast %57 : vector<4x5xf32> to vector<4x5x1xf32>
    %59 = vector.broadcast %58 : vector<4x5x1xf32> to vector<4x5x5xf32>
    %60 = arith.subf %56, %59 : vector<4x5x5xf32>
    %61 = math.exp %60 : vector<4x5x5xf32>
    %cst_39 = arith.constant dense<0.000000e+00> : vector<4x5xf32>
    %62 = vector.multi_reduction <add>, %61, %cst_39 [2] : vector<4x5x5xf32> to vector<4x5xf32>
    %63 = vector.shape_cast %62 : vector<4x5xf32> to vector<4x5x1xf32>
    %64 = vector.broadcast %63 : vector<4x5x1xf32> to vector<4x5x5xf32>
    %65 = arith.divf %61, %64 : vector<4x5x5xf32>
    %66 = arith.truncf %65 : vector<4x5x5xf32> to vector<4x5x5xbf16>
    "tpu.trace_start"() <{level = 10 : i32, message = "bqk,bkd->bqd"}> : () -> ()
    %cst_40 = arith.constant dense<0.000000e+00> : vector<4x5x8xf32>
    %67 = tpu.matmul %66, %55, %cst_40 {dimension_numbers = #tpu.dot_dimension_numbers<[2], [1], [1], [2], [0, 0, 0, 1, 1, 2], [0], [0]>} : vector<4x5x5xbf16>, vector<4x5x8xbf16>, vector<4x5x8xf32> -> vector<4x5x8xf32>
    "tpu.trace_stop"() : () -> ()
    %68 = vector.shape_cast %67 : vector<4x5x8xf32> to vector<20x8xf32>
    %69 = arith.truncf %68 : vector<20x8xf32> to vector<20x8xbf16>
    %c8_41 = arith.constant 8 : index
    %c0_42 = arith.constant 0 : index
    %70 = vector.load %arg5[%c8_41, %c0_42] : memref<32x32xbf16, #tpu.memory_space<vmem>>, vector<8x32xbf16>
    %cst_43 = arith.constant dense<0.000000e+00> : vector<20x32xf32>
    %71 = tpu.matmul %69, %70, %cst_43 {dimension_numbers = #tpu.dot_dimension_numbers<[1], [0], [0], [1], [0, 0, 1, 1], [], []>} : vector<20x8xbf16>, vector<8x32xbf16>, vector<20x32xf32> -> vector<20x32xf32>
    %72 = arith.addf %52, %71 : vector<20x32xf32>
    %c0_44 = arith.constant 0 : index
    %c0_45 = arith.constant 0 : index
    %c16 = arith.constant 16 : index
    %73 = vector.load %arg8[%c0_44, %c0_45, %c16] : memref<4x5x96xbf16, #tpu.memory_space<vmem>>, vector<4x5x8xbf16>
    %c0_46 = arith.constant 0 : index
    %c0_47 = arith.constant 0 : index
    %c48 = arith.constant 48 : index
    %74 = vector.load %arg8[%c0_46, %c0_47, %c48] : memref<4x5x96xbf16, #tpu.memory_space<vmem>>, vector<4x5x8xbf16>
    %c0_48 = arith.constant 0 : index
    %c0_49 = arith.constant 0 : index
    %c80 = arith.constant 80 : index
    %75 = vector.load %arg8[%c0_48, %c0_49, %c80] : memref<4x5x96xbf16, #tpu.memory_space<vmem>>, vector<4x5x8xbf16>
    "tpu.trace_start"() <{level = 10 : i32, message = "bqd,bkd->bqk"}> : () -> ()
    %cst_50 = arith.constant dense<0.000000e+00> : vector<4x5x5xf32>
    %76 = tpu.matmul %73, %74, %cst_50 {dimension_numbers = #tpu.dot_dimension_numbers<[2], [2], [1], [1], [0, 0, 0, 1, 1, 1], [0], [0]>} : vector<4x5x8xbf16>, vector<4x5x8xbf16>, vector<4x5x5xf32> -> vector<4x5x5xf32>
    "tpu.trace_stop"() : () -> ()
    %cst_51 = arith.constant dense<0xFF800000> : vector<4x5xf32>
    %77 = vector.multi_reduction <maximumf>, %76, %cst_51 [2] : vector<4x5x5xf32> to vector<4x5xf32>
    %78 = vector.shape_cast %77 : vector<4x5xf32> to vector<4x5x1xf32>
    %79 = vector.broadcast %78 : vector<4x5x1xf32> to vector<4x5x5xf32>
    %80 = arith.subf %76, %79 : vector<4x5x5xf32>
    %81 = math.exp %80 : vector<4x5x5xf32>
    %cst_52 = arith.constant dense<0.000000e+00> : vector<4x5xf32>
    %82 = vector.multi_reduction <add>, %81, %cst_52 [2] : vector<4x5x5xf32> to vector<4x5xf32>
    %83 = vector.shape_cast %82 : vector<4x5xf32> to vector<4x5x1xf32>
    %84 = vector.broadcast %83 : vector<4x5x1xf32> to vector<4x5x5xf32>
    %85 = arith.divf %81, %84 : vector<4x5x5xf32>
    %86 = arith.truncf %85 : vector<4x5x5xf32> to vector<4x5x5xbf16>
    "tpu.trace_start"() <{level = 10 : i32, message = "bqk,bkd->bqd"}> : () -> ()
    %cst_53 = arith.constant dense<0.000000e+00> : vector<4x5x8xf32>
    %87 = tpu.matmul %86, %75, %cst_53 {dimension_numbers = #tpu.dot_dimension_numbers<[2], [1], [1], [2], [0, 0, 0, 1, 1, 2], [0], [0]>} : vector<4x5x5xbf16>, vector<4x5x8xbf16>, vector<4x5x8xf32> -> vector<4x5x8xf32>
    "tpu.trace_stop"() : () -> ()
    %88 = vector.shape_cast %87 : vector<4x5x8xf32> to vector<20x8xf32>
    %89 = arith.truncf %88 : vector<20x8xf32> to vector<20x8xbf16>
    %c16_54 = arith.constant 16 : index
    %c0_55 = arith.constant 0 : index
    %90 = vector.load %arg5[%c16_54, %c0_55] : memref<32x32xbf16, #tpu.memory_space<vmem>>, vector<8x32xbf16>
    %cst_56 = arith.constant dense<0.000000e+00> : vector<20x32xf32>
    %91 = tpu.matmul %89, %90, %cst_56 {dimension_numbers = #tpu.dot_dimension_numbers<[1], [0], [0], [1], [0, 0, 1, 1], [], []>} : vector<20x8xbf16>, vector<8x32xbf16>, vector<20x32xf32> -> vector<20x32xf32>
    %92 = arith.addf %72, %91 : vector<20x32xf32>
    %c0_57 = arith.constant 0 : index
    %c0_58 = arith.constant 0 : index
    %c24 = arith.constant 24 : index
    %93 = vector.load %arg8[%c0_57, %c0_58, %c24] : memref<4x5x96xbf16, #tpu.memory_space<vmem>>, vector<4x5x8xbf16>
    %c0_59 = arith.constant 0 : index
    %c0_60 = arith.constant 0 : index
    %c56 = arith.constant 56 : index
    %94 = vector.load %arg8[%c0_59, %c0_60, %c56] : memref<4x5x96xbf16, #tpu.memory_space<vmem>>, vector<4x5x8xbf16>
    %c0_61 = arith.constant 0 : index
    %c0_62 = arith.constant 0 : index
    %c88 = arith.constant 88 : index
    %95 = vector.load %arg8[%c0_61, %c0_62, %c88] : memref<4x5x96xbf16, #tpu.memory_space<vmem>>, vector<4x5x8xbf16>
    "tpu.trace_start"() <{level = 10 : i32, message = "bqd,bkd->bqk"}> : () -> ()
    %cst_63 = arith.constant dense<0.000000e+00> : vector<4x5x5xf32>
    %96 = tpu.matmul %93, %94, %cst_63 {dimension_numbers = #tpu.dot_dimension_numbers<[2], [2], [1], [1], [0, 0, 0, 1, 1, 1], [0], [0]>} : vector<4x5x8xbf16>, vector<4x5x8xbf16>, vector<4x5x5xf32> -> vector<4x5x5xf32>
    "tpu.trace_stop"() : () -> ()
    %cst_64 = arith.constant dense<0xFF800000> : vector<4x5xf32>
    %97 = vector.multi_reduction <maximumf>, %96, %cst_64 [2] : vector<4x5x5xf32> to vector<4x5xf32>
    %98 = vector.shape_cast %97 : vector<4x5xf32> to vector<4x5x1xf32>
    %99 = vector.broadcast %98 : vector<4x5x1xf32> to vector<4x5x5xf32>
    %100 = arith.subf %96, %99 : vector<4x5x5xf32>
    %101 = math.exp %100 : vector<4x5x5xf32>
    %cst_65 = arith.constant dense<0.000000e+00> : vector<4x5xf32>
    %102 = vector.multi_reduction <add>, %101, %cst_65 [2] : vector<4x5x5xf32> to vector<4x5xf32>
    %103 = vector.shape_cast %102 : vector<4x5xf32> to vector<4x5x1xf32>
    %104 = vector.broadcast %103 : vector<4x5x1xf32> to vector<4x5x5xf32>
    %105 = arith.divf %101, %104 : vector<4x5x5xf32>
    %106 = arith.truncf %105 : vector<4x5x5xf32> to vector<4x5x5xbf16>
    "tpu.trace_start"() <{level = 10 : i32, message = "bqk,bkd->bqd"}> : () -> ()
    %cst_66 = arith.constant dense<0.000000e+00> : vector<4x5x8xf32>
    %107 = tpu.matmul %106, %95, %cst_66 {dimension_numbers = #tpu.dot_dimension_numbers<[2], [1], [1], [2], [0, 0, 0, 1, 1, 2], [0], [0]>} : vector<4x5x5xbf16>, vector<4x5x8xbf16>, vector<4x5x8xf32> -> vector<4x5x8xf32>
    "tpu.trace_stop"() : () -> ()
    %108 = vector.shape_cast %107 : vector<4x5x8xf32> to vector<20x8xf32>
    %109 = arith.truncf %108 : vector<20x8xf32> to vector<20x8xbf16>
    %c24_67 = arith.constant 24 : index
    %c0_68 = arith.constant 0 : index
    %110 = vector.load %arg5[%c24_67, %c0_68] : memref<32x32xbf16, #tpu.memory_space<vmem>>, vector<8x32xbf16>
    %cst_69 = arith.constant dense<0.000000e+00> : vector<20x32xf32>
    %111 = tpu.matmul %109, %110, %cst_69 {dimension_numbers = #tpu.dot_dimension_numbers<[1], [0], [0], [1], [0, 0, 1, 1], [], []>} : vector<20x8xbf16>, vector<8x32xbf16>, vector<20x32xf32> -> vector<20x32xf32>
    %112 = arith.addf %92, %111 : vector<20x32xf32>
    %c0_70 = arith.constant 0 : index
    %c0_71 = arith.constant 0 : index
    %113 = vector.load %arg6[%c0_70, %c0_71] : memref<1x32xf32, #tpu.memory_space<vmem>>, vector<1x32xf32>
    %114 = vector.broadcast %113 : vector<1x32xf32> to vector<20x32xf32>
    %115 = arith.addf %112, %114 : vector<20x32xf32>
    %116 = vector.shape_cast %115 : vector<20x32xf32> to vector<4x5x32xf32>
    %117 = arith.truncf %116 : vector<4x5x32xf32> to vector<4x5x32xbf16>
    %c0_72 = arith.constant 0 : index
    %c0_73 = arith.constant 0 : index
    %c0_74 = arith.constant 0 : index
    %118 = vector.load %arg7[%c0_72, %c0_73, %c0_74] : memref<4x5x32xbf16, #tpu.memory_space<vmem>>, vector<4x5x32xbf16>
    tpu.vector_store %arg7[%c0_72, %c0_73, %c0_74], %117 {strides = array<i32>} : memref<4x5x32xbf16, #tpu.memory_space<vmem>>, vector<4x5x32xbf16>,
    return
  }
  func.func @transform_0(%arg0: i32) -> (i32, i32, i32) {
    %c0_i32 = arith.constant 0 : i32
    %c0_i32_0 = arith.constant 0 : i32
    %c0_i32_1 = arith.constant 0 : i32
    return %arg0, %c0_i32, %c0_i32_0 : i32, i32, i32
  }
  func.func @transform_1(%arg0: i32) -> (i32, i32) {
    %c0_i32 = arith.constant 0 : i32
    %c0_i32_0 = arith.constant 0 : i32
    %c0_i32_1 = arith.constant 0 : i32
    return %c0_i32, %c0_i32_0 : i32, i32
  }
  func.func @transform_2(%arg0: i32) -> (i32, i32) {
    %c0_i32 = arith.constant 0 : i32
    %c0_i32_0 = arith.constant 0 : i32
    %c0_i32_1 = arith.constant 0 : i32
    return %c0_i32, %c0_i32_0 : i32, i32
  }
  func.func @transform_3(%arg0: i32) -> (i32, i32) {
    %c0_i32 = arith.constant 0 : i32
    %c0_i32_0 = arith.constant 0 : i32
    %c0_i32_1 = arith.constant 0 : i32
    return %c0_i32, %c0_i32_0 : i32, i32
  }
  func.func @transform_4(%arg0: i32) -> (i32, i32) {
    %c0_i32 = arith.constant 0 : i32
    %c0_i32_0 = arith.constant 0 : i32
    %c0_i32_1 = arith.constant 0 : i32
    return %c0_i32, %c0_i32_0 : i32, i32
  }
  func.func @transform_5(%arg0: i32) -> (i32, i32) {
    %c0_i32 = arith.constant 0 : i32
    %c0_i32_0 = arith.constant 0 : i32
    %c0_i32_1 = arith.constant 0 : i32
    return %c0_i32, %c0_i32_0 : i32, i32
  }
  func.func @transform_6(%arg0: i32) -> (i32, i32, i32) {
    %c0_i32 = arith.constant 0 : i32
    %c0_i32_0 = arith.constant 0 : i32
    %c0_i32_1 = arith.constant 0 : i32
    return %arg0, %c0_i32, %c0_i32_0 : i32, i32, i32
  }
}

module attributes {stable_mosaic.version = 11 : i64} {
  func.func @mlp_kernel(%arg0: i32, %arg1: memref<24x32xf32, #tpu.memory_space<vmem>>, %arg2: memref<24x32xbf16, #tpu.memory_space<vmem>>, %arg3: memref<1x32xf32, #tpu.memory_space<vmem>>, %arg4: memref<1x32xf32, #tpu.memory_space<vmem>>, %arg5: memref<32x128xbf16, #tpu.memory_space<vmem>>, %arg6: memref<1x128xf32, #tpu.memory_space<vmem>>, %arg7: memref<128x32xbf16, #tpu.memory_space<vmem>>, %arg8: memref<1x32xf32, #tpu.memory_space<vmem>>, %arg9: memref<24x32xf32, #tpu.memory_space<vmem>>) attributes {dimension_semantics = [#tpu.dimension_semantics<parallel>], iteration_bounds = array<i64: 2>, scalar_prefetch = 0 : i64, scratch_operands = 0 : i64, tpu.core_type = #tpu.core_type<tc>, window_params = [{transform_indices = @transform_0, window_bounds = array<i64: 24, 32>}, {transform_indices = @transform_1, window_bounds = array<i64: 24, 32>}, {pipeline_mode = #tpu.pipeline_mode<synchronous>, transform_indices = @transform_2, window_bounds = array<i64: 1, 32>}, {pipeline_mode = #tpu.pipeline_mode<synchronous>, transform_indices = @transform_3, window_bounds = array<i64: 1, 32>}, {pipeline_mode = #tpu.pipeline_mode<synchronous>, transform_indices = @transform_4, window_bounds = array<i64: 32, 128>}, {pipeline_mode = #tpu.pipeline_mode<synchronous>, transform_indices = @transform_5, window_bounds = array<i64: 1, 128>}, {pipeline_mode = #tpu.pipeline_mode<synchronous>, transform_indices = @transform_6, window_bounds = array<i64: 128, 32>}, {pipeline_mode = #tpu.pipeline_mode<synchronous>, transform_indices = @transform_7, window_bounds = array<i64: 1, 32>}, {transform_indices = @transform_8, window_bounds = array<i64: 24, 32>}]} {
    %c0 = arith.constant 0 : index
    %c0_0 = arith.constant 0 : index
    %0 = vector.load %arg1[%c0, %c0_0] : memref<24x32xf32, #tpu.memory_space<vmem>>, vector<24x32xf32>
    %c0_1 = arith.constant 0 : index
    %c0_2 = arith.constant 0 : index
    %1 = vector.load %arg2[%c0_1, %c0_2] : memref<24x32xbf16, #tpu.memory_space<vmem>>, vector<24x32xbf16>
    %2 = arith.extf %1 : vector<24x32xbf16> to vector<24x32xf32>
    %3 = arith.addf %0, %2 : vector<24x32xf32>
    %c0_3 = arith.constant 0 : index
    %c0_4 = arith.constant 0 : index
    %4 = vector.load %arg3[%c0_3, %c0_4] : memref<1x32xf32, #tpu.memory_space<vmem>>, vector<1x32xf32>
    %c0_5 = arith.constant 0 : index
    %c0_6 = arith.constant 0 : index
    %5 = vector.load %arg4[%c0_5, %c0_6] : memref<1x32xf32, #tpu.memory_space<vmem>>, vector<1x32xf32>
    %cst = arith.constant dense<0.000000e+00> : vector<24xf32>
    %6 = vector.multi_reduction <add>, %3, %cst [1] : vector<24x32xf32> to vector<24xf32>
    %7 = vector.shape_cast %6 : vector<24xf32> to vector<24x1xf32>
    %cst_7 = arith.constant 3.200000e+01 : f32
    %8 = vector.broadcast %cst_7 : f32 to vector<24x1xf32>
    %9 = arith.divf %7, %8 : vector<24x1xf32>
    %10 = vector.broadcast %9 : vector<24x1xf32> to vector<24x32xf32>
    %11 = arith.subf %3, %10 : vector<24x32xf32>
    %12 = arith.mulf %11, %11 : vector<24x32xf32>
    %cst_8 = arith.constant dense<0.000000e+00> : vector<24xf32>
    %13 = vector.multi_reduction <add>, %12, %cst_8 [1] : vector<24x32xf32> to vector<24xf32>
    %14 = vector.shape_cast %13 : vector<24xf32> to vector<24x1xf32>
    %cst_9 = arith.constant 3.200000e+01 : f32
    %15 = vector.broadcast %cst_9 : f32 to vector<24x1xf32>
    %16 = arith.divf %14, %15 : vector<24x1xf32>
    %17 = vector.broadcast %9 : vector<24x1xf32> to vector<24x32xf32>
    %18 = arith.subf %3, %17 : vector<24x32xf32>
    %cst_10 = arith.constant 9.99999974E-6 : f32
    %19 = vector.broadcast %cst_10 : f32 to vector<24x1xf32>
    %20 = arith.addf %16, %19 : vector<24x1xf32>
    %21 = math.rsqrt %20 : vector<24x1xf32>
    %22 = vector.broadcast %21 : vector<24x1xf32> to vector<24x32xf32>
    %23 = arith.mulf %18, %22 : vector<24x32xf32>
    %24 = vector.broadcast %4 : vector<1x32xf32> to vector<24x32xf32>
    %25 = arith.mulf %23, %24 : vector<24x32xf32>
    %26 = vector.broadcast %5 : vector<1x32xf32> to vector<24x32xf32>
    %27 = arith.addf %25, %26 : vector<24x32xf32>
    %28 = arith.truncf %27 : vector<24x32xf32> to vector<24x32xbf16>
    %c0_11 = arith.constant 0 : index
    %c0_12 = arith.constant 0 : index
    %29 = vector.load %arg5[%c0_11, %c0_12] : memref<32x128xbf16, #tpu.memory_space<vmem>>, vector<32x128xbf16>
    %cst_13 = arith.constant dense<0.000000e+00> : vector<24x128xf32>
    %30 = tpu.matmul %28, %29, %cst_13 {dimension_numbers = #tpu.dot_dimension_numbers<[1], [0], [0], [1], [0, 0, 1, 1], [], []>} : vector<24x32xbf16>, vector<32x128xbf16>, vector<24x128xf32> -> vector<24x128xf32>
    %c0_14 = arith.constant 0 : index
    %c0_15 = arith.constant 0 : index
    %31 = vector.load %arg6[%c0_14, %c0_15] : memref<1x128xf32, #tpu.memory_space<vmem>>, vector<1x128xf32>
    %32 = vector.broadcast %31 : vector<1x128xf32> to vector<24x128xf32>
    %33 = arith.addf %30, %32 : vector<24x128xf32>
    %cst_16 = arith.constant 5.000000e-01 : f32
    %34 = vector.broadcast %cst_16 : f32 to vector<24x128xf32>
    %35 = arith.mulf %34, %33 : vector<24x128xf32>
    %cst_17 = arith.constant 4.471500e-02 : f32
    %36 = vector.broadcast %cst_17 : f32 to vector<24x128xf32>
    %37 = arith.mulf %36, %33 : vector<24x128xf32>
    %38 = arith.mulf %37, %33 : vector<24x128xf32>
    %39 = arith.mulf %38, %33 : vector<24x128xf32>
    %40 = arith.addf %33, %39 : vector<24x128xf32>
    %cst_18 = arith.constant 0.797884583 : f32
    %41 = vector.broadcast %cst_18 : f32 to vector<24x128xf32>
    %42 = arith.mulf %41, %40 : vector<24x128xf32>
    %43 = math.tanh %42 : vector<24x128xf32>
    %cst_19 = arith.constant 1.000000e+00 : f32
    %44 = vector.broadcast %cst_19 : f32 to vector<24x128xf32>
    %45 = arith.addf %44, %43 : vector<24x128xf32>
    %46 = arith.mulf %35, %45 : vector<24x128xf32>
    %47 = arith.truncf %46 : vector<24x128xf32> to vector<24x128xbf16>
    %c0_20 = arith.constant 0 : index
    %c0_21 = arith.constant 0 : index
    %48 = vector.load %arg7[%c0_20, %c0_21] : memref<128x32xbf16, #tpu.memory_space<vmem>>, vector<128x32xbf16>
    %cst_22 = arith.constant dense<0.000000e+00> : vector<24x32xf32>
    %49 = tpu.matmul %47, %48, %cst_22 {dimension_numbers = #tpu.dot_dimension_numbers<[1], [0], [0], [1], [0, 0, 1, 1], [], []>} : vector<24x128xbf16>, vector<128x32xbf16>, vector<24x32xf32> -> vector<24x32xf32>
    %c0_23 = arith.constant 0 : index
    %c0_24 = arith.constant 0 : index
    %50 = vector.load %arg8[%c0_23, %c0_24] : memref<1x32xf32, #tpu.memory_space<vmem>>, vector<1x32xf32>
    %51 = vector.broadcast %50 : vector<1x32xf32> to vector<24x32xf32>
    %52 = arith.addf %49, %51 : vector<24x32xf32>
    %53 = arith.addf %3, %52 : vector<24x32xf32>
    %c0_25 = arith.constant 0 : index
    %c0_26 = arith.constant 0 : index
    %54 = vector.load %arg9[%c0_25, %c0_26] : memref<24x32xf32, #tpu.memory_space<vmem>>, vector<24x32xf32>
    tpu.vector_store %arg9[%c0_25, %c0_26], %53 {strides = array<i32>} : memref<24x32xf32, #tpu.memory_space<vmem>>, vector<24x32xf32>,
    return
  }
  func.func @transform_0(%arg0: i32) -> (i32, i32) {
    %c0_i32 = arith.constant 0 : i32
    %c0_i32_0 = arith.constant 0 : i32
    return %arg0, %c0_i32 : i32, i32
  }
  func.func @transform_1(%arg0: i32) -> (i32, i32) {
    %c0_i32 = arith.constant 0 : i32
    %c0_i32_0 = arith.constant 0 : i32
    return %arg0, %c0_i32 : i32, i32
  }
  func.func @transform_2(%arg0: i32) -> (i32, i32) {
    %c0_i32 = arith.constant 0 : i32
    %c0_i32_0 = arith.constant 0 : i32
    %c0_i32_1 = arith.constant 0 : i32
    return %c0_i32, %c0_i32_0 : i32, i32
  }
  func.func @transform_3(%arg0: i32) -> (i32, i32) {
    %c0_i32 = arith.constant 0 : i32
    %c0_i32_0 = arith.constant 0 : i32
    %c0_i32_1 = arith.constant 0 : i32
    return %c0_i32, %c0_i32_0 : i32, i32
  }
  func.func @transform_4(%arg0: i32) -> (i32, i32) {
    %c0_i32 = arith.constant 0 : i32
    %c0_i32_0 = arith.constant 0 : i32
    %c0_i32_1 = arith.constant 0 : i32
    return %c0_i32, %c0_i32_0 : i32, i32
  }
  func.func @transform_5(%arg0: i32) -> (i32, i32) {
    %c0_i32 = arith.constant 0 : i32
    %c0_i32_0 = arith.constant 0 : i32
    %c0_i32_1 = arith.constant 0 : i32
    return %c0_i32, %c0_i32_0 : i32, i32
  }
  func.func @transform_6(%arg0: i32) -> (i32, i32) {
    %c0_i32 = arith.constant 0 : i32
    %c0_i32_0 = arith.constant 0 : i32
    %c0_i32_1 = arith.constant 0 : i32
    return %c0_i32, %c0_i32_0 : i32, i32
  }
  func.func @transform_7(%arg0: i32) -> (i32, i32) {
    %c0_i32 = arith.constant 0 : i32
    %c0_i32_0 = arith.constant 0 : i32
    %c0_i32_1 = arith.constant 0 : i32
    return %c0_i32, %c0_i32_0 : i32, i32
  }
  func.func @transform_8(%arg0: i32) -> (i32, i32) {
    %c0_i32 = arith.constant 0 : i32
    %c0_i32_0 = arith.constant 0 : i32
    return %arg0, %c0_i32 : i32, i32
  }
}

</mosaic_0001>

<llo_original>
// kernel: block_forward.5
$region0: #{block_forward.5}
  #allocation0 [shape = 'u32[]', space=smem, size = 0x4, offset = 0x4, fixed_abs, tag = 'smem constant byte address 0x4 - core index']
  #allocation1 [shape = 'u32[72,128]{1,0:T(1,128)}', space=vmem, size = 0x9000, scoped, tag = 'internal scratch']
  %s0 = inlined_call_operand.vmem [shape: f32[34,32], index: 0, kind: input, shape index: {}]
  %s1 = inlined_call_operand.vmem [shape: bf16[34,32], index: 1, kind: input, shape index: {}]
  %s2 = inlined_call_operand.vmem [shape: f32[1,32], index: 2, kind: input, shape index: {}]
  %s3 = inlined_call_operand.vmem [shape: f32[1,32], index: 3, kind: input, shape index: {}]
  %s4 = inlined_call_operand.vmem [shape: bf16[32,128], index: 4, kind: input, shape index: {}]
  %s5 = inlined_call_operand.vmem [shape: f32[1,128], index: 5, kind: input, shape index: {}]
  %s6 = inlined_call_operand.vmem [shape: bf16[128,32], index: 6, kind: input, shape index: {}]
  %s7 = inlined_call_operand.vmem [shape: f32[1,32], index: 7, kind: input, shape index: {}]
  %s8 = inlined_call_operand.vmem [shape: f32[34,32], index: 8, kind: output, shape index: {}]
  %s9 = sld [smem:[#allocation0]]
  $region113: #{block_forward.5} parent=0
    _
  %s11 = ssub.s32 1, %s9
  %s12 = scalar_select 0, %s11, %s9
  $region1: #{block_forward.5} parent=0
    #allocation2 [shape = 'u8[24576]{0}', space=vmem, size = 0x6000, scoped, tag = 'output window, operand 0']
    loop: start=0, step=1, limit=4
    $region2: #{block_forward.5} parent=1 // loop_pre_header
      _
    $region3: #{block_forward.5} parent=1 // loop_header
      %s14 = sphi 0, %s18
      %p15 = scmp.ge.s32.totalorder %s14, 4
      %s24 = sphi 0, %s26
      %s27 = sphi 0, %s24
      %s28 = sphi 0, %s27
      %s44 = sphi 0, %s28
      %s50 = sphi 0, %s52
      %s53 = sphi 0, %s50
      %s54 = sphi 0, %s53
      %s70 = sphi 0, %s54
      %s74 = sphi 0, %s74
      %s76 = sphi 0, %s74
      %s77 = sphi 0, %s76
      %s91 = sphi 0, %s77
      %s95 = sphi 0, %s95
      %s97 = sphi 0, %s95
      %s98 = sphi 0, %s97
      %s112 = sphi 0, %s98
      %s116 = sphi 0, %s116
      %s118 = sphi 0, %s116
      %s119 = sphi 0, %s118
      %s133 = sphi 0, %s119
      %s137 = sphi 0, %s137
      %s139 = sphi 0, %s137
      %s140 = sphi 0, %s139
      %s154 = sphi 0, %s140
      %s158 = sphi 0, %s158
      %s160 = sphi 0, %s158
      %s161 = sphi 0, %s160
      %s175 = sphi 0, %s161
      %s179 = sphi 0, %s179
      %s181 = sphi 0, %s179
      %s182 = sphi 0, %s181
      %s196 = sphi 0, %s182
      %s202 = sphi 0, %s204
      %s205 = sphi 0, %s202
      %s206 = sphi 0, %s205
      %s222 = sphi 0, %s206
    $region4: #{block_forward.5} parent=1 // loop_header_branch
      %17 = sbr.rel (%p15) target = $region8
    $region5: #{block_forward.5} parent=1 // loop_body
      %s19 = ssub.s32 %s14, 1
      %s20 = ssub.s32 %s14, 2
      %s21 = sadd.s32 %s14, 1
      %s22 = ssub.s32 %s14, %s21
      %p23 = scmp.eq.s32.totalorder %s22, 0
      %s25 = sadd.s32 %s24, 1
      %s26 = scalar_select %p23, %s24, %s25
      %p29 = pneg %p23
      %p30 = scmp.eq.s32.totalorder %s14, 1
      %p31 = por %p29, %p30
      %p32 = scmp.ne.s32.totalorder %s24, %s27
      %p33 = scmp.eq.s32.totalorder %s14, 0
      %p34 = por %p32, %p33
      %p35 = scmp.ne.s32.totalorder %s24, %s27
      %p36 = scmp.eq.s32.totalorder %s19, 1
      %p37 = por %p35, %p36
      %p38 = scmp.ne.s32.totalorder %s27, %s28
      %p39 = scmp.eq.s32.totalorder %s19, 0
      %p40 = por %p38, %p39
      %p41 = scmp.ne.s32.totalorder %s27, %s28
      %p42 = scmp.eq.s32.totalorder %s20, 1
      %p43 = por %p41, %p42
      %p45 = scmp.ne.s32.totalorder %s28, %s44
      %p46 = scmp.eq.s32.totalorder %s20, 0
      %p47 = por %p45, %p46
      %s48 = ssub.s32 %s14, %s21
      %p49 = scmp.eq.s32.totalorder %s48, 0
      %s51 = sadd.s32 %s50, 1
      %s52 = scalar_select %p49, %s50, %s51
      %p55 = pneg %p49
      %p56 = scmp.eq.s32.totalorder %s14, 1
      %p57 = por %p55, %p56
      %p58 = scmp.ne.s32.totalorder %s50, %s53
      %p59 = scmp.eq.s32.totalorder %s14, 0
      %p60 = por %p58, %p59
      %p61 = scmp.ne.s32.totalorder %s50, %s53
      %p62 = scmp.eq.s32.totalorder %s19, 1
      %p63 = por %p61, %p62
      %p64 = scmp.ne.s32.totalorder %s53, %s54
      %p65 = scmp.eq.s32.totalorder %s19, 0
      %p66 = por %p64, %p65
      %p67 = scmp.ne.s32.totalorder %s53, %s54
      %p68 = scmp.eq.s32.totalorder %s20, 1
      %p69 = por %p67, %p68
      %p71 = scmp.ne.s32.totalorder %s54, %s70
      %p72 = scmp.eq.s32.totalorder %s20, 0
      %p73 = por %p71, %p72
      %s75 = sadd.s32 %s74, 1
      %p78 = scmp.eq.s32.totalorder %s14, 1
      %p79 = scmp.ne.s32.totalorder %s74, %s76
      %p80 = scmp.eq.s32.totalorder %s14, 0
      %p81 = por %p79, %p80
      %p82 = scmp.ne.s32.totalorder %s74, %s76
      %p83 = scmp.eq.s32.totalorder %s19, 1
      %p84 = por %p82, %p83
      %p85 = scmp.ne.s32.totalorder %s76, %s77
      %p86 = scmp.eq.s32.totalorder %s19, 0
      %p87 = por %p85, %p86
      %p88 = scmp.ne.s32.totalorder %s76, %s77
      %p89 = scmp.eq.s32.totalorder %s20, 1
      %p90 = por %p88, %p89
      %p92 = scmp.ne.s32.totalorder %s77, %s91
      %p93 = scmp.eq.s32.totalorder %s20, 0
      %p94 = por %p92, %p93
      %s96 = sadd.s32 %s95, 1
      %p99 = scmp.eq.s32.totalorder %s14, 1
      %p100 = scmp.ne.s32.totalorder %s95, %s97
      %p101 = scmp.eq.s32.totalorder %s14, 0
      %p102 = por %p100, %p101
      %p103 = scmp.ne.s32.totalorder %s95, %s97
      %p104 = scmp.eq.s32.totalorder %s19, 1
      %p105 = por %p103, %p104
      %p106 = scmp.ne.s32.totalorder %s97, %s98
      %p107 = scmp.eq.s32.totalorder %s19, 0
      %p108 = por %p106, %p107
      %p109 = scmp.ne.s32.totalorder %s97, %s98
      %p110 = scmp.eq.s32.totalorder %s20, 1
      %p111 = por %p109, %p110
      %p113 = scmp.ne.s32.totalorder %s98, %s112
      %p114 = scmp.eq.s32.totalorder %s20, 0
      %p115 = por %p113, %p114
      %s117 = sadd.s32 %s116, 1
      %p120 = scmp.eq.s32.totalorder %s14, 1
      %p121 = scmp.ne.s32.totalorder %s116, %s118
      %p122 = scmp.eq.s32.totalorder %s14, 0
      %p123 = por %p121, %p122
      %p124 = scmp.ne.s32.totalorder %s116, %s118
      %p125 = scmp.eq.s32.totalorder %s19, 1
      %p126 = por %p124, %p125
      %p127 = scmp.ne.s32.totalorder %s118, %s119
      %p128 = scmp.eq.s32.totalorder %s19, 0
      %p129 = por %p127, %p128
      %p130 = scmp.ne.s32.totalorder %s118, %s119
      %p131 = scmp.eq.s32.totalorder %s20, 1
      %p132 = por %p130, %p131
      %p134 = scmp.ne.s32.totalorder %s119, %s133
      %p135 = scmp.eq.s32.totalorder %s20, 0
      %p136 = por %p134, %p135
      %s138 = sadd.s32 %s137, 1
      %p141 = scmp.eq.s32.totalorder %s14, 1
      %p142 = scmp.ne.s32.totalorder %s137, %s139
      %p143 = scmp.eq.s32.totalorder %s14, 0
      %p144 = por %p142, %p143
      %p145 = scmp.ne.s32.totalorder %s137, %s139
      %p146 = scmp.eq.s32.totalorder %s19, 1
      %p147 = por %p145, %p146
      %p148 = scmp.ne.s32.totalorder %s139, %s140
      %p149 = scmp.eq.s32.totalorder %s19, 0
      %p150 = por %p148, %p149
      %p151 = scmp.ne.s32.totalorder %s139, %s140
      %p152 = scmp.eq.s32.totalorder %s20, 1
      %p153 = por %p151, %p152
      %p155 = scmp.ne.s32.totalorder %s140, %s154
      %p156 = scmp.eq.s32.totalorder %s20, 0
      %p157 = por %p155, %p156
      %s159 = sadd.s32 %s158, 1
      %p162 = scmp.eq.s32.totalorder %s14, 1
      %p163 = scmp.ne.s32.totalorder %s158, %s160
      %p164 = scmp.eq.s32.totalorder %s14, 0
      %p165 = por %p163, %p164
      %p166 = scmp.ne.s32.totalorder %s158, %s160
      %p167 = scmp.eq.s32.totalorder %s19, 1
      %p168 = por %p166, %p167
      %p169 = scmp.ne.s32.totalorder %s160, %s161
      %p170 = scmp.eq.s32.totalorder %s19, 0
      %p171 = por %p169, %p170
      %p172 = scmp.ne.s32.totalorder %s160, %s161
      %p173 = scmp.eq.s32.totalorder %s20, 1
      %p174 = por %p172, %p173
      %p176 = scmp.ne.s32.totalorder %s161, %s175
      %p177 = scmp.eq.s32.totalorder %s20, 0
      %p178 = por %p176, %p177
      %s180 = sadd.s32 %s179, 1
      %p183 = scmp.eq.s32.totalorder %s14, 1
      %p184 = scmp.ne.s32.totalorder %s179, %s181
      %p185 = scmp.eq.s32.totalorder %s14, 0
      %p186 = por %p184, %p185
      %p187 = scmp.ne.s32.totalorder %s179, %s181
      %p188 = scmp.eq.s32.totalorder %s19, 1
      %p189 = por %p187, %p188
      %p190 = scmp.ne.s32.totalorder %s181, %s182
      %p191 = scmp.eq.s32.totalorder %s19, 0
      %p192 = por %p190, %p191
      %p193 = scmp.ne.s32.totalorder %s181, %s182
      %p194 = scmp.eq.s32.totalorder %s20, 1
      %p195 = por %p193, %p194
      %p197 = scmp.ne.s32.totalorder %s182, %s196
      %p198 = scmp.eq.s32.totalorder %s20, 0
      %p199 = por %p197, %p198
      %s200 = ssub.s32 %s14, %s21
      %p201 = scmp.eq.s32.totalorder %s200, 0
      %s203 = sadd.s32 %s202, 1
      %s204 = scalar_select %p201, %s202, %s203
      %p207 = pneg %p201
      %p208 = scmp.eq.s32.totalorder %s14, 1
      %p209 = por %p207, %p208
      %p210 = scmp.ne.s32.totalorder %s202, %s205
      %p211 = scmp.eq.s32.totalorder %s14, 0
      %p212 = por %p210, %p211
      %p213 = scmp.ne.s32.totalorder %s202, %s205
      %p214 = scmp.eq.s32.totalorder %s19, 1
      %p215 = por %p213, %p214
      %p216 = scmp.ne.s32.totalorder %s205, %s206
      %p217 = scmp.eq.s32.totalorder %s19, 0
      %p218 = por %p216, %p217
      %p219 = scmp.ne.s32.totalorder %s205, %s206
      %p220 = scmp.eq.s32.totalorder %s20, 1
      %p221 = por %p219, %p220
      %p223 = scmp.ne.s32.totalorder %s206, %s222
      %p224 = scmp.eq.s32.totalorder %s20, 0
      %p225 = por %p223, %p224
      %p226 = scmp.le.s32.totalorder 1, %s14
      %p227 = scmp.lt.s32.totalorder %s14, 3
      %p228 = pnand %p226, %p227
      %p229 = pneg %p228
      // Predicated region
      $region9: #{block_forward.5} parent=5 // pred_check
        _
      $region10: #{block_forward.5} parent=5 // pred_check_branch
        %231 = sbr.rel (%p228) target = $region12
      $region11: #{block_forward.5} parent=5 // pred_region
        %s232 = ssub.s32 %s14, 1
        // Predicated region
        $region13: #{block_forward.5} parent=11 // pred_check
          %p233 = pneg %p87
        $region14: #{block_forward.5} parent=11 // pred_check_branch
          %235 = sbr.rel (%p233) target = $region16
        $region15: #{block_forward.5} parent=11 // pred_region
          _
        $region16: #{block_forward.5} parent=11 // pred_fallthru
          _
        // Predicated region
        $region17: #{block_forward.5} parent=11 // pred_check
          %p236 = pneg %p108
        $region18: #{block_forward.5} parent=11 // pred_check_branch
          %238 = sbr.rel (%p236) target = $region20
        $region19: #{block_forward.5} parent=11 // pred_region
          _
        $region20: #{block_forward.5} parent=11 // pred_fallthru
          _
        // Predicated region
        $region21: #{block_forward.5} parent=11 // pred_check
          %p239 = pneg %p129
        $region22: #{block_forward.5} parent=11 // pred_check_branch
          %241 = sbr.rel (%p239) target = $region24
        $region23: #{block_forward.5} parent=11 // pred_region
          _
        $region24: #{block_forward.5} parent=11 // pred_fallthru
          _
        // Predicated region
        $region25: #{block_forward.5} parent=11 // pred_check
          %p242 = pneg %p150
        $region26: #{block_forward.5} parent=11 // pred_check_branch
          %244 = sbr.rel (%p242) target = $region28
        $region27: #{block_forward.5} parent=11 // pred_region
          _
        $region28: #{block_forward.5} parent=11 // pred_fallthru
          _
        // Predicated region
        $region29: #{block_forward.5} parent=11 // pred_check
          %p245 = pneg %p171
        $region30: #{block_forward.5} parent=11 // pred_check_branch
          %247 = sbr.rel (%p245) target = $region32
        $region31: #{block_forward.5} parent=11 // pred_region
          _
        $region32: #{block_forward.5} parent=11 // pred_fallthru
          _
        // Predicated region
        $region33: #{block_forward.5} parent=11 // pred_check
          %p248 = pneg %p192
        $region34: #{block_forward.5} parent=11 // pred_check_branch
          %250 = sbr.rel (%p248) target = $region36
        $region35: #{block_forward.5} parent=11 // pred_region
          _
        $region36: #{block_forward.5} parent=11 // pred_fallthru
          _
      $region12: #{block_forward.5} parent=5 // pred_fallthru
        _
      %p251 = scmp.lt.s32.totalorder %s14, 2
      // Predicated region
      $region37: #{block_forward.5} parent=5 // pred_check
        %p252 = pneg %p251
      $region38: #{block_forward.5} parent=5 // pred_check_branch
        %254 = sbr.rel (%p252) target = $region40
      $region39: #{block_forward.5} parent=5 // pred_region
        // Predicated region
        $region41: #{block_forward.5} parent=39 // pred_check
          %p255 = pneg %p34
        $region42: #{block_forward.5} parent=39 // pred_check_branch
          %257 = sbr.rel (%p255) target = $region44
        $region43: #{block_forward.5} parent=39 // pred_region
          %s258 = smul.u32 3, %s14
          %s259 = ssub.s32 5, %s258
          %p260 = scmp.lt.s32.totalorder %s259, 3
          %s261 = scalar_select %p260, %s259, 3
          %s262 = smul.u32 8, %s261
          %p263 = scmp.lt.s32.totalorder %s258, 4
          %s264 = scalar_select %p263, %s258, 4
          %s265 = smul.addr %s264, 8
          %s266 = scalar_lea.vmem %s0, %s265
          %s267 = smul.u32 3, %s14
          %s268 = ssub.s32 5, %s267
          %p269 = scmp.lt.s32.totalorder %s268, 3
          %s270 = scalar_select %p269, %s268, 3
          %s271 = smul.u32 8, %s270
        $region44: #{block_forward.5} parent=39 // pred_fallthru
          _
        // Predicated region
        $region45: #{block_forward.5} parent=39 // pred_check
          %p272 = pneg %p60
        $region46: #{block_forward.5} parent=39 // pred_check_branch
          %274 = sbr.rel (%p272) target = $region48
        $region47: #{block_forward.5} parent=39 // pred_region
          %s275 = smul.u32 3, %s14
          %s276 = ssub.s32 5, %s275
          %p277 = scmp.lt.s32.totalorder %s276, 3
          %s278 = scalar_select %p277, %s276, 3
          %s279 = smul.u32 4, %s278
          %p280 = scmp.lt.s32.totalorder %s275, 4
          %s281 = scalar_select %p280, %s275, 4
          %s282 = smul.addr %s281, 4
          %s283 = scalar_lea.vmem %s1, %s282
          %s284 = smul.u32 3, %s14
          %s285 = ssub.s32 5, %s284
          %p286 = scmp.lt.s32.totalorder %s285, 3
          %s287 = scalar_select %p286, %s285, 3
          %s288 = smul.u32 4, %s287
        $region48: #{block_forward.5} parent=39 // pred_fallthru
          _
      $region40: #{block_forward.5} parent=5 // pred_fallthru
        _
      %p289 = scmp.le.s32.totalorder 1, %s14
      %p290 = scmp.lt.s32.totalorder %s14, 3
      %p291 = pnand %p289, %p290
      %p292 = pneg %p291
      // Predicated region
      $region49: #{block_forward.5} parent=5 // pred_check
        _
      $region50: #{block_forward.5} parent=5 // pred_check_branch
        %294 = sbr.rel (%p291) target = $region52
      $region51: #{block_forward.5} parent=5 // pred_region
        %s295 = ssub.s32 %s14, 1
        %s296 = smul.u32 3, %s19
        %s297 = ssub.s32 5, %s296
        %p298 = scmp.lt.s32.totalorder %s297, 3
        %s299 = scalar_select %p298, %s297, 3
        %s300 = smul.u32 8, %s299
        %p301 = scmp.lt.s32.totalorder %s296, 4
        %s302 = scalar_select %p301, %s296, 4
        %s303 = smul.addr %s302, 8
        %s304 = scalar_lea.vmem %s0, %s303
        %p305 = pneg %p40
        %p306 = pneg %p37
        %s307 = smul.u32 3, %s19
        %s308 = ssub.s32 5, %s307
        %p309 = scmp.lt.s32.totalorder %s308, 3
        %s310 = scalar_select %p309, %s308, 3
        %s311 = smul.u32 4, %s310
        %p312 = scmp.lt.s32.totalorder %s307, 4
        %s313 = scalar_select %p312, %s307, 4
        %s314 = smul.addr %s313, 4
        %s315 = scalar_lea.vmem %s1, %s314
        %p316 = pneg %p66
        %p317 = pneg %p63
        %p318 = pneg %p87
        %p319 = pneg %p84
        %p320 = pneg %p108
        %p321 = pneg %p105
        %p322 = pneg %p129
        %p323 = pneg %p126
        %p324 = pneg %p150
        %p325 = pneg %p147
        %p326 = pneg %p171
        %p327 = pneg %p168
        %p328 = pneg %p192
        %p329 = pneg %p189
        %p330 = pneg %p218
        %p331 = pneg %p215
        %s332 = sand.u32 %s205, 1
        %s333 = sand.u32 %s205, 1
        %s334 = smul.addr %s333, 24
        %s335 = scalar_lea.vmem [#allocation2], %s334
        %s336 = smul.u32 3, %s19
        %s337 = ssub.s32 5, %s336
        %p338 = scmp.lt.s32.totalorder %s337, 3
        %s339 = scalar_select %p338, %s337, 3
        %s340 = smul.u32 8, %s339
        %p341 = scmp.lt.s32.totalorder %s336, 4
        %s342 = scalar_select %p341, %s336, 4
        %s343 = smul.addr %s342, 8
        %s344 = scalar_lea.vmem %s0, %s343
        %s345 = smul.u32 3, %s19
        %s346 = ssub.s32 5, %s345
        %p347 = scmp.lt.s32.totalorder %s346, 3
        %s348 = scalar_select %p347, %s346, 3
        %s349 = smul.u32 8, %s348
        %s350 = smul.u32 3, %s19
        %s351 = ssub.s32 5, %s350
        %p352 = scmp.lt.s32.totalorder %s351, 3
        %s353 = scalar_select %p352, %s351, 3
        %s354 = smul.u32 4, %s353
        %p355 = scmp.lt.s32.totalorder %s350, 4
        %s356 = scalar_select %p355, %s350, 4
        %s357 = smul.addr %s356, 4
        %s358 = scalar_lea.vmem %s1, %s357
        %s359 = smul.u32 3, %s19
        %s360 = ssub.s32 5, %s359
        %p361 = scmp.lt.s32.totalorder %s360, 3
        %s362 = scalar_select %p361, %s360, 3
        %s363 = smul.u32 4, %s362
        %s364 = smul.u32 3, %s19
        %s365 = ssub.s32 5, %s364
        %p366 = scmp.lt.s32.totalorder %s365, 3
        %s367 = scalar_select %p366, %s365, 3
        %s368 = smul.u32 8, %s367
        %v370 = vld [vmem:[%s344] sm:$0xff]
        %v371 = vld [vmem:[%s344 + $0x8] sm:$0xff]
        %v372 = vld [vmem:[%s344 + $0x10] sm:$0xff]
        %v373 = vld [vmem:[%s358] sm:$0xf]
        %v374 = vld [vmem:[%s358 + $0x4] sm:$0xf]
        %v375 = vld [vmem:[%s358 + $0x8] sm:$0xf]
        %v376 = vunpack.c.l.bf16 %v373
        %v377 = vunpack.c.l.bf16 %v374
        %v378 = vunpack.c.l.bf16 %v375
        %v379 = vadd.f32 %v370, %v376
        %v380 = vadd.f32 %v371, %v377
        %v381 = vadd.f32 %v372, %v378
        %v382 = vld [vmem:[%s2] sm:$0x1]
        %v383 = vld [vmem:[%s3] sm:$0x1]
        %vm384 = vcmask 261120
        %v385 = vsel %vm384, %v379, 0.0
        %386 = vadd.xlane.f32.xlu0 %v385
        %v387 = vpop.xlane.xlu0 %386
        %v388 = vsel %vm384, %v380, 0.0
        %389 = vadd.xlane.f32.xlu0 %v388
        %v390 = vpop.xlane.xlu0 %389
        %v391 = vsel %vm384, %v381, 0.0
        %392 = vadd.xlane.f32.xlu0 %v391
        %v393 = vpop.xlane.xlu0 %392
        %v394 = vrcp.pop 32.0
        %v395 = vmul.f32 32.0, %v394
        %v396 = vsub.f32 1.0, %v395
        %v397 = vmul.f32 %v394, %v396
        %v398 = vadd.f32 %v394, %v397
        %vm399 = vweird.f32 %v394
        %v400 = vsel %vm399, %v394, %v398
        %v401 = vmul.f32 %v387, %v400
        %v402 = vmul.f32 %v390, %v400
        %v403 = vmul.f32 %v393, %v400
        %v404 = vsub.f32 %v379, %v401
        %v405 = vsub.f32 %v380, %v402
        %v406 = vsub.f32 %v381, %v403
        %v407 = vmul.f32 %v404, %v404
        %v408 = vmul.f32 %v405, %v405
        %v409 = vmul.f32 %v406, %v406
        %v410 = vsel %vm384, %v407, 0.0
        %411 = vadd.xlane.f32.xlu0 %v410
        %v412 = vpop.xlane.xlu0 %411
        %v413 = vsel %vm384, %v408, 0.0
        %414 = vadd.xlane.f32.xlu0 %v413
        %v415 = vpop.xlane.xlu0 %414
        %v416 = vsel %vm384, %v409, 0.0
        %417 = vadd.xlane.f32.xlu0 %v416
        %v418 = vpop.xlane.xlu0 %417
        %v419 = vmul.f32 %v412, %v400
        %v420 = vmul.f32 %v415, %v400
        %v421 = vmul.f32 %v418, %v400
        %v422 = vadd.f32 %v419, 1e-05
        %v423 = vadd.f32 %v420, 1e-05
        %v424 = vadd.f32 %v421, 1e-05
        %v425 = vrsqrt.pop %v422
        %v426 = vmul.f32 %v425, %v422
        %v427 = vmul.f32 %v426, %v425
        %v428 = vmul.f32 0.5, %v427
        %v429 = vsub.f32 1.5, %v428
        %v430 = vmul.f32 %v425, %v429
        %vm431 = vweird.f32 %v422
        %vm432 = vweird.f32 %v425
        %vm433 = vmor %vm431, %vm432
        %v434 = vsel %vm433, %v425, %v430
        %v435 = vrsqrt.pop %v423
        %v436 = vmul.f32 %v435, %v423
        %v437 = vmul.f32 %v436, %v435
        %v438 = vmul.f32 0.5, %v437
        %v439 = vsub.f32 1.5, %v438
        %v440 = vmul.f32 %v435, %v439
        %vm441 = vweird.f32 %v423
        %vm442 = vweird.f32 %v435
        %vm443 = vmor %vm441, %vm442
        %v444 = vsel %vm443, %v435, %v440
        %v445 = vrsqrt.pop %v424
        %v446 = vmul.f32 %v445, %v424
        %v447 = vmul.f32 %v446, %v445
        %v448 = vmul.f32 0.5, %v447
        %v449 = vsub.f32 1.5, %v448
        %v450 = vmul.f32 %v445, %v449
        %vm451 = vweird.f32 %v424
        %vm452 = vweird.f32 %v445
        %vm453 = vmor %vm451, %vm452
        %v454 = vsel %vm453, %v445, %v450
        %v455 = vmul.f32 %v404, %v434
        %v456 = vmul.f32 %v405, %v444
        %v457 = vmul.f32 %v406, %v454
        %v459 = vperm.slane %v382, 0
        %v461 = vmul.f32 %v455, %v459
        %v462 = vmul.f32 %v456, %v459
        %v463 = vmul.f32 %v457, %v459
        %v465 = vperm.slane %v383, 0
        %v467 = vadd.f32 %v461, %v465
        %v468 = vadd.f32 %v462, %v465
        %v469 = vadd.f32 %v463, %v465
        %v470 = vpack.c.bf16 %v468, %v467
        %v471 = vpack.c.bf16 %v469, %v469
        %v472 = vld [vmem:[%s4] sm:$0xf]
        %v473 = vld [vmem:[%s4 + $0x4] sm:$0xf]
        %v474 = vld [vmem:[%s4 + $0x8] sm:$0xf]
        %v475 = vld [vmem:[%s4 + $0xc] sm:$0xf]
        %v476 = vld [vmem:[%s5] sm:$0x1]
        %v478 = vperm.slane %v476, 0
        %v484 = vunpack.c.l.b16 %v472
        %v485 = vunpack.c.l.b16 %v473
        %v486 = vunpack.c.l.b16 %v474
        %v487 = vunpack.c.l.b16 %v475
        %v488 = vpack.c.b16 %v485, %v484
        %v489 = vpack.c.b16 %v487, %v486
        %v493 = vsel %vm384, %v470, 0
        %v496 = vsel %vm384, %v471, 0
        %498 = vmatpush.bf16.msra.mxu0 0
        %499 = vmatpush.bf16.msra.mxu0 0
        %500 = vmatpush.bf16.msra.mxu0 0
        %501 = vmatpush.bf16.msra.mxu0 0
        %502 = vmatpush.bf16.msra.mxu0 0
        %503 = vmatpush.bf16.msra.mxu0 0
        %504 = vmatpush.bf16.msra.mxu0 %v489
        %505 = vmatpush.bf16.msra.mxu0 %v488
        %506 = vmatmul.bf16.gmra.mxu0 %v493
        %v507 = vpop.f32.mrf.mxu0
        %v508 = vadd.f32 %v478, %v507
        %v509 = vpop.f32.mrf.mxu0
        %v510 = vadd.f32 %v478, %v509
        %511 = vmatmul.bf16.gmra.mxu0 %v496
        %v512 = vpop.f32.mrf.mxu0
        %v513 = vadd.f32 %v478, %v512
        %v514 = vpop.f32.mrf.mxu0
        %515 = vdwg.mxu0
        %v516 = vmul.f32 %v508, 0.5
        %v517 = vmul.f32 %v510, 0.5
        %v518 = vmul.f32 %v513, 0.5
        %v519 = vmul.f32 %v508, 0.044715
        %v520 = vmul.f32 %v510, 0.044715
        %v521 = vmul.f32 %v513, 0.044715
        %v522 = vmul.f32 %v519, %v508
        %v523 = vmul.f32 %v520, %v510
        %v524 = vmul.f32 %v521, %v513
        %v525 = vmul.f32 %v522, %v508
        %v526 = vmul.f32 %v523, %v510
        %v527 = vmul.f32 %v524, %v513
        %v528 = vadd.f32 %v508, %v525
        %v529 = vadd.f32 %v510, %v526
        %v530 = vadd.f32 %v513, %v527
        %v531 = vmul.f32 %v528, 0.7978846
        %v532 = vmul.f32 %v529, 0.7978846
        %v533 = vmul.f32 %v530, 0.7978846
        %v534 = vtanh.pop %v531
        %v535 = vtanh.pop %v532
        %v536 = vtanh.pop %v533
        %v537 = vadd.f32 %v534, 1.0
        %v538 = vadd.f32 %v535, 1.0
        %v539 = vadd.f32 %v536, 1.0
        %v540 = vmul.f32 %v516, %v537
        %v541 = vmul.f32 %v517, %v538
        %v542 = vmul.f32 %v518, %v539
        %v543 = vpack.c.bf16 %v541, %v540
        %v544 = vpack.c.bf16 %v542, %v542
        %v545 = vld [vmem:[%s6] sm:$0xf]
        %v546 = vld [vmem:[%s6 + $0x4] sm:$0xf]
        %v547 = vld [vmem:[%s6 + $0x8] sm:$0xf]
        %v548 = vld [vmem:[%s6 + $0xc] sm:$0xf]
        %v549 = vld [vmem:[%s6 + $0x10] sm:$0xf]
        %v550 = vld [vmem:[%s6 + $0x14] sm:$0xf]
        %v551 = vld [vmem:[%s6 + $0x18] sm:$0xf]
        %v552 = vld [vmem:[%s6 + $0x1c] sm:$0xf]
        %v553 = vld [vmem:[%s6 + $0x20] sm:$0xf]
        %v554 = vld [vmem:[%s6 + $0x24] sm:$0xf]
        %v555 = vld [vmem:[%s6 + $0x28] sm:$0xf]
        %v556 = vld [vmem:[%s6 + $0x2c] sm:$0xf]
        %v557 = vld [vmem:[%s6 + $0x30] sm:$0xf]
        %v558 = vld [vmem:[%s6 + $0x34] sm:$0xf]
        %v559 = vld [vmem:[%s6 + $0x38] sm:$0xf]
        %v560 = vld [vmem:[%s6 + $0x3c] sm:$0xf]
        %v561 = vld [vmem:[%s7] sm:$0x1]
        %v563 = vperm.slane %v561, 0
        %v581 = vunpack.c.l.b16 %v545
        %v582 = vunpack.c.l.b16 %v546
        %v583 = vunpack.c.l.b16 %v547
        %v584 = vunpack.c.l.b16 %v548
        %v585 = vunpack.c.l.b16 %v549
        %v586 = vunpack.c.l.b16 %v550
        %v587 = vunpack.c.l.b16 %v551
        %v588 = vunpack.c.l.b16 %v552
        %v589 = vunpack.c.l.b16 %v553
        %v590 = vunpack.c.l.b16 %v554
        %v591 = vunpack.c.l.b16 %v555
        %v592 = vunpack.c.l.b16 %v556
        %v593 = vunpack.c.l.b16 %v557
        %v594 = vunpack.c.l.b16 %v558
        %v595 = vunpack.c.l.b16 %v559
        %v596 = vunpack.c.l.b16 %v560
        %v597 = vpack.c.b16 %v582, %v581
        %v598 = vpack.c.b16 %v584, %v583
        %v599 = vpack.c.b16 %v586, %v585
        %v600 = vpack.c.b16 %v588, %v587
        %v601 = vpack.c.b16 %v590, %v589
        %v602 = vpack.c.b16 %v592, %v591
        %v603 = vpack.c.b16 %v594, %v593
        %v604 = vpack.c.b16 %v596, %v595
        %613 = vmatpush.bf16.msra.mxu0 %v604
        %614 = vmatpush.bf16.msra.mxu0 %v603
        %615 = vmatpush.bf16.msra.mxu0 %v602
        %616 = vmatpush.bf16.msra.mxu0 %v601
        %617 = vmatpush.bf16.msra.mxu0 %v600
        %618 = vmatpush.bf16.msra.mxu0 %v599
        %619 = vmatpush.bf16.msra.mxu0 %v598
        %620 = vmatpush.bf16.msra.mxu0 %v597
        %621 = vmatmul.bf16.gmra.mxu0 %v543
        %v622 = vpop.f32.mrf.mxu0
        %v623 = vadd.f32 %v563, %v622
        %v624 = vpop.f32.mrf.mxu0
        %v625 = vadd.f32 %v563, %v624
        %626 = vmatmul.bf16.gmra.mxu0 %v544
        %v627 = vpop.f32.mrf.mxu0
        %v628 = vadd.f32 %v563, %v627
        %v629 = vpop.f32.mrf.mxu0
        %630 = vdwg.mxu0
        %v631 = vadd.f32 %v379, %v623
        %v632 = vadd.f32 %v380, %v625
        %v633 = vadd.f32 %v381, %v628
        %634 = vst.msk [vmem:[%s335] sm:$0xff] %vm384, %v631
        %635 = vst.msk [vmem:[%s335 + $0x8] sm:$0xff] %vm384, %v632
        %636 = vst.msk [vmem:[%s335 + $0x10] sm:$0xff] %vm384, %v633
        %s637 = sand.u32 %s205, 1
        %s638 = sand.u32 %s205, 1
        %s639 = smul.addr %s638, 24
        %s640 = scalar_lea.vmem [#allocation2], %s639
        // Predicated region
        $region53: #{block_forward.5} parent=51 // pred_check
          %p641 = pneg %p215
        $region54: #{block_forward.5} parent=51 // pred_check_branch
          %643 = sbr.rel (%p641) target = $region56
        $region55: #{block_forward.5} parent=51 // pred_region
          %s644 = smul.u32 3, %s19
          %s645 = ssub.s32 5, %s644
          %p646 = scmp.lt.s32.totalorder %s645, 3
          %s647 = scalar_select %p646, %s645, 3
          %s648 = smul.u32 8, %s647
          %p649 = scmp.ne.s32.totalorder 0, %s648
          %s650 = smul.addr %s644, 8
          %s651 = scalar_lea.vmem %s8, %s650
          // Predicated region
          $region57: #{block_forward.5} parent=55 // pred_check
            %p652 = pneg %p649
          $region58: #{block_forward.5} parent=55 // pred_check_branch
            %654 = sbr.rel (%p652) target = $region60
          $region59: #{block_forward.5} parent=55 // pred_region
            // Predicated region
            $region61: #{block_forward.5} parent=59 // pred_check
              _
            $region62: #{block_forward.5} parent=59 // pred_check_branch
              %656 = sbr.rel (0) target = $region64
            $region63: #{block_forward.5} parent=59 // pred_region
              // Predicated region
              $region83: #{block_forward.5} parent=63 // pred_check
                _
              $region84: #{block_forward.5} parent=63 // pred_check_branch
                %711 = sbr.rel (0) target = $region86
              $region85: #{block_forward.5} parent=63 // pred_region
                %s712 = sdiv.u32.pop %s647, 3
                %s713 = srem.u32.pop %s647, 3
                // While loop
                $region87: #{block_forward.5} parent=85 // loop_pre_header
                  _
                $region88: #{block_forward.5} parent=85 // loop_header
                  %s715 = sphi 0, %s717
                  %p716 = scmp.ge.s32.totalorder %s715, %s712
                  %s720 = sphi 0, %s731
                  %s721 = sphi %s640, %s734
                  %s722 = sphi %s651, %s735
                $region89: #{block_forward.5} parent=85 // loop_header_branch
                  %719 = sbr.rel (%p716) target = $region93
                $region90: #{block_forward.5} parent=85 // loop_body
                  %v723 = vld [vmem:[%s721] sm:$0xff]
                  %724 = vst [vmem:[%s722] sm:$0xff] %v723
                  %v725 = vld [vmem:[%s721 + $0x8] sm:$0xff]
                  %726 = vst [vmem:[%s722 + $0x8] sm:$0xff] %v725
                  %v727 = vld [vmem:[%s721 + $0x10] sm:$0xff]
                  %728 = vst [vmem:[%s722 + $0x10] sm:$0xff] %v727
                  %s729 = sadd.s32 1, %s720
                  %p730 = scmp.ge.s32.totalorder %s729, %s712
                  %s731 = scalar_select %p730, 0, %s729
                  %s732 = smul.u32 %s731, 24
                  %s733 = smul.u32 %s731, 24
                  %s734 = scalar_lea.vmem %s640, %s732 [#allocation2]
                  %s735 = scalar_lea.vmem %s651, %s733
                $region91: #{block_forward.5} parent=85 // loop_footer
                  %s717 = sadd.s32 %s715, 1
                $region92: #{block_forward.5} parent=85 // loop_footer_branch
                  %714 = sbr.rel target = $region88
                $region93: #{block_forward.5} parent=85 // loop_exit
                  _
                %s736 = sdiv.u32.pop %s647, 3
                %s737 = srem.u32.pop %s647, 3
                %s738 = smul.u32 %s736, 3
                %s739 = smul.u32 8, %s738
                %s740 = scalar_lea.vmem %s640, %s739 [#allocation2]
                %s741 = smul.u32 8, %s738
                %s742 = scalar_lea.vmem %s651, %s741
                // While loop
                $region94: #{block_forward.5} parent=85 // loop_pre_header
                  _
                $region95: #{block_forward.5} parent=85 // loop_header
                  %s744 = sphi 0, %s746
                  %p745 = scmp.ge.s32.totalorder %s744, %s737
                  %s749 = sphi 0, %s756
                  %s750 = sphi %s740, %s759
                  %s751 = sphi %s742, %s760
                $region96: #{block_forward.5} parent=85 // loop_header_branch
                  %748 = sbr.rel (%p745) target = $region100
                $region97: #{block_forward.5} parent=85 // loop_body
                  %v752 = vld [vmem:[%s750] sm:$0xff]
                  %753 = vst [vmem:[%s751] sm:$0xff] %v752
                  %s754 = sadd.s32 1, %s749
                  %p755 = scmp.ge.s32.totalorder %s754, %s737
                  %s756 = scalar_select %p755, 0, %s754
                  %s757 = smul.u32 %s756, 8
                  %s758 = smul.u32 %s756, 8
                  %s759 = scalar_lea.vmem %s740, %s757 [#allocation2]
                  %s760 = scalar_lea.vmem %s742, %s758
                $region98: #{block_forward.5} parent=85 // loop_footer
                  %s746 = sadd.s32 %s744, 1
                $region99: #{block_forward.5} parent=85 // loop_footer_branch
                  %743 = sbr.rel target = $region95
                $region100: #{block_forward.5} parent=85 // loop_exit
                  _
              $region86: #{block_forward.5} parent=63 // pred_fallthru
                _
              // Predicated region
              $region101: #{block_forward.5} parent=63 // pred_check
                _
              $region102: #{block_forward.5} parent=63 // pred_check_branch
                %762 = sbr.rel target = $region104
              $region103: #{block_forward.5} parent=63 // pred_region
                _
              $region104: #{block_forward.5} parent=63 // pred_fallthru
                _
            $region64: #{block_forward.5} parent=59 // pred_fallthru
              _
            // Predicated region
            $region65: #{block_forward.5} parent=59 // pred_check
              _
            $region66: #{block_forward.5} parent=59 // pred_check_branch
              %658 = sbr.rel target = $region68
            $region67: #{block_forward.5} parent=59 // pred_region
              %s660 = ssub.s32 256, 1
              %s661 = sdiv.u32.pop %s647, 3
              %s662 = srem.u32.pop %s647, 3
              // While loop
              $region69: #{block_forward.5} parent=67 // loop_pre_header
                _
              $region70: #{block_forward.5} parent=67 // loop_header
                %s664 = sphi 0, %s666
                %p665 = scmp.ge.s32.totalorder %s664, %s661
                %s669 = sphi 0, %s680
                %s670 = sphi %s640, %s683
                %s671 = sphi %s651, %s684
              $region71: #{block_forward.5} parent=67 // loop_header_branch
                %668 = sbr.rel (%p665) target = $region75
              $region72: #{block_forward.5} parent=67 // loop_body
                %v672 = vld [vmem:[%s670] sm:%s660]
                %673 = vst [vmem:[%s671] sm:%s660] %v672
                %v674 = vld [vmem:[%s670 + $0x8] sm:%s660]
                %675 = vst [vmem:[%s671 + $0x8] sm:%s660] %v674
                %v676 = vld [vmem:[%s670 + $0x10] sm:%s660]
                %677 = vst [vmem:[%s671 + $0x10] sm:%s660] %v676
                %s678 = sadd.s32 1, %s669
                %p679 = scmp.ge.s32.totalorder %s678, %s661
                %s680 = scalar_select %p679, 0, %s678
                %s681 = smul.u32 %s680, 24
                %s682 = smul.u32 %s680, 24
                %s683 = scalar_lea.vmem %s640, %s681 [#allocation2]
                %s684 = scalar_lea.vmem %s651, %s682
              $region73: #{block_forward.5} parent=67 // loop_footer
                %s666 = sadd.s32 %s664, 1
              $region74: #{block_forward.5} parent=67 // loop_footer_branch
                %663 = sbr.rel target = $region70
              $region75: #{block_forward.5} parent=67 // loop_exit
                _
              %s685 = sdiv.u32.pop %s647, 3
              %s686 = srem.u32.pop %s647, 3
              %s687 = smul.u32 %s685, 3
              %s688 = smul.u32 8, %s687
              %s689 = scalar_lea.vmem %s640, %s688 [#allocation2]
              %s690 = smul.u32 8, %s687
              %s691 = scalar_lea.vmem %s651, %s690
              // While loop
              $region76: #{block_forward.5} parent=67 // loop_pre_header
                _
              $region77: #{block_forward.5} parent=67 // loop_header
                %s693 = sphi 0, %s695
                %p694 = scmp.ge.s32.totalorder %s693, %s686
                %s698 = sphi 0, %s705
                %s699 = sphi %s689, %s708
                %s700 = sphi %s691, %s709
              $region78: #{block_forward.5} parent=67 // loop_header_branch
                %697 = sbr.rel (%p694) target = $region82
              $region79: #{block_forward.5} parent=67 // loop_body
                %v701 = vld [vmem:[%s699] sm:%s660]
                %702 = vst [vmem:[%s700] sm:%s660] %v701
                %s703 = sadd.s32 1, %s698
                %p704 = scmp.ge.s32.totalorder %s703, %s686
                %s705 = scalar_select %p704, 0, %s703
                %s706 = smul.u32 %s705, 8
                %s707 = smul.u32 %s705, 8
                %s708 = scalar_lea.vmem %s689, %s706 [#allocation2]
                %s709 = scalar_lea.vmem %s691, %s707
              $region80: #{block_forward.5} parent=67 // loop_footer
                %s695 = sadd.s32 %s693, 1
              $region81: #{block_forward.5} parent=67 // loop_footer_branch
                %692 = sbr.rel target = $region77
              $region82: #{block_forward.5} parent=67 // loop_exit
                _
            $region68: #{block_forward.5} parent=59 // pred_fallthru
              _
          $region60: #{block_forward.5} parent=55 // pred_fallthru
            _
          %763 = vnop
        $region56: #{block_forward.5} parent=51 // pred_fallthru
          _
      $region52: #{block_forward.5} parent=5 // pred_fallthru
        _
      %p764 = scmp.le.s32.totalorder 2, %s14
      // Predicated region
      $region105: #{block_forward.5} parent=5 // pred_check
        %p765 = pneg %p764
      $region106: #{block_forward.5} parent=5 // pred_check_branch
        %767 = sbr.rel (%p765) target = $region108
      $region107: #{block_forward.5} parent=5 // pred_region
        %s768 = ssub.s32 %s14, 2
        // Predicated region
        $region109: #{block_forward.5} parent=107 // pred_check
          %p769 = pneg %p221
        $region110: #{block_forward.5} parent=107 // pred_check_branch
          %771 = sbr.rel (%p769) target = $region112
        $region111: #{block_forward.5} parent=107 // pred_region
          %s772 = sand.u32 %s206, 1
          %s773 = sand.u32 %s206, 1
          %s774 = smul.addr %s773, 24
          %s775 = scalar_lea.vmem [#allocation2], %s774
        $region112: #{block_forward.5} parent=107 // pred_fallthru
          _
      $region108: #{block_forward.5} parent=5 // pred_fallthru
        _
    $region6: #{block_forward.5} parent=1 // loop_footer
      %s18 = sadd.s32 1, %s14
    $region7: #{block_forward.5} parent=1 // loop_footer_branch
      %13 = sbr.rel target = $region3
    $region8: #{block_forward.5} parent=1 // loop_exit
      _

// kernel: block_forward.3
$region0: #{block_forward.3}
  #allocation0 [shape = 'u32[]', space=smem, size = 0x4, offset = 0x4, fixed_abs, tag = 'smem constant byte address 0x4 - core index']
  #allocation1 [shape = 'u32[72,128]{1,0:T(1,128)}', space=vmem, size = 0x9000, scoped, tag = 'internal scratch']
  #allocation2 [shape = 'bf16[4,4,96]{2,1,0:T(4,128)(2,1)}', space=vmem, size = 0x1000, scoped, tag = 'scratch operand']
  %s0 = inlined_call_operand.vmem [shape: f32[8,4,32], index: 0, kind: input, shape index: {}]
  %s1 = inlined_call_operand.vmem [shape: f32[1,32], index: 1, kind: input, shape index: {}]
  %s2 = inlined_call_operand.vmem [shape: f32[1,32], index: 2, kind: input, shape index: {}]
  %s3 = inlined_call_operand.vmem [shape: bf16[32,96], index: 3, kind: input, shape index: {}]
  %s4 = inlined_call_operand.vmem [shape: bf16[32,32], index: 4, kind: input, shape index: {}]
  %s5 = inlined_call_operand.vmem [shape: f32[1,32], index: 5, kind: input, shape index: {}]
  %s6 = inlined_call_operand.vmem [shape: bf16[32,32], index: 6, kind: input, shape index: {}]
  %s7 = inlined_call_operand.vmem [shape: f32[1,32], index: 7, kind: input, shape index: {}]
  %s8 = inlined_call_operand.vmem [shape: f32[8,4,32], index: 8, kind: output, shape index: {}]
  %s9 = sld [smem:[#allocation0]]
  $region65: #{block_forward.3} parent=0
    _
  %s11 = ssub.s32 1, %s9
  %s12 = scalar_select 0, %s11, %s9
  loop: start=0, step=1, limit=4
  $region2: #{block_forward.3} parent=0 // loop_pre_header
    _
  $region3: #{block_forward.3} parent=0 // loop_header
    %s14 = sphi 0, %s18
    %p15 = scmp.ge.s32.totalorder %s14, 4
    %s24 = sphi 0, %s26
    %s27 = sphi 0, %s24
    %s28 = sphi 0, %s27
    %s44 = sphi 0, %s28
    %s48 = sphi 0, %s48
    %s50 = sphi 0, %s48
    %s51 = sphi 0, %s50
    %s65 = sphi 0, %s51
    %s69 = sphi 0, %s69
    %s71 = sphi 0, %s69
    %s72 = sphi 0, %s71
    %s86 = sphi 0, %s72
    %s90 = sphi 0, %s90
    %s92 = sphi 0, %s90
    %s93 = sphi 0, %s92
    %s107 = sphi 0, %s93
    %s111 = sphi 0, %s111
    %s113 = sphi 0, %s111
    %s114 = sphi 0, %s113
    %s128 = sphi 0, %s114
    %s132 = sphi 0, %s132
    %s134 = sphi 0, %s132
    %s135 = sphi 0, %s134
    %s149 = sphi 0, %s135
    %s153 = sphi 0, %s153
    %s155 = sphi 0, %s153
    %s156 = sphi 0, %s155
    %s170 = sphi 0, %s156
    %s174 = sphi 0, %s174
    %s176 = sphi 0, %s174
    %s177 = sphi 0, %s176
    %s191 = sphi 0, %s177
    %s197 = sphi 0, %s199
    %s200 = sphi 0, %s197
    %s201 = sphi 0, %s200
    %s217 = sphi 0, %s201
  $region4: #{block_forward.3} parent=0 // loop_header_branch
    %17 = sbr.rel (%p15) target = $region8
  $region5: #{block_forward.3} parent=0 // loop_body
    %s19 = ssub.s32 %s14, 1
    %s20 = ssub.s32 %s14, 2
    %s21 = sadd.s32 %s14, 1
    %s22 = ssub.s32 %s14, %s21
    %p23 = scmp.eq.s32.totalorder %s22, 0
    %s25 = sadd.s32 %s24, 1
    %s26 = scalar_select %p23, %s24, %s25
    %p29 = pneg %p23
    %p30 = scmp.eq.s32.totalorder %s14, 1
    %p31 = por %p29, %p30
    %p32 = scmp.ne.s32.totalorder %s24, %s27
    %p33 = scmp.eq.s32.totalorder %s14, 0
    %p34 = por %p32, %p33
    %p35 = scmp.ne.s32.totalorder %s24, %s27
    %p36 = scmp.eq.s32.totalorder %s19, 1
    %p37 = por %p35, %p36
    %p38 = scmp.ne.s32.totalorder %s27, %s28
    %p39 = scmp.eq.s32.totalorder %s19, 0
    %p40 = por %p38, %p39
    %p41 = scmp.ne.s32.totalorder %s27, %s28
    %p42 = scmp.eq.s32.totalorder %s20, 1
    %p43 = por %p41, %p42
    %p45 = scmp.ne.s32.totalorder %s28, %s44
    %p46 = scmp.eq.s32.totalorder %s20, 0
    %p47 = por %p45, %p46
    %s49 = sadd.s32 %s48, 1
    %p52 = scmp.eq.s32.totalorder %s14, 1
    %p53 = scmp.ne.s32.totalorder %s48, %s50
    %p54 = scmp.eq.s32.totalorder %s14, 0
    %p55 = por %p53, %p54
    %p56 = scmp.ne.s32.totalorder %s48, %s50
    %p57 = scmp.eq.s32.totalorder %s19, 1
    %p58 = por %p56, %p57
    %p59 = scmp.ne.s32.totalorder %s50, %s51
    %p60 = scmp.eq.s32.totalorder %s19, 0
    %p61 = por %p59, %p60
    %p62 = scmp.ne.s32.totalorder %s50, %s51
    %p63 = scmp.eq.s32.totalorder %s20, 1
    %p64 = por %p62, %p63
    %p66 = scmp.ne.s32.totalorder %s51, %s65
    %p67 = scmp.eq.s32.totalorder %s20, 0
    %p68 = por %p66, %p67
    %s70 = sadd.s32 %s69, 1
    %p73 = scmp.eq.s32.totalorder %s14, 1
    %p74 = scmp.ne.s32.totalorder %s69, %s71
    %p75 = scmp.eq.s32.totalorder %s14, 0
    %p76 = por %p74, %p75
    %p77 = scmp.ne.s32.totalorder %s69, %s71
    %p78 = scmp.eq.s32.totalorder %s19, 1
    %p79 = por %p77, %p78
    %p80 = scmp.ne.s32.totalorder %s71, %s72
    %p81 = scmp.eq.s32.totalorder %s19, 0
    %p82 = por %p80, %p81
    %p83 = scmp.ne.s32.totalorder %s71, %s72
    %p84 = scmp.eq.s32.totalorder %s20, 1
    %p85 = por %p83, %p84
    %p87 = scmp.ne.s32.totalorder %s72, %s86
    %p88 = scmp.eq.s32.totalorder %s20, 0
    %p89 = por %p87, %p88
    %s91 = sadd.s32 %s90, 1
    %p94 = scmp.eq.s32.totalorder %s14, 1
    %p95 = scmp.ne.s32.totalorder %s90, %s92
    %p96 = scmp.eq.s32.totalorder %s14, 0
    %p97 = por %p95, %p96
    %p98 = scmp.ne.s32.totalorder %s90, %s92
    %p99 = scmp.eq.s32.totalorder %s19, 1
    %p100 = por %p98, %p99
    %p101 = scmp.ne.s32.totalorder %s92, %s93
    %p102 = scmp.eq.s32.totalorder %s19, 0
    %p103 = por %p101, %p102
    %p104 = scmp.ne.s32.totalorder %s92, %s93
    %p105 = scmp.eq.s32.totalorder %s20, 1
    %p106 = por %p104, %p105
    %p108 = scmp.ne.s32.totalorder %s93, %s107
    %p109 = scmp.eq.s32.totalorder %s20, 0
    %p110 = por %p108, %p109
    %s112 = sadd.s32 %s111, 1
    %p115 = scmp.eq.s32.totalorder %s14, 1
    %p116 = scmp.ne.s32.totalorder %s111, %s113
    %p117 = scmp.eq.s32.totalorder %s14, 0
    %p118 = por %p116, %p117
    %p119 = scmp.ne.s32.totalorder %s111, %s113
    %p120 = scmp.eq.s32.totalorder %s19, 1
    %p121 = por %p119, %p120
    %p122 = scmp.ne.s32.totalorder %s113, %s114
    %p123 = scmp.eq.s32.totalorder %s19, 0
    %p124 = por %p122, %p123
    %p125 = scmp.ne.s32.totalorder %s113, %s114
    %p126 = scmp.eq.s32.totalorder %s20, 1
    %p127 = por %p125, %p126
    %p129 = scmp.ne.s32.totalorder %s114, %s128
    %p130 = scmp.eq.s32.totalorder %s20, 0
    %p131 = por %p129, %p130
    %s133 = sadd.s32 %s132, 1
    %p136 = scmp.eq.s32.totalorder %s14, 1
    %p137 = scmp.ne.s32.totalorder %s132, %s134
    %p138 = scmp.eq.s32.totalorder %s14, 0
    %p139 = por %p137, %p138
    %p140 = scmp.ne.s32.totalorder %s132, %s134
    %p141 = scmp.eq.s32.totalorder %s19, 1
    %p142 = por %p140, %p141
    %p143 = scmp.ne.s32.totalorder %s134, %s135
    %p144 = scmp.eq.s32.totalorder %s19, 0
    %p145 = por %p143, %p144
    %p146 = scmp.ne.s32.totalorder %s134, %s135
    %p147 = scmp.eq.s32.totalorder %s20, 1
    %p148 = por %p146, %p147
    %p150 = scmp.ne.s32.totalorder %s135, %s149
    %p151 = scmp.eq.s32.totalorder %s20, 0
    %p152 = por %p150, %p151
    %s154 = sadd.s32 %s153, 1
    %p157 = scmp.eq.s32.totalorder %s14, 1
    %p158 = scmp.ne.s32.totalorder %s153, %s155
    %p159 = scmp.eq.s32.totalorder %s14, 0
    %p160 = por %p158, %p159
    %p161 = scmp.ne.s32.totalorder %s153, %s155
    %p162 = scmp.eq.s32.totalorder %s19, 1
    %p163 = por %p161, %p162
    %p164 = scmp.ne.s32.totalorder %s155, %s156
    %p165 = scmp.eq.s32.totalorder %s19, 0
    %p166 = por %p164, %p165
    %p167 = scmp.ne.s32.totalorder %s155, %s156
    %p168 = scmp.eq.s32.totalorder %s20, 1
    %p169 = por %p167, %p168
    %p171 = scmp.ne.s32.totalorder %s156, %s170
    %p172 = scmp.eq.s32.totalorder %s20, 0
    %p173 = por %p171, %p172
    %s175 = sadd.s32 %s174, 1
    %p178 = scmp.eq.s32.totalorder %s14, 1
    %p179 = scmp.ne.s32.totalorder %s174, %s176
    %p180 = scmp.eq.s32.totalorder %s14, 0
    %p181 = por %p179, %p180
    %p182 = scmp.ne.s32.totalorder %s174, %s176
    %p183 = scmp.eq.s32.totalorder %s19, 1
    %p184 = por %p182, %p183
    %p185 = scmp.ne.s32.totalorder %s176, %s177
    %p186 = scmp.eq.s32.totalorder %s19, 0
    %p187 = por %p185, %p186
    %p188 = scmp.ne.s32.totalorder %s176, %s177
    %p189 = scmp.eq.s32.totalorder %s20, 1
    %p190 = por %p188, %p189
    %p192 = scmp.ne.s32.totalorder %s177, %s191
    %p193 = scmp.eq.s32.totalorder %s20, 0
    %p194 = por %p192, %p193
    %s195 = ssub.s32 %s14, %s21
    %p196 = scmp.eq.s32.totalorder %s195, 0
    %s198 = sadd.s32 %s197, 1
    %s199 = scalar_select %p196, %s197, %s198
    %p202 = pneg %p196
    %p203 = scmp.eq.s32.totalorder %s14, 1
    %p204 = por %p202, %p203
    %p205 = scmp.ne.s32.totalorder %s197, %s200
    %p206 = scmp.eq.s32.totalorder %s14, 0
    %p207 = por %p205, %p206
    %p208 = scmp.ne.s32.totalorder %s197, %s200
    %p209 = scmp.eq.s32.totalorder %s19, 1
    %p210 = por %p208, %p209
    %p211 = scmp.ne.s32.totalorder %s200, %s201
    %p212 = scmp.eq.s32.totalorder %s19, 0
    %p213 = por %p211, %p212
    %p214 = scmp.ne.s32.totalorder %s200, %s201
    %p215 = scmp.eq.s32.totalorder %s20, 1
    %p216 = por %p214, %p215
    %p218 = scmp.ne.s32.totalorder %s201, %s217
    %p219 = scmp.eq.s32.totalorder %s20, 0
    %p220 = por %p218, %p219
    %p221 = scmp.le.s32.totalorder 1, %s14
    %p222 = scmp.lt.s32.totalorder %s14, 3
    %p223 = pnand %p221, %p222
    %p224 = pneg %p223
    // Predicated region
    $region9: #{block_forward.3} parent=5 // pred_check
      _
    $region10: #{block_forward.3} parent=5 // pred_check_branch
      %226 = sbr.rel (%p223) target = $region12
    $region11: #{block_forward.3} parent=5 // pred_region
      %s227 = ssub.s32 %s14, 1
      // Predicated region
      $region13: #{block_forward.3} parent=11 // pred_check
        %p228 = pneg %p61
      $region14: #{block_forward.3} parent=11 // pred_check_branch
        %230 = sbr.rel (%p228) target = $region16
      $region15: #{block_forward.3} parent=11 // pred_region
        _
      $region16: #{block_forward.3} parent=11 // pred_fallthru
        _
      // Predicated region
      $region17: #{block_forward.3} parent=11 // pred_check
        %p231 = pneg %p82
      $region18: #{block_forward.3} parent=11 // pred_check_branch
        %233 = sbr.rel (%p231) target = $region20
      $region19: #{block_forward.3} parent=11 // pred_region
        _
      $region20: #{block_forward.3} parent=11 // pred_fallthru
        _
      // Predicated region
      $region21: #{block_forward.3} parent=11 // pred_check
        %p234 = pneg %p103
      $region22: #{block_forward.3} parent=11 // pred_check_branch
        %236 = sbr.rel (%p234) target = $region24
      $region23: #{block_forward.3} parent=11 // pred_region
        _
      $region24: #{block_forward.3} parent=11 // pred_fallthru
        _
      // Predicated region
      $region25: #{block_forward.3} parent=11 // pred_check
        %p237 = pneg %p124
      $region26: #{block_forward.3} parent=11 // pred_check_branch
        %239 = sbr.rel (%p237) target = $region28
      $region27: #{block_forward.3} parent=11 // pred_region
        _
      $region28: #{block_forward.3} parent=11 // pred_fallthru
        _
      // Predicated region
      $region29: #{block_forward.3} parent=11 // pred_check
        %p240 = pneg %p145
      $region30: #{block_forward.3} parent=11 // pred_check_branch
        %242 = sbr.rel (%p240) target = $region32
      $region31: #{block_forward.3} parent=11 // pred_region
        _
      $region32: #{block_forward.3} parent=11 // pred_fallthru
        _
      // Predicated region
      $region33: #{block_forward.3} parent=11 // pred_check
        %p243 = pneg %p166
      $region34: #{block_forward.3} parent=11 // pred_check_branch
        %245 = sbr.rel (%p243) target = $region36
      $region35: #{block_forward.3} parent=11 // pred_region
        _
      $region36: #{block_forward.3} parent=11 // pred_fallthru
        _
      // Predicated region
      $region37: #{block_forward.3} parent=11 // pred_check
        %p246 = pneg %p187
      $region38: #{block_forward.3} parent=11 // pred_check_branch
        %248 = sbr.rel (%p246) target = $region40
      $region39: #{block_forward.3} parent=11 // pred_region
        _
      $region40: #{block_forward.3} parent=11 // pred_fallthru
        _
    $region12: #{block_forward.3} parent=5 // pred_fallthru
      _
    %p249 = scmp.lt.s32.totalorder %s14, 2
    // Predicated region
    $region41: #{block_forward.3} parent=5 // pred_check
      %p250 = pneg %p249
    $region42: #{block_forward.3} parent=5 // pred_check_branch
      %252 = sbr.rel (%p250) target = $region44
    $region43: #{block_forward.3} parent=5 // pred_region
      // Predicated region
      $region45: #{block_forward.3} parent=43 // pred_check
        %p253 = pneg %p34
      $region46: #{block_forward.3} parent=43 // pred_check_branch
        %255 = sbr.rel (%p253) target = $region48
      $region47: #{block_forward.3} parent=43 // pred_region
        %s256 = smul.u32 4, %s14
        %p257 = scmp.lt.s32.totalorder %s256, 7
        %s258 = scalar_select %p257, %s256, 7
        %s259 = smul.addr %s258, 4
        %s260 = scalar_lea.vmem %s0, %s259
        %s261 = smul.u32 4, %s14
      $region48: #{block_forward.3} parent=43 // pred_fallthru
        _
    $region44: #{block_forward.3} parent=5 // pred_fallthru
      _
    %p262 = scmp.le.s32.totalorder 1, %s14
    %p263 = scmp.lt.s32.totalorder %s14, 3
    %p264 = pnand %p262, %p263
    %p265 = pneg %p264
    // Predicated region
    $region49: #{block_forward.3} parent=5 // pred_check
      _
    $region50: #{block_forward.3} parent=5 // pred_check_branch
      %267 = sbr.rel (%p264) target = $region52
    $region51: #{block_forward.3} parent=5 // pred_region
      %s268 = ssub.s32 %s14, 1
      %s269 = smul.u32 4, %s19
      %p270 = scmp.lt.s32.totalorder %s269, 7
      %s271 = scalar_select %p270, %s269, 7
      %s272 = smul.addr %s271, 4
      %s273 = scalar_lea.vmem %s0, %s272
      %p274 = pneg %p40
      %p275 = pneg %p37
      %p276 = pneg %p61
      %p277 = pneg %p58
      %p278 = pneg %p82
      %p279 = pneg %p79
      %p280 = pneg %p103
      %p281 = pneg %p100
      %p282 = pneg %p124
      %p283 = pneg %p121
      %p284 = pneg %p145
      %p285 = pneg %p142
      %p286 = pneg %p166
      %p287 = pneg %p163
      %p288 = pneg %p187
      %p289 = pneg %p184
      %p290 = pneg %p213
      %p291 = pneg %p210
      %s292 = smul.u32 4, %s19
      %p293 = scmp.lt.s32.totalorder %s292, 7
      %s294 = scalar_select %p293, %s292, 7
      %s295 = smul.addr %s294, 4
      %s296 = scalar_lea.vmem %s8, %s295
      %s297 = smul.u32 4, %s19
      %p298 = scmp.lt.s32.totalorder %s297, 7
      %s299 = scalar_select %p298, %s297, 7
      %s300 = smul.addr %s299, 4
      %s301 = scalar_lea.vmem %s0, %s300
      %s302 = smul.u32 4, %s19
      %s303 = smul.u32 4, %s19
      %p304 = scmp.lt.s32.totalorder %s303, 7
      %s305 = scalar_select %p304, %s303, 7
      %s306 = smul.addr %s305, 4
      %s307 = scalar_lea.vmem %s8, %s306
      %s308 = smul.u32 4, %s19
      %v310 = vld [vmem:[%s301] sm:$0xf]
      %v311 = vld [vmem:[%s301 + $0x4] sm:$0xf]
      %v312 = vld [vmem:[%s301 + $0x8] sm:$0xf]
      %v313 = vld [vmem:[%s301 + $0xc] sm:$0xf]
      %v314 = vld [vmem:[%s1] sm:$0x1]
      %v315 = vld [vmem:[%s2] sm:$0x1]
      %320 = vst [vmem:[#allocation1] ss:$2 sm:$0xff] %v310
      %s321 = scalar_lea.vmem [#allocation1], 1
      %322 = vst [vmem:[%s321] ss:$2 sm:$0xff] %v311
      %s323 = scalar_lea.vmem [#allocation1], 16
      %324 = vst [vmem:[%s323] ss:$2 sm:$0xff] %v312
      %s325 = scalar_lea.vmem [#allocation1], 17
      %326 = vst [vmem:[%s325] ss:$2 sm:$0xff] %v313
      %v327 = vld.sshfl [vmem:[#allocation1] sm:$0xff pattern:$0x75316420]
      %v328 = vld.sshfl [vmem:[#allocation1 + $0x10] sm:$0xff pattern:$0x75316420]
      %vm331 = vcmask 261120
      %v332 = vsel %vm331, %v327, 0.0
      %333 = vadd.xlane.f32.xlu0 %v332
      %v334 = vpop.xlane.xlu0 %333
      %v335 = vsel %vm331, %v328, 0.0
      %336 = vadd.xlane.f32.xlu0 %v335
      %v337 = vpop.xlane.xlu0 %336
      %v338 = vrcp.pop 32.0
      %v339 = vmul.f32 32.0, %v338
      %v340 = vsub.f32 1.0, %v339
      %v341 = vmul.f32 %v338, %v340
      %v342 = vadd.f32 %v338, %v341
      %vm343 = vweird.f32 %v338
      %v344 = vsel %vm343, %v338, %v342
      %v345 = vmul.f32 %v334, %v344
      %v346 = vmul.f32 %v337, %v344
      %v350 = vunpack.c.l.s4 839922192
      %v351 = vunpack.c.0.s8 %v350
      %v352 = vperm.slane %v345, %v351
      %v354 = vunpack.c.l.s4 1985246804
      %v355 = vunpack.c.0.s8 %v354
      %v356 = vperm.slane %v345, %v355
      %v358 = vunpack.c.l.s4 839922192
      %v359 = vunpack.c.0.s8 %v358
      %v360 = vperm.slane %v346, %v359
      %v362 = vunpack.c.l.s4 1985246804
      %v363 = vunpack.c.0.s8 %v362
      %v364 = vperm.slane %v346, %v363
      %v369 = vsub.f32 %v310, %v352
      %v370 = vsub.f32 %v311, %v356
      %v371 = vsub.f32 %v312, %v360
      %v372 = vsub.f32 %v313, %v364
      %v373 = vmul.f32 %v369, %v369
      %v374 = vmul.f32 %v370, %v370
      %v375 = vmul.f32 %v371, %v371
      %v376 = vmul.f32 %v372, %v372
      %381 = vst [vmem:[#allocation1] ss:$2 sm:$0xff] %v373
      %s382 = scalar_lea.vmem [#allocation1], 1
      %383 = vst [vmem:[%s382] ss:$2 sm:$0xff] %v374
      %s384 = scalar_lea.vmem [#allocation1], 16
      %385 = vst [vmem:[%s384] ss:$2 sm:$0xff] %v375
      %s386 = scalar_lea.vmem [#allocation1], 17
      %387 = vst [vmem:[%s386] ss:$2 sm:$0xff] %v376
      %v388 = vld.sshfl [vmem:[#allocation1] sm:$0xff pattern:$0x75316420]
      %v389 = vld.sshfl [vmem:[#allocation1 + $0x10] sm:$0xff pattern:$0x75316420]
      %v392 = vsel %vm331, %v388, 0.0
      %393 = vadd.xlane.f32.xlu0 %v392
      %v394 = vpop.xlane.xlu0 %393
      %v395 = vsel %vm331, %v389, 0.0
      %396 = vadd.xlane.f32.xlu0 %v395
      %v397 = vpop.xlane.xlu0 %396
      %v398 = vmul.f32 %v394, %v344
      %v399 = vmul.f32 %v397, %v344
      %v400 = vadd.f32 %v398, 1e-05
      %v401 = vadd.f32 %v399, 1e-05
      %v402 = vrsqrt.pop %v400
      %v403 = vmul.f32 %v402, %v400
      %v404 = vmul.f32 %v403, %v402
      %v405 = vmul.f32 0.5, %v404
      %v406 = vsub.f32 1.5, %v405
      %v407 = vmul.f32 %v402, %v406
      %vm408 = vweird.f32 %v400
      %vm409 = vweird.f32 %v402
      %vm410 = vmor %vm408, %vm409
      %v411 = vsel %vm410, %v402, %v407
      %v412 = vrsqrt.pop %v401
      %v413 = vmul.f32 %v412, %v401
      %v414 = vmul.f32 %v413, %v412
      %v415 = vmul.f32 0.5, %v414
      %v416 = vsub.f32 1.5, %v415
      %v417 = vmul.f32 %v412, %v416
      %vm418 = vweird.f32 %v401
      %vm419 = vweird.f32 %v412
      %vm420 = vmor %vm418, %vm419
      %v421 = vsel %vm420, %v412, %v417
      %v425 = vunpack.c.l.s4 839922192
      %v426 = vunpack.c.0.s8 %v425
      %v427 = vperm.slane %v411, %v426
      %v429 = vunpack.c.l.s4 1985246804
      %v430 = vunpack.c.0.s8 %v429
      %v431 = vperm.slane %v411, %v430
      %v433 = vunpack.c.l.s4 839922192
      %v434 = vunpack.c.0.s8 %v433
      %v435 = vperm.slane %v421, %v434
      %v437 = vunpack.c.l.s4 1985246804
      %v438 = vunpack.c.0.s8 %v437
      %v439 = vperm.slane %v421, %v438
      %v444 = vmul.f32 %v369, %v427
      %v445 = vmul.f32 %v370, %v431
      %v446 = vmul.f32 %v371, %v435
      %v447 = vmul.f32 %v372, %v439
      %v449 = vperm.slane %v314, 0
      %v451 = vrot.slane %v449, 4
      %v453 = vmul.f32 %v444, %v449
      %v454 = vmul.f32 %v445, %v451
      %v455 = vmul.f32 %v446, %v449
      %v456 = vmul.f32 %v447, %v451
      %v458 = vperm.slane %v315, 0
      %v460 = vrot.slane %v458, 4
      %v462 = vadd.f32 %v453, %v458
      %v463 = vadd.f32 %v454, %v460
      %v464 = vadd.f32 %v455, %v458
      %v465 = vadd.f32 %v456, %v460
      %470 = vst [vmem:[#allocation1] ss:$2 sm:$0xff] %v462
      %s471 = scalar_lea.vmem [#allocation1], 1
      %472 = vst [vmem:[%s471] ss:$2 sm:$0xff] %v463
      %s473 = scalar_lea.vmem [#allocation1], 16
      %474 = vst [vmem:[%s473] ss:$2 sm:$0xff] %v464
      %s475 = scalar_lea.vmem [#allocation1], 17
      %476 = vst [vmem:[%s475] ss:$2 sm:$0xff] %v465
      %v477 = vld.sshfl [vmem:[#allocation1] sm:$0xff pattern:$0x75316420]
      %v478 = vld.sshfl [vmem:[#allocation1 + $0x10] sm:$0xff pattern:$0x75316420]
      %v481 = vpack.c.bf16 %v478, %v477
      %v482 = vld [vmem:[%s3] sm:$0xf]
      %v483 = vld [vmem:[%s3 + $0x4] sm:$0xf]
      %v484 = vld [vmem:[%s3 + $0x8] sm:$0xf]
      %v485 = vld [vmem:[%s3 + $0xc] sm:$0xf]
      %v490 = vunpack.c.l.b16 %v482
      %v491 = vunpack.c.l.b16 %v483
      %v492 = vunpack.c.l.b16 %v484
      %v493 = vunpack.c.l.b16 %v485
      %v494 = vpack.c.b16 %v491, %v490
      %v495 = vpack.c.b16 %v493, %v492
      %v499 = vsel %vm331, %v481, 0
      %501 = vmatpush.bf16.msra.mxu0 0
      %502 = vmatpush.bf16.msra.mxu0 0
      %503 = vmatpush.bf16.msra.mxu0 0
      %504 = vmatpush.bf16.msra.mxu0 0
      %505 = vmatpush.bf16.msra.mxu0 0
      %506 = vmatpush.bf16.msra.mxu0 0
      %507 = vmatpush.bf16.msra.mxu0 %v495
      %508 = vmatpush.bf16.msra.mxu0 %v494
      %509 = vmatmul.bf16.gmra.mxu0 %v499
      %v510 = vpop.f32.mrf.mxu0
      %v511 = vadd.f32 0.0, %v510
      %v512 = vpop.f32.mrf.mxu0
      %v513 = vadd.f32 0.0, %v512
      %514 = vdwg.mxu0
      %v517 = vrot.slane %v511, 4
      %v518 = vrot.slane %v513, 4
      %v521 = vpack.c.bf16 %v511, %v511
      %v522 = vpack.c.bf16 %v517, %v517
      %v523 = vpack.c.bf16 %v513, %v513
      %v524 = vpack.c.bf16 %v518, %v518
      %vm525 = vcmask 779264
      %526 = vst.msk [vmem:[#allocation2] sm:$0x3] %vm525, %v521
      %527 = vst.msk [vmem:[#allocation2 + $0x2] sm:$0x3] %vm525, %v522
      %528 = vst.msk [vmem:[#allocation2 + $0x4] sm:$0x3] %vm525, %v523
      %529 = vst.msk [vmem:[#allocation2 + $0x6] sm:$0x3] %vm525, %v524
      %v530 = vld [vmem:[#allocation2] sm:$0x3]
      %v531 = vld [vmem:[#allocation2 + $0x2] sm:$0x3]
      %v532 = vld [vmem:[#allocation2 + $0x4] sm:$0x3]
      %v533 = vld [vmem:[#allocation2 + $0x6] sm:$0x3]
      %535 = vst [vmem:[#allocation1] ss:$4 sm:$0xff] %v530
      %v536 = vld.sshfl [vmem:[#allocation1] sm:$0xff pattern:$0x73625140]
      %538 = vrot.lane.b32.xlu0 %v536, 96
      %v539 = vpop.permute.xlu0 %538
      %vm540 = vcmask 64512
      %v541 = vsel %vm540, %v530, 0
      %v544 = vsel %vm540, %v539, 0
      %546 = vmatpush.bf16.xpose.msra.mxu0 0
      %547 = vmatpush.bf16.xpose.msra.mxu0 0
      %548 = vmatpush.bf16.xpose.msra.mxu0 0
      %549 = vmatpush.bf16.xpose.msra.mxu0 0
      %550 = vmatpush.bf16.xpose.msra.mxu0 0
      %551 = vmatpush.bf16.xpose.msra.mxu0 0
      %552 = vmatpush.bf16.xpose.msra.mxu0 0
      %553 = vmatpush.bf16.xpose.msra.mxu0 %v544
      %554 = vmatmul.bf16.gmra.mxu0 %v541
      %v555 = vpop.f32.mrf.mxu0
      %v556 = vadd.f32 0.0, %v555
      %v557 = vpop.f32.mrf.mxu0
      %558 = vdwg.mxu0
      %560 = vst [vmem:[#allocation1] ss:$4 sm:$0xff] %v531
      %v561 = vld.sshfl [vmem:[#allocation1] sm:$0xff pattern:$0x73625140]
      %563 = vrot.lane.b32.xlu0 %v561, 96
      %v564 = vpop.permute.xlu0 %563
      %v565 = vsel %vm540, %v531, 0
      %v568 = vsel %vm540, %v564, 0
      %570 = vmatpush.bf16.xpose.msra.mxu0 0
      %571 = vmatpush.bf16.xpose.msra.mxu0 0
      %572 = vmatpush.bf16.xpose.msra.mxu0 0
      %573 = vmatpush.bf16.xpose.msra.mxu0 0
      %574 = vmatpush.bf16.xpose.msra.mxu0 0
      %575 = vmatpush.bf16.xpose.msra.mxu0 0
      %576 = vmatpush.bf16.xpose.msra.mxu0 0
      %577 = vmatpush.bf16.xpose.msra.mxu0 %v568
      %578 = vmatmul.bf16.gmra.mxu0 %v565
      %v579 = vpop.f32.mrf.mxu0
      %v580 = vadd.f32 0.0, %v579
      %v581 = vpop.f32.mrf.mxu0
      %582 = vdwg.mxu0
      %584 = vst [vmem:[#allocation1] ss:$4 sm:$0xff] %v532
      %v585 = vld.sshfl [vmem:[#allocation1] sm:$0xff pattern:$0x73625140]
      %587 = vrot.lane.b32.xlu0 %v585, 96
      %v588 = vpop.permute.xlu0 %587
      %v589 = vsel %vm540, %v532, 0
      %v592 = vsel %vm540, %v588, 0
      %594 = vmatpush.bf16.xpose.msra.mxu0 0
      %595 = vmatpush.bf16.xpose.msra.mxu0 0
      %596 = vmatpush.bf16.xpose.msra.mxu0 0
      %597 = vmatpush.bf16.xpose.msra.mxu0 0
      %598 = vmatpush.bf16.xpose.msra.mxu0 0
      %599 = vmatpush.bf16.xpose.msra.mxu0 0
      %600 = vmatpush.bf16.xpose.msra.mxu0 0
      %601 = vmatpush.bf16.xpose.msra.mxu0 %v592
      %602 = vmatmul.bf16.gmra.mxu0 %v589
      %v603 = vpop.f32.mrf.mxu0
      %v604 = vadd.f32 0.0, %v603
      %v605 = vpop.f32.mrf.mxu0
      %606 = vdwg.mxu0
      %608 = vst [vmem:[#allocation1] ss:$4 sm:$0xff] %v533
      %v609 = vld.sshfl [vmem:[#allocation1] sm:$0xff pattern:$0x73625140]
      %611 = vrot.lane.b32.xlu0 %v609, 96
      %v612 = vpop.permute.xlu0 %611
      %v613 = vsel %vm540, %v533, 0
      %v616 = vsel %vm540, %v612, 0
      %618 = vmatpush.bf16.xpose.msra.mxu0 0
      %619 = vmatpush.bf16.xpose.msra.mxu0 0
      %620 = vmatpush.bf16.xpose.msra.mxu0 0
      %621 = vmatpush.bf16.xpose.msra.mxu0 0
      %622 = vmatpush.bf16.xpose.msra.mxu0 0
      %623 = vmatpush.bf16.xpose.msra.mxu0 0
      %624 = vmatpush.bf16.xpose.msra.mxu0 0
      %625 = vmatpush.bf16.xpose.msra.mxu0 %v616
      %626 = vmatmul.bf16.gmra.mxu0 %v613
      %v627 = vpop.f32.mrf.mxu0
      %v628 = vadd.f32 0.0, %v627
      %v629 = vpop.f32.mrf.mxu0
      %630 = vdwg.mxu0
      %vm631 = vcmask 27648
      %v632 = vsel %vm631, %v556, -inf
      %633 = vmax.xlane.f32.xlu0 %v632
      %v634 = vpop.xlane.xlu0 %633
      %v635 = vsel %vm631, %v580, -inf
      %636 = vmax.xlane.f32.xlu0 %v635
      %v637 = vpop.xlane.xlu0 %636
      %v638 = vsel %vm631, %v604, -inf
      %639 = vmax.xlane.f32.xlu0 %v638
      %v640 = vpop.xlane.xlu0 %639
      %v641 = vsel %vm631, %v628, -inf
      %642 = vmax.xlane.f32.xlu0 %v641
      %v643 = vpop.xlane.xlu0 %642
      %v644 = vsub.f32 %v556, %v634
      %v645 = vsub.f32 %v580, %v637
      %v646 = vsub.f32 %v604, %v640
      %v647 = vsub.f32 %v628, %v643
      %v648 = vmul.f32 %v644, 1.442695
      %v649 = vpow.pop %v648
      %v650 = vmul.f32 %v645, 1.442695
      %v651 = vpow.pop %v650
      %v652 = vmul.f32 %v646, 1.442695
      %v653 = vpow.pop %v652
      %v654 = vmul.f32 %v647, 1.442695
      %v655 = vpow.pop %v654
      %v656 = vsel %vm631, %v649, 0.0
      %657 = vadd.xlane.f32.xlu0 %v656
      %v658 = vpop.xlane.xlu0 %657
      %v659 = vsel %vm631, %v651, 0.0
      %660 = vadd.xlane.f32.xlu0 %v659
      %v661 = vpop.xlane.xlu0 %660
      %v662 = vsel %vm631, %v653, 0.0
      %663 = vadd.xlane.f32.xlu0 %v662
      %v664 = vpop.xlane.xlu0 %663
      %v665 = vsel %vm631, %v655, 0.0
      %666 = vadd.xlane.f32.xlu0 %v665
      %v667 = vpop.xlane.xlu0 %666
      %v668 = vrcp.pop %v658
      %v669 = vmul.f32 %v658, %v668
      %v670 = vsub.f32 1.0, %v669
      %v671 = vmul.f32 %v668, %v670
      %v672 = vadd.f32 %v668, %v671
      %vm673 = vweird.f32 %v658
      %vm674 = vweird.f32 %v668
      %vm675 = vmor %vm673, %vm674
      %v676 = vsel %vm675, %v668, %v672
      %v677 = vand.u32 2147483647, %v658
      %vm678 = vcmp.eq.f32.partialorder %v677, 8.507059e+37
      %v679 = vand.u32 %v658, 2147483648
      %v680 = vor.u32 1.1754944e-38, %v679
      %v681 = vsel %vm678, %v680, %v676
      %v682 = vmul.f32 %v649, %v681
      %v683 = vrcp.pop %v661
      %v684 = vmul.f32 %v661, %v683
      %v685 = vsub.f32 1.0, %v684
      %v686 = vmul.f32 %v683, %v685
      %v687 = vadd.f32 %v683, %v686
      %vm688 = vweird.f32 %v661
      %vm689 = vweird.f32 %v683
      %vm690 = vmor %vm688, %vm689
      %v691 = vsel %vm690, %v683, %v687
      %v692 = vand.u32 2147483647, %v661
      %vm693 = vcmp.eq.f32.partialorder %v692, 8.507059e+37
      %v694 = vand.u32 %v661, 2147483648
      %v695 = vor.u32 1.1754944e-38, %v694
      %v696 = vsel %vm693, %v695, %v691
      %v697 = vmul.f32 %v651, %v696
      %v698 = vrcp.pop %v664
      %v699 = vmul.f32 %v664, %v698
      %v700 = vsub.f32 1.0, %v699
      %v701 = vmul.f32 %v698, %v700
      %v702 = vadd.f32 %v698, %v701
      %vm703 = vweird.f32 %v664
      %vm704 = vweird.f32 %v698
      %vm705 = vmor %vm703, %vm704
      %v706 = vsel %vm705, %v698, %v702
      %v707 = vand.u32 2147483647, %v664
      %vm708 = vcmp.eq.f32.partialorder %v707, 8.507059e+37
      %v709 = vand.u32 %v664, 2147483648
      %v710 = vor.u32 1.1754944e-38, %v709
      %v711 = vsel %vm708, %v710, %v706
      %v712 = vmul.f32 %v653, %v711
      %v713 = vrcp.pop %v667
      %v714 = vmul.f32 %v667, %v713
      %v715 = vsub.f32 1.0, %v714
      %v716 = vmul.f32 %v713, %v715
      %v717 = vadd.f32 %v713, %v716
      %vm718 = vweird.f32 %v667
      %vm719 = vweird.f32 %v713
      %vm720 = vmor %vm718, %vm719
      %v721 = vsel %vm720, %v713, %v717
      %v722 = vand.u32 2147483647, %v667
      %vm723 = vcmp.eq.f32.partialorder %v722, 8.507059e+37
      %v724 = vand.u32 %v667, 2147483648
      %v725 = vor.u32 1.1754944e-38, %v724
      %v726 = vsel %vm723, %v725, %v721
      %v727 = vmul.f32 %v655, %v726
      %v728 = vpack.c.bf16 %v682, %v682
      %v729 = vpack.c.bf16 %v697, %v697
      %v730 = vpack.c.bf16 %v712, %v712
      %v731 = vpack.c.bf16 %v727, %v727
      %732 = vst [vmem:[#allocation1] ss:$4 sm:$0xff] %v530
      %v733 = vld.sshfl [vmem:[#allocation1] sm:$0xff pattern:$0x73625140]
      %735 = vrot.lane.b32.xlu0 %v733, 64
      %v736 = vpop.permute.xlu0 %735
      %vm737 = vcmask 31744
      %v739 = vsel %vm737, %v728, 0
      %vm741 = vcmask 1041408
      %v743 = vsel %vm741, %v736, 0
      %745 = vmatpush.bf16.msra.mxu0 0
      %746 = vmatpush.bf16.msra.mxu0 0
      %747 = vmatpush.bf16.msra.mxu0 0
      %748 = vmatpush.bf16.msra.mxu0 0
      %749 = vmatpush.bf16.msra.mxu0 0
      %750 = vmatpush.bf16.msra.mxu0 0
      %751 = vmatpush.bf16.msra.mxu0 0
      %752 = vmatpush.bf16.msra.mxu0 %v743
      %753 = vmatmul.bf16.gmra.mxu0 %v739
      %v754 = vpop.f32.mrf.mxu0
      %v755 = vadd.f32 0.0, %v754
      %v756 = vpop.f32.mrf.mxu0
      %757 = vdwg.mxu0
      %758 = vst [vmem:[#allocation1] ss:$4 sm:$0xff] %v531
      %v759 = vld.sshfl [vmem:[#allocation1] sm:$0xff pattern:$0x73625140]
      %761 = vrot.lane.b32.xlu0 %v759, 64
      %v762 = vpop.permute.xlu0 %761
      %v764 = vsel %vm737, %v729, 0
      %v767 = vsel %vm741, %v762, 0
      %769 = vmatpush.bf16.msra.mxu0 0
      %770 = vmatpush.bf16.msra.mxu0 0
      %771 = vmatpush.bf16.msra.mxu0 0
      %772 = vmatpush.bf16.msra.mxu0 0
      %773 = vmatpush.bf16.msra.mxu0 0
      %774 = vmatpush.bf16.msra.mxu0 0
      %775 = vmatpush.bf16.msra.mxu0 0
      %776 = vmatpush.bf16.msra.mxu0 %v767
      %777 = vmatmul.bf16.gmra.mxu0 %v764
      %v778 = vpop.f32.mrf.mxu0
      %v779 = vadd.f32 0.0, %v778
      %v780 = vpop.f32.mrf.mxu0
      %781 = vdwg.mxu0
      %782 = vst [vmem:[#allocation1] ss:$4 sm:$0xff] %v532
      %v783 = vld.sshfl [vmem:[#allocation1] sm:$0xff pattern:$0x73625140]
      %785 = vrot.lane.b32.xlu0 %v783, 64
      %v786 = vpop.permute.xlu0 %785
      %v788 = vsel %vm737, %v730, 0
      %v791 = vsel %vm741, %v786, 0
      %793 = vmatpush.bf16.msra.mxu0 0
      %794 = vmatpush.bf16.msra.mxu0 0
      %795 = vmatpush.bf16.msra.mxu0 0
      %796 = vmatpush.bf16.msra.mxu0 0
      %797 = vmatpush.bf16.msra.mxu0 0
      %798 = vmatpush.bf16.msra.mxu0 0
      %799 = vmatpush.bf16.msra.mxu0 0
      %800 = vmatpush.bf16.msra.mxu0 %v791
      %801 = vmatmul.bf16.gmra.mxu0 %v788
      %v802 = vpop.f32.mrf.mxu0
      %v803 = vadd.f32 0.0, %v802
      %v804 = vpop.f32.mrf.mxu0
      %805 = vdwg.mxu0
      %806 = vst [vmem:[#allocation1] ss:$4 sm:$0xff] %v533
      %v807 = vld.sshfl [vmem:[#allocation1] sm:$0xff pattern:$0x73625140]
      %809 = vrot.lane.b32.xlu0 %v807, 64
      %v810 = vpop.permute.xlu0 %809
      %v812 = vsel %vm737, %v731, 0
      %v815 = vsel %vm741, %v810, 0
      %817 = vmatpush.bf16.msra.mxu0 0
      %818 = vmatpush.bf16.msra.mxu0 0
      %819 = vmatpush.bf16.msra.mxu0 0
      %820 = vmatpush.bf16.msra.mxu0 0
      %821 = vmatpush.bf16.msra.mxu0 0
      %822 = vmatpush.bf16.msra.mxu0 0
      %823 = vmatpush.bf16.msra.mxu0 0
      %824 = vmatpush.bf16.msra.mxu0 %v815
      %825 = vmatmul.bf16.gmra.mxu0 %v812
      %v826 = vpop.f32.mrf.mxu0
      %v827 = vadd.f32 0.0, %v826
      %v828 = vpop.f32.mrf.mxu0
      %829 = vdwg.mxu0
      %834 = vst [vmem:[#allocation1] ss:$2 sm:$0xff] %v755
      %s835 = scalar_lea.vmem [#allocation1], 1
      %836 = vst [vmem:[%s835] ss:$2 sm:$0xff] %v779
      %s837 = scalar_lea.vmem [#allocation1], 16
      %838 = vst [vmem:[%s837] ss:$2 sm:$0xff] %v803
      %s839 = scalar_lea.vmem [#allocation1], 17
      %840 = vst [vmem:[%s839] ss:$2 sm:$0xff] %v827
      %v841 = vld.sshfl [vmem:[#allocation1] sm:$0xff pattern:$0x75316420]
      %v842 = vld.sshfl [vmem:[#allocation1 + $0x10] sm:$0xff pattern:$0x75316420]
      %v845 = vpack.c.bf16 %v842, %v841
      %v846 = vld [vmem:[%s4] sm:$0xf]
      %v847 = vld [vmem:[#allocation2] sm:$0x3]
      %v848 = vld [vmem:[#allocation2 + $0x2] sm:$0x3]
      %v849 = vld [vmem:[#allocation2 + $0x4] sm:$0x3]
      %v850 = vld [vmem:[#allocation2 + $0x6] sm:$0x3]
      %852 = vst [vmem:[#allocation1] ss:$4 sm:$0xff] %v847
      %v853 = vld.sshfl [vmem:[#allocation1] sm:$0xff pattern:$0x73625140]
      %855 = vrot.lane.b32.xlu0 %v853, 120
      %v856 = vpop.permute.xlu0 %855
      %857 = vst [vmem:[#allocation1] ss:$4 sm:$0xff] %v847
      %v858 = vld.sshfl [vmem:[#allocation1] sm:$0xff pattern:$0x73625140]
      %860 = vrot.lane.b32.xlu0 %v858, 88
      %v861 = vpop.permute.xlu0 %860
      %v863 = vsel %vm540, %v856, 0
      %v866 = vsel %vm540, %v861, 0
      %868 = vmatpush.bf16.xpose.msra.mxu0 0
      %869 = vmatpush.bf16.xpose.msra.mxu0 0
      %870 = vmatpush.bf16.xpose.msra.mxu0 0
      %871 = vmatpush.bf16.xpose.msra.mxu0 0
      %872 = vmatpush.bf16.xpose.msra.mxu0 0
      %873 = vmatpush.bf16.xpose.msra.mxu0 0
      %874 = vmatpush.bf16.xpose.msra.mxu0 0
      %875 = vmatpush.bf16.xpose.msra.mxu0 %v866
      %876 = vmatmul.bf16.gmra.mxu0 %v863
      %v877 = vpop.f32.mrf.mxu0
      %v878 = vadd.f32 0.0, %v877
      %v879 = vpop.f32.mrf.mxu0
      %880 = vdwg.mxu0
      %882 = vst [vmem:[#allocation1] ss:$4 sm:$0xff] %v848
      %v883 = vld.sshfl [vmem:[#allocation1] sm:$0xff pattern:$0x73625140]
      %885 = vrot.lane.b32.xlu0 %v883, 120
      %v886 = vpop.permute.xlu0 %885
      %887 = vst [vmem:[#allocation1] ss:$4 sm:$0xff] %v848
      %v888 = vld.sshfl [vmem:[#allocation1] sm:$0xff pattern:$0x73625140]
      %890 = vrot.lane.b32.xlu0 %v888, 88
      %v891 = vpop.permute.xlu0 %890
      %v893 = vsel %vm540, %v886, 0
      %v896 = vsel %vm540, %v891, 0
      %898 = vmatpush.bf16.xpose.msra.mxu0 0
      %899 = vmatpush.bf16.xpose.msra.mxu0 0
      %900 = vmatpush.bf16.xpose.msra.mxu0 0
      %901 = vmatpush.bf16.xpose.msra.mxu0 0
      %902 = vmatpush.bf16.xpose.msra.mxu0 0
      %903 = vmatpush.bf16.xpose.msra.mxu0 0
      %904 = vmatpush.bf16.xpose.msra.mxu0 0
      %905 = vmatpush.bf16.xpose.msra.mxu0 %v896
      %906 = vmatmul.bf16.gmra.mxu0 %v893
      %v907 = vpop.f32.mrf.mxu0
      %v908 = vadd.f32 0.0, %v907
      %v909 = vpop.f32.mrf.mxu0
      %910 = vdwg.mxu0
      %912 = vst [vmem:[#allocation1] ss:$4 sm:$0xff] %v849
      %v913 = vld.sshfl [vmem:[#allocation1] sm:$0xff pattern:$0x73625140]
      %915 = vrot.lane.b32.xlu0 %v913, 120
      %v916 = vpop.permute.xlu0 %915
      %917 = vst [vmem:[#allocation1] ss:$4 sm:$0xff] %v849
      %v918 = vld.sshfl [vmem:[#allocation1] sm:$0xff pattern:$0x73625140]
      %920 = vrot.lane.b32.xlu0 %v918, 88
      %v921 = vpop.permute.xlu0 %920
      %v923 = vsel %vm540, %v916, 0
      %v926 = vsel %vm540, %v921, 0
      %928 = vmatpush.bf16.xpose.msra.mxu0 0
      %929 = vmatpush.bf16.xpose.msra.mxu0 0
      %930 = vmatpush.bf16.xpose.msra.mxu0 0
      %931 = vmatpush.bf16.xpose.msra.mxu0 0
      %932 = vmatpush.bf16.xpose.msra.mxu0 0
      %933 = vmatpush.bf16.xpose.msra.mxu0 0
      %934 = vmatpush.bf16.xpose.msra.mxu0 0
      %935 = vmatpush.bf16.xpose.msra.mxu0 %v926
      %936 = vmatmul.bf16.gmra.mxu0 %v923
      %v937 = vpop.f32.mrf.mxu0
      %v938 = vadd.f32 0.0, %v937
      %v939 = vpop.f32.mrf.mxu0
      %940 = vdwg.mxu0
      %942 = vst [vmem:[#allocation1] ss:$4 sm:$0xff] %v850
      %v943 = vld.sshfl [vmem:[#allocation1] sm:$0xff pattern:$0x73625140]
      %945 = vrot.lane.b32.xlu0 %v943, 120
      %v946 = vpop.permute.xlu0 %945
      %947 = vst [vmem:[#allocation1] ss:$4 sm:$0xff] %v850
      %v948 = vld.sshfl [vmem:[#allocation1] sm:$0xff pattern:$0x73625140]
      %950 = vrot.lane.b32.xlu0 %v948, 88
      %v951 = vpop.permute.xlu0 %950
      %v953 = vsel %vm540, %v946, 0
      %v956 = vsel %vm540, %v951, 0
      %958 = vmatpush.bf16.xpose.msra.mxu0 0
      %959 = vmatpush.bf16.xpose.msra.mxu0 0
      %960 = vmatpush.bf16.xpose.msra.mxu0 0
      %961 = vmatpush.bf16.xpose.msra.mxu0 0
      %962 = vmatpush.bf16.xpose.msra.mxu0 0
      %963 = vmatpush.bf16.xpose.msra.mxu0 0
      %964 = vmatpush.bf16.xpose.msra.mxu0 0
      %965 = vmatpush.bf16.xpose.msra.mxu0 %v956
      %966 = vmatmul.bf16.gmra.mxu0 %v953
      %v967 = vpop.f32.mrf.mxu0
      %v968 = vadd.f32 0.0, %v967
      %v969 = vpop.f32.mrf.mxu0
      %970 = vdwg.mxu0
      %v971 = vsel %vm631, %v878, -inf
      %972 = vmax.xlane.f32.xlu0 %v971
      %v973 = vpop.xlane.xlu0 %972
      %v974 = vsel %vm631, %v908, -inf
      %975 = vmax.xlane.f32.xlu0 %v974
      %v976 = vpop.xlane.xlu0 %975
      %v977 = vsel %vm631, %v938, -inf
      %978 = vmax.xlane.f32.xlu0 %v977
      %v979 = vpop.xlane.xlu0 %978
      %v980 = vsel %vm631, %v968, -inf
      %981 = vmax.xlane.f32.xlu0 %v980
      %v982 = vpop.xlane.xlu0 %981
      %v983 = vsub.f32 %v878, %v973
      %v984 = vsub.f32 %v908, %v976
      %v985 = vsub.f32 %v938, %v979
      %v986 = vsub.f32 %v968, %v982
      %v987 = vmul.f32 %v983, 1.442695
      %v988 = vpow.pop %v987
      %v989 = vmul.f32 %v984, 1.442695
      %v990 = vpow.pop %v989
      %v991 = vmul.f32 %v985, 1.442695
      %v992 = vpow.pop %v991
      %v993 = vmul.f32 %v986, 1.442695
      %v994 = vpow.pop %v993
      %v995 = vsel %vm631, %v988, 0.0
      %996 = vadd.xlane.f32.xlu0 %v995
      %v997 = vpop.xlane.xlu0 %996
      %v998 = vsel %vm631, %v990, 0.0
      %999 = vadd.xlane.f32.xlu0 %v998
      %v1000 = vpop.xlane.xlu0 %999
      %v1001 = vsel %vm631, %v992, 0.0
      %1002 = vadd.xlane.f32.xlu0 %v1001
      %v1003 = vpop.xlane.xlu0 %1002
      %v1004 = vsel %vm631, %v994, 0.0
      %1005 = vadd.xlane.f32.xlu0 %v1004
      %v1006 = vpop.xlane.xlu0 %1005
      %v1007 = vrcp.pop %v997
      %v1008 = vmul.f32 %v997, %v1007
      %v1009 = vsub.f32 1.0, %v1008
      %v1010 = vmul.f32 %v1007, %v1009
      %v1011 = vadd.f32 %v1007, %v1010
      %vm1012 = vweird.f32 %v997
      %vm1013 = vweird.f32 %v1007
      %vm1014 = vmor %vm1012, %vm1013
      %v1015 = vsel %vm1014, %v1007, %v1011
      %v1016 = vand.u32 2147483647, %v997
      %vm1017 = vcmp.eq.f32.partialorder %v1016, 8.507059e+37
      %v1018 = vand.u32 %v997, 2147483648
      %v1019 = vor.u32 1.1754944e-38, %v1018
      %v1020 = vsel %vm1017, %v1019, %v1015
      %v1021 = vmul.f32 %v988, %v1020
      %v1022 = vrcp.pop %v1000
      %v1023 = vmul.f32 %v1000, %v1022
      %v1024 = vsub.f32 1.0, %v1023
      %v1025 = vmul.f32 %v1022, %v1024
      %v1026 = vadd.f32 %v1022, %v1025
      %vm1027 = vweird.f32 %v1000
      %vm1028 = vweird.f32 %v1022
      %vm1029 = vmor %vm1027, %vm1028
      %v1030 = vsel %vm1029, %v1022, %v1026
      %v1031 = vand.u32 2147483647, %v1000
      %vm1032 = vcmp.eq.f32.partialorder %v1031, 8.507059e+37
      %v1033 = vand.u32 %v1000, 2147483648
      %v1034 = vor.u32 1.1754944e-38, %v1033
      %v1035 = vsel %vm1032, %v1034, %v1030
      %v1036 = vmul.f32 %v990, %v1035
      %v1037 = vrcp.pop %v1003
      %v1038 = vmul.f32 %v1003, %v1037
      %v1039 = vsub.f32 1.0, %v1038
      %v1040 = vmul.f32 %v1037, %v1039
      %v1041 = vadd.f32 %v1037, %v1040
      %vm1042 = vweird.f32 %v1003
      %vm1043 = vweird.f32 %v1037
      %vm1044 = vmor %vm1042, %vm1043
      %v1045 = vsel %vm1044, %v1037, %v1041
      %v1046 = vand.u32 2147483647, %v1003
      %vm1047 = vcmp.eq.f32.partialorder %v1046, 8.507059e+37
      %v1048 = vand.u32 %v1003, 2147483648
      %v1049 = vor.u32 1.1754944e-38, %v1048
      %v1050 = vsel %vm1047, %v1049, %v1045
      %v1051 = vmul.f32 %v992, %v1050
      %v1052 = vrcp.pop %v1006
      %v1053 = vmul.f32 %v1006, %v1052
      %v1054 = vsub.f32 1.0, %v1053
      %v1055 = vmul.f32 %v1052, %v1054
      %v1056 = vadd.f32 %v1052, %v1055
      %vm1057 = vweird.f32 %v1006
      %vm1058 = vweird.f32 %v1052
      %vm1059 = vmor %vm1057, %vm1058
      %v1060 = vsel %vm1059, %v1052, %v1056
      %v1061 = vand.u32 2147483647, %v1006
      %vm1062 = vcmp.eq.f32.partialorder %v1061, 8.507059e+37
      %v1063 = vand.u32 %v1006, 2147483648
      %v1064 = vor.u32 1.1754944e-38, %v1063
      %v1065 = vsel %vm1062, %v1064, %v1060
      %v1066 = vmul.f32 %v994, %v1065
      %v1067 = vpack.c.bf16 %v1021, %v1021
      %v1068 = vpack.c.bf16 %v1036, %v1036
      %v1069 = vpack.c.bf16 %v1051, %v1051
      %v1070 = vpack.c.bf16 %v1066, %v1066
      %1071 = vst [vmem:[#allocation1] ss:$4 sm:$0xff] %v847
      %v1072 = vld.sshfl [vmem:[#allocation1] sm:$0xff pattern:$0x73625140]
      %1074 = vrot.lane.b32.xlu0 %v1072, 56
      %v1075 = vpop.permute.xlu0 %1074
      %v1077 = vsel %vm737, %v1067, 0
      %v1080 = vsel %vm741, %v1075, 0
      %1082 = vmatpush.bf16.msra.mxu0 0
      %1083 = vmatpush.bf16.msra.mxu0 0
      %1084 = vmatpush.bf16.msra.mxu0 0
      %1085 = vmatpush.bf16.msra.mxu0 0
      %1086 = vmatpush.bf16.msra.mxu0 0
      %1087 = vmatpush.bf16.msra.mxu0 0
      %1088 = vmatpush.bf16.msra.mxu0 0
      %1089 = vmatpush.bf16.msra.mxu0 %v1080
      %1090 = vmatmul.bf16.gmra.mxu0 %v1077
      %v1091 = vpop.f32.mrf.mxu0
      %v1092 = vadd.f32 0.0, %v1091
      %v1093 = vpop.f32.mrf.mxu0
      %1094 = vdwg.mxu0
      %1095 = vst [vmem:[#allocation1] ss:$4 sm:$0xff] %v848
      %v1096 = vld.sshfl [vmem:[#allocation1] sm:$0xff pattern:$0x73625140]
      %1098 = vrot.lane.b32.xlu0 %v1096, 56
      %v1099 = vpop.permute.xlu0 %1098
      %v1101 = vsel %vm737, %v1068, 0
      %v1104 = vsel %vm741, %v1099, 0
      %1106 = vmatpush.bf16.msra.mxu0 0
      %1107 = vmatpush.bf16.msra.mxu0 0
      %1108 = vmatpush.bf16.msra.mxu0 0
      %1109 = vmatpush.bf16.msra.mxu0 0
      %1110 = vmatpush.bf16.msra.mxu0 0
      %1111 = vmatpush.bf16.msra.mxu0 0
      %1112 = vmatpush.bf16.msra.mxu0 0
      %1113 = vmatpush.bf16.msra.mxu0 %v1104
      %1114 = vmatmul.bf16.gmra.mxu0 %v1101
      %v1115 = vpop.f32.mrf.mxu0
      %v1116 = vadd.f32 0.0, %v1115
      %v1117 = vpop.f32.mrf.mxu0
      %1118 = vdwg.mxu0
      %1119 = vst [vmem:[#allocation1] ss:$4 sm:$0xff] %v849
      %v1120 = vld.sshfl [vmem:[#allocation1] sm:$0xff pattern:$0x73625140]
      %1122 = vrot.lane.b32.xlu0 %v1120, 56
      %v1123 = vpop.permute.xlu0 %1122
      %v1125 = vsel %vm737, %v1069, 0
      %v1128 = vsel %vm741, %v1123, 0
      %1130 = vmatpush.bf16.msra.mxu0 0
      %1131 = vmatpush.bf16.msra.mxu0 0
      %1132 = vmatpush.bf16.msra.mxu0 0
      %1133 = vmatpush.bf16.msra.mxu0 0
      %1134 = vmatpush.bf16.msra.mxu0 0
      %1135 = vmatpush.bf16.msra.mxu0 0
      %1136 = vmatpush.bf16.msra.mxu0 0
      %1137 = vmatpush.bf16.msra.mxu0 %v1128
      %1138 = vmatmul.bf16.gmra.mxu0 %v1125
      %v1139 = vpop.f32.mrf.mxu0
      %v1140 = vadd.f32 0.0, %v1139
      %v1141 = vpop.f32.mrf.mxu0
      %1142 = vdwg.mxu0
      %1143 = vst [vmem:[#allocation1] ss:$4 sm:$0xff] %v850
      %v1144 = vld.sshfl [vmem:[#allocation1] sm:$0xff pattern:$0x73625140]
      %1146 = vrot.lane.b32.xlu0 %v1144, 56
      %v1147 = vpop.permute.xlu0 %1146
      %v1149 = vsel %vm737, %v1070, 0
      %v1152 = vsel %vm741, %v1147, 0
      %1154 = vmatpush.bf16.msra.mxu0 0
      %1155 = vmatpush.bf16.msra.mxu0 0
      %1156 = vmatpush.bf16.msra.mxu0 0
      %1157 = vmatpush.bf16.msra.mxu0 0
      %1158 = vmatpush.bf16.msra.mxu0 0
      %1159 = vmatpush.bf16.msra.mxu0 0
      %1160 = vmatpush.bf16.msra.mxu0 0
      %1161 = vmatpush.bf16.msra.mxu0 %v1152
      %1162 = vmatmul.bf16.gmra.mxu0 %v1149
      %v1163 = vpop.f32.mrf.mxu0
      %v1164 = vadd.f32 0.0, %v1163
      %v1165 = vpop.f32.mrf.mxu0
      %1166 = vdwg.mxu0
      %1171 = vst [vmem:[#allocation1] ss:$2 sm:$0xff] %v1092
      %s1172 = scalar_lea.vmem [#allocation1], 1
      %1173 = vst [vmem:[%s1172] ss:$2 sm:$0xff] %v1116
      %s1174 = scalar_lea.vmem [#allocation1], 16
      %1175 = vst [vmem:[%s1174] ss:$2 sm:$0xff] %v1140
      %s1176 = scalar_lea.vmem [#allocation1], 17
      %1177 = vst [vmem:[%s1176] ss:$2 sm:$0xff] %v1164
      %v1178 = vld.sshfl [vmem:[#allocation1] sm:$0xff pattern:$0x75316420]
      %v1179 = vld.sshfl [vmem:[#allocation1 + $0x10] sm:$0xff pattern:$0x75316420]
      %v1182 = vpack.c.bf16 %v1179, %v1178
      %v1183 = vld [vmem:[%s4 + $0x4] sm:$0xf]
      %v1185 = vsel %vm540, %v1182, 0
      %vm1187 = vcmask 1043456
      %v1189 = vsel %vm1187, %v1183, 0
      %1191 = vmatpush.bf16.msra.mxu0 0
      %1192 = vmatpush.bf16.msra.mxu0 0
      %1193 = vmatpush.bf16.msra.mxu0 0
      %1194 = vmatpush.bf16.msra.mxu0 0
      %1195 = vmatpush.bf16.msra.mxu0 0
      %1196 = vmatpush.bf16.msra.mxu0 0
      %1197 = vmatpush.bf16.msra.mxu0 0
      %1198 = vmatpush.bf16.msra.mxu0 %v1189
      %1199 = vmatmul.bf16.gmra.mxu0 %v1185
      %v1200 = vpop.f32.mrf.mxu0
      %v1201 = vadd.f32 0.0, %v1200
      %v1202 = vpop.f32.mrf.mxu0
      %v1203 = vadd.f32 0.0, %v1202
      %1204 = vdwg.mxu0
      %v1206 = vsel %vm540, %v845, 0
      %v1209 = vsel %vm1187, %v846, 0
      %1211 = vmatpush.bf16.msra.mxu0 0
      %1212 = vmatpush.bf16.msra.mxu0 0
      %1213 = vmatpush.bf16.msra.mxu0 0
      %1214 = vmatpush.bf16.msra.mxu0 0
      %1215 = vmatpush.bf16.msra.mxu0 0
      %1216 = vmatpush.bf16.msra.mxu0 0
      %1217 = vmatpush.bf16.msra.mxu0 0
      %1218 = vmatpush.bf16.msra.mxu0 %v1209
      %1219 = vmatmul.bf16.gmra.mxu0 %v1206
      %v1220 = vpop.f32.mrf.mxu0
      %v1221 = vadd.f32 %v1201, %v1220
      %v1222 = vpop.f32.mrf.mxu0
      %v1223 = vadd.f32 %v1203, %v1222
      %1224 = vdwg.mxu0
      %v1225 = vld [vmem:[#allocation2] sm:$0x3]
      %v1226 = vld [vmem:[#allocation2 + $0x2] sm:$0x3]
      %v1227 = vld [vmem:[#allocation2 + $0x4] sm:$0x3]
      %v1228 = vld [vmem:[#allocation2 + $0x6] sm:$0x3]
      %1230 = vst [vmem:[#allocation1] ss:$4 sm:$0xff] %v1225
      %v1231 = vld.sshfl [vmem:[#allocation1] sm:$0xff pattern:$0x73625140]
      %1233 = vrot.lane.b32.xlu0 %v1231, 112
      %v1234 = vpop.permute.xlu0 %1233
      %1235 = vst [vmem:[#allocation1] ss:$4 sm:$0xff] %v1225
      %v1236 = vld.sshfl [vmem:[#allocation1] sm:$0xff pattern:$0x73625140]
      %1238 = vrot.lane.b32.xlu0 %v1236, 80
      %v1239 = vpop.permute.xlu0 %1238
      %v1241 = vsel %vm540, %v1234, 0
      %v1244 = vsel %vm540, %v1239, 0
      %1246 = vmatpush.bf16.xpose.msra.mxu0 0
      %1247 = vmatpush.bf16.xpose.msra.mxu0 0
      %1248 = vmatpush.bf16.xpose.msra.mxu0 0
      %1249 = vmatpush.bf16.xpose.msra.mxu0 0
      %1250 = vmatpush.bf16.xpose.msra.mxu0 0
      %1251 = vmatpush.bf16.xpose.msra.mxu0 0
      %1252 = vmatpush.bf16.xpose.msra.mxu0 0
      %1253 = vmatpush.bf16.xpose.msra.mxu0 %v1244
      %1254 = vmatmul.bf16.gmra.mxu0 %v1241
      %v1255 = vpop.f32.mrf.mxu0
      %v1256 = vadd.f32 0.0, %v1255
      %v1257 = vpop.f32.mrf.mxu0
      %1258 = vdwg.mxu0
      %1260 = vst [vmem:[#allocation1] ss:$4 sm:$0xff] %v1226
      %v1261 = vld.sshfl [vmem:[#allocation1] sm:$0xff pattern:$0x73625140]
      %1263 = vrot.lane.b32.xlu0 %v1261, 112
      %v1264 = vpop.permute.xlu0 %1263
      %1265 = vst [vmem:[#allocation1] ss:$4 sm:$0xff] %v1226
      %v1266 = vld.sshfl [vmem:[#allocation1] sm:$0xff pattern:$0x73625140]
      %1268 = vrot.lane.b32.xlu0 %v1266, 80
      %v1269 = vpop.permute.xlu0 %1268
      %v1271 = vsel %vm540, %v1264, 0
      %v1274 = vsel %vm540, %v1269, 0
      %1276 = vmatpush.bf16.xpose.msra.mxu0 0
      %1277 = vmatpush.bf16.xpose.msra.mxu0 0
      %1278 = vmatpush.bf16.xpose.msra.mxu0 0
      %1279 = vmatpush.bf16.xpose.msra.mxu0 0
      %1280 = vmatpush.bf16.xpose.msra.mxu0 0
      %1281 = vmatpush.bf16.xpose.msra.mxu0 0
      %1282 = vmatpush.bf16.xpose.msra.mxu0 0
      %1283 = vmatpush.bf16.xpose.msra.mxu0 %v1274
      %1284 = vmatmul.bf16.gmra.mxu0 %v1271
      %v1285 = vpop.f32.mrf.mxu0
      %v1286 = vadd.f32 0.0, %v1285
      %v1287 = vpop.f32.mrf.mxu0
      %1288 = vdwg.mxu0
      %1290 = vst [vmem:[#allocation1] ss:$4 sm:$0xff] %v1227
      %v1291 = vld.sshfl [vmem:[#allocation1] sm:$0xff pattern:$0x73625140]
      %1293 = vrot.lane.b32.xlu0 %v1291, 112
      %v1294 = vpop.permute.xlu0 %1293
      %1295 = vst [vmem:[#allocation1] ss:$4 sm:$0xff] %v1227
      %v1296 = vld.sshfl [vmem:[#allocation1] sm:$0xff pattern:$0x73625140]
      %1298 = vrot.lane.b32.xlu0 %v1296, 80
      %v1299 = vpop.permute.xlu0 %1298
      %v1301 = vsel %vm540, %v1294, 0
      %v1304 = vsel %vm540, %v1299, 0
      %1306 = vmatpush.bf16.xpose.msra.mxu0 0
      %1307 = vmatpush.bf16.xpose.msra.mxu0 0
      %1308 = vmatpush.bf16.xpose.msra.mxu0 0
      %1309 = vmatpush.bf16.xpose.msra.mxu0 0
      %1310 = vmatpush.bf16.xpose.msra.mxu0 0
      %1311 = vmatpush.bf16.xpose.msra.mxu0 0
      %1312 = vmatpush.bf16.xpose.msra.mxu0 0
      %1313 = vmatpush.bf16.xpose.msra.mxu0 %v1304
      %1314 = vmatmul.bf16.gmra.mxu0 %v1301
      %v1315 = vpop.f32.mrf.mxu0
      %v1316 = vadd.f32 0.0, %v1315
      %v1317 = vpop.f32.mrf.mxu0
      %1318 = vdwg.mxu0
      %1320 = vst [vmem:[#allocation1] ss:$4 sm:$0xff] %v1228
      %v1321 = vld.sshfl [vmem:[#allocation1] sm:$0xff pattern:$0x73625140]
      %1323 = vrot.lane.b32.xlu0 %v1321, 112
      %v1324 = vpop.permute.xlu0 %1323
      %1325 = vst [vmem:[#allocation1] ss:$4 sm:$0xff] %v1228
      %v1326 = vld.sshfl [vmem:[#allocation1] sm:$0xff pattern:$0x73625140]
      %1328 = vrot.lane.b32.xlu0 %v1326, 80
      %v1329 = vpop.permute.xlu0 %1328
      %v1331 = vsel %vm540, %v1324, 0
      %v1334 = vsel %vm540, %v1329, 0
      %1336 = vmatpush.bf16.xpose.msra.mxu0 0
      %1337 = vmatpush.bf16.xpose.msra.mxu0 0
      %1338 = vmatpush.bf16.xpose.msra.mxu0 0
      %1339 = vmatpush.bf16.xpose.msra.mxu0 0
      %1340 = vmatpush.bf16.xpose.msra.mxu0 0
      %1341 = vmatpush.bf16.xpose.msra.mxu0 0
      %1342 = vmatpush.bf16.xpose.msra.mxu0 0
      %1343 = vmatpush.bf16.xpose.msra.mxu0 %v1334
      %1344 = vmatmul.bf16.gmra.mxu0 %v1331
      %v1345 = vpop.f32.mrf.mxu0
      %v1346 = vadd.f32 0.0, %v1345
      %v1347 = vpop.f32.mrf.mxu0
      %1348 = vdwg.mxu0
      %v1349 = vsel %vm631, %v1256, -inf
      %1350 = vmax.xlane.f32.xlu0 %v1349
      %v1351 = vpop.xlane.xlu0 %1350
      %v1352 = vsel %vm631, %v1286, -inf
      %1353 = vmax.xlane.f32.xlu0 %v1352
      %v1354 = vpop.xlane.xlu0 %1353
      %v1355 = vsel %vm631, %v1316, -inf
      %1356 = vmax.xlane.f32.xlu0 %v1355
      %v1357 = vpop.xlane.xlu0 %1356
      %v1358 = vsel %vm631, %v1346, -inf
      %1359 = vmax.xlane.f32.xlu0 %v1358
      %v1360 = vpop.xlane.xlu0 %1359
      %v1361 = vsub.f32 %v1256, %v1351
      %v1362 = vsub.f32 %v1286, %v1354
      %v1363 = vsub.f32 %v1316, %v1357
      %v1364 = vsub.f32 %v1346, %v1360
      %v1365 = vmul.f32 %v1361, 1.442695
      %v1366 = vpow.pop %v1365
      %v1367 = vmul.f32 %v1362, 1.442695
      %v1368 = vpow.pop %v1367
      %v1369 = vmul.f32 %v1363, 1.442695
      %v1370 = vpow.pop %v1369
      %v1371 = vmul.f32 %v1364, 1.442695
      %v1372 = vpow.pop %v1371
      %v1373 = vsel %vm631, %v1366, 0.0
      %1374 = vadd.xlane.f32.xlu0 %v1373
      %v1375 = vpop.xlane.xlu0 %1374
      %v1376 = vsel %vm631, %v1368, 0.0
      %1377 = vadd.xlane.f32.xlu0 %v1376
      %v1378 = vpop.xlane.xlu0 %1377
      %v1379 = vsel %vm631, %v1370, 0.0
      %1380 = vadd.xlane.f32.xlu0 %v1379
      %v1381 = vpop.xlane.xlu0 %1380
      %v1382 = vsel %vm631, %v1372, 0.0
      %1383 = vadd.xlane.f32.xlu0 %v1382
      %v1384 = vpop.xlane.xlu0 %1383
      %v1385 = vrcp.pop %v1375
      %v1386 = vmul.f32 %v1375, %v1385
      %v1387 = vsub.f32 1.0, %v1386
      %v1388 = vmul.f32 %v1385, %v1387
      %v1389 = vadd.f32 %v1385, %v1388
      %vm1390 = vweird.f32 %v1375
      %vm1391 = vweird.f32 %v1385
      %vm1392 = vmor %vm1390, %vm1391
      %v1393 = vsel %vm1392, %v1385, %v1389
      %v1394 = vand.u32 2147483647, %v1375
      %vm1395 = vcmp.eq.f32.partialorder %v1394, 8.507059e+37
      %v1396 = vand.u32 %v1375, 2147483648
      %v1397 = vor.u32 1.1754944e-38, %v1396
      %v1398 = vsel %vm1395, %v1397, %v1393
      %v1399 = vmul.f32 %v1366, %v1398
      %v1400 = vrcp.pop %v1378
      %v1401 = vmul.f32 %v1378, %v1400
      %v1402 = vsub.f32 1.0, %v1401
      %v1403 = vmul.f32 %v1400, %v1402
      %v1404 = vadd.f32 %v1400, %v1403
      %vm1405 = vweird.f32 %v1378
      %vm1406 = vweird.f32 %v1400
      %vm1407 = vmor %vm1405, %vm1406
      %v1408 = vsel %vm1407, %v1400, %v1404
      %v1409 = vand.u32 2147483647, %v1378
      %vm1410 = vcmp.eq.f32.partialorder %v1409, 8.507059e+37
      %v1411 = vand.u32 %v1378, 2147483648
      %v1412 = vor.u32 1.1754944e-38, %v1411
      %v1413 = vsel %vm1410, %v1412, %v1408
      %v1414 = vmul.f32 %v1368, %v1413
      %v1415 = vrcp.pop %v1381
      %v1416 = vmul.f32 %v1381, %v1415
      %v1417 = vsub.f32 1.0, %v1416
      %v1418 = vmul.f32 %v1415, %v1417
      %v1419 = vadd.f32 %v1415, %v1418
      %vm1420 = vweird.f32 %v1381
      %vm1421 = vweird.f32 %v1415
      %vm1422 = vmor %vm1420, %vm1421
      %v1423 = vsel %vm1422, %v1415, %v1419
      %v1424 = vand.u32 2147483647, %v1381
      %vm1425 = vcmp.eq.f32.partialorder %v1424, 8.507059e+37
      %v1426 = vand.u32 %v1381, 2147483648
      %v1427 = vor.u32 1.1754944e-38, %v1426
      %v1428 = vsel %vm1425, %v1427, %v1423
      %v1429 = vmul.f32 %v1370, %v1428
      %v1430 = vrcp.pop %v1384
      %v1431 = vmul.f32 %v1384, %v1430
      %v1432 = vsub.f32 1.0, %v1431
      %v1433 = vmul.f32 %v1430, %v1432
      %v1434 = vadd.f32 %v1430, %v1433
      %vm1435 = vweird.f32 %v1384
      %vm1436 = vweird.f32 %v1430
      %vm1437 = vmor %vm1435, %vm1436
      %v1438 = vsel %vm1437, %v1430, %v1434
      %v1439 = vand.u32 2147483647, %v1384
      %vm1440 = vcmp.eq.f32.partialorder %v1439, 8.507059e+37
      %v1441 = vand.u32 %v1384, 2147483648
      %v1442 = vor.u32 1.1754944e-38, %v1441
      %v1443 = vsel %vm1440, %v1442, %v1438
      %v1444 = vmul.f32 %v1372, %v1443
      %v1445 = vpack.c.bf16 %v1399, %v1399
      %v1446 = vpack.c.bf16 %v1414, %v1414
      %v1447 = vpack.c.bf16 %v1429, %v1429
      %v1448 = vpack.c.bf16 %v1444, %v1444
      %1449 = vst [vmem:[#allocation1] ss:$4 sm:$0xff] %v1225
      %v1450 = vld.sshfl [vmem:[#allocation1] sm:$0xff pattern:$0x73625140]
      %1452 = vrot.lane.b32.xlu0 %v1450, 48
      %v1453 = vpop.permute.xlu0 %1452
      %v1455 = vsel %vm737, %v1445, 0
      %v1458 = vsel %vm741, %v1453, 0
      %1460 = vmatpush.bf16.msra.mxu0 0
      %1461 = vmatpush.bf16.msra.mxu0 0
      %1462 = vmatpush.bf16.msra.mxu0 0
      %1463 = vmatpush.bf16.msra.mxu0 0
      %1464 = vmatpush.bf16.msra.mxu0 0
      %1465 = vmatpush.bf16.msra.mxu0 0
      %1466 = vmatpush.bf16.msra.mxu0 0
      %1467 = vmatpush.bf16.msra.mxu0 %v1458
      %1468 = vmatmul.bf16.gmra.mxu0 %v1455
      %v1469 = vpop.f32.mrf.mxu0
      %v1470 = vadd.f32 0.0, %v1469
      %v1471 = vpop.f32.mrf.mxu0
      %1472 = vdwg.mxu0
      %1473 = vst [vmem:[#allocation1] ss:$4 sm:$0xff] %v1226
      %v1474 = vld.sshfl [vmem:[#allocation1] sm:$0xff pattern:$0x73625140]
      %1476 = vrot.lane.b32.xlu0 %v1474, 48
      %v1477 = vpop.permute.xlu0 %1476
      %v1479 = vsel %vm737, %v1446, 0
      %v1482 = vsel %vm741, %v1477, 0
      %1484 = vmatpush.bf16.msra.mxu0 0
      %1485 = vmatpush.bf16.msra.mxu0 0
      %1486 = vmatpush.bf16.msra.mxu0 0
      %1487 = vmatpush.bf16.msra.mxu0 0
      %1488 = vmatpush.bf16.msra.mxu0 0
      %1489 = vmatpush.bf16.msra.mxu0 0
      %1490 = vmatpush.bf16.msra.mxu0 0
      %1491 = vmatpush.bf16.msra.mxu0 %v1482
      %1492 = vmatmul.bf16.gmra.mxu0 %v1479
      %v1493 = vpop.f32.mrf.mxu0
      %v1494 = vadd.f32 0.0, %v1493
      %v1495 = vpop.f32.mrf.mxu0
      %1496 = vdwg.mxu0
      %1497 = vst [vmem:[#allocation1] ss:$4 sm:$0xff] %v1227
      %v1498 = vld.sshfl [vmem:[#allocation1] sm:$0xff pattern:$0x73625140]
      %1500 = vrot.lane.b32.xlu0 %v1498, 48
      %v1501 = vpop.permute.xlu0 %1500
      %v1503 = vsel %vm737, %v1447, 0
      %v1506 = vsel %vm741, %v1501, 0
      %1508 = vmatpush.bf16.msra.mxu0 0
      %1509 = vmatpush.bf16.msra.mxu0 0
      %1510 = vmatpush.bf16.msra.mxu0 0
      %1511 = vmatpush.bf16.msra.mxu0 0
      %1512 = vmatpush.bf16.msra.mxu0 0
      %1513 = vmatpush.bf16.msra.mxu0 0
      %1514 = vmatpush.bf16.msra.mxu0 0
      %1515 = vmatpush.bf16.msra.mxu0 %v1506
      %1516 = vmatmul.bf16.gmra.mxu0 %v1503
      %v1517 = vpop.f32.mrf.mxu0
      %v1518 = vadd.f32 0.0, %v1517
      %v1519 = vpop.f32.mrf.mxu0
      %1520 = vdwg.mxu0
      %1521 = vst [vmem:[#allocation1] ss:$4 sm:$0xff] %v1228
      %v1522 = vld.sshfl [vmem:[#allocation1] sm:$0xff pattern:$0x73625140]
      %1524 = vrot.lane.b32.xlu0 %v1522, 48
      %v1525 = vpop.permute.xlu0 %1524
      %v1527 = vsel %vm737, %v1448, 0
      %v1530 = vsel %vm741, %v1525, 0
      %1532 = vmatpush.bf16.msra.mxu0 0
      %1533 = vmatpush.bf16.msra.mxu0 0
      %1534 = vmatpush.bf16.msra.mxu0 0
      %1535 = vmatpush.bf16.msra.mxu0 0
      %1536 = vmatpush.bf16.msra.mxu0 0
      %1537 = vmatpush.bf16.msra.mxu0 0
      %1538 = vmatpush.bf16.msra.mxu0 0
      %1539 = vmatpush.bf16.msra.mxu0 %v1530
      %1540 = vmatmul.bf16.gmra.mxu0 %v1527
      %v1541 = vpop.f32.mrf.mxu0
      %v1542 = vadd.f32 0.0, %v1541
      %v1543 = vpop.f32.mrf.mxu0
      %1544 = vdwg.mxu0
      %1549 = vst [vmem:[#allocation1] ss:$2 sm:$0xff] %v1470
      %s1550 = scalar_lea.vmem [#allocation1], 1
      %1551 = vst [vmem:[%s1550] ss:$2 sm:$0xff] %v1494
      %s1552 = scalar_lea.vmem [#allocation1], 16
      %1553 = vst [vmem:[%s1552] ss:$2 sm:$0xff] %v1518
      %s1554 = scalar_lea.vmem [#allocation1], 17
      %1555 = vst [vmem:[%s1554] ss:$2 sm:$0xff] %v1542
      %v1556 = vld.sshfl [vmem:[#allocation1] sm:$0xff pattern:$0x75316420]
      %v1557 = vld.sshfl [vmem:[#allocation1 + $0x10] sm:$0xff pattern:$0x75316420]
      %v1560 = vpack.c.bf16 %v1557, %v1556
      %v1561 = vld [vmem:[%s4 + $0x8] sm:$0xf]
      %v1563 = vsel %vm540, %v1560, 0
      %v1566 = vsel %vm1187, %v1561, 0
      %1568 = vmatpush.bf16.msra.mxu0 0
      %1569 = vmatpush.bf16.msra.mxu0 0
      %1570 = vmatpush.bf16.msra.mxu0 0
      %1571 = vmatpush.bf16.msra.mxu0 0
      %1572 = vmatpush.bf16.msra.mxu0 0
      %1573 = vmatpush.bf16.msra.mxu0 0
      %1574 = vmatpush.bf16.msra.mxu0 0
      %1575 = vmatpush.bf16.msra.mxu0 %v1566
      %1576 = vmatmul.bf16.gmra.mxu0 %v1563
      %v1577 = vpop.f32.mrf.mxu0
      %v1578 = vadd.f32 0.0, %v1577
      %v1579 = vpop.f32.mrf.mxu0
      %v1580 = vadd.f32 0.0, %v1579
      %1581 = vdwg.mxu0
      %v1582 = vadd.f32 %v1221, %v1578
      %v1583 = vadd.f32 %v1223, %v1580
      %v1584 = vld [vmem:[#allocation2] sm:$0x3]
      %v1585 = vld [vmem:[#allocation2 + $0x2] sm:$0x3]
      %v1586 = vld [vmem:[#allocation2 + $0x4] sm:$0x3]
      %v1587 = vld [vmem:[#allocation2 + $0x6] sm:$0x3]
      %1589 = vst [vmem:[#allocation1] ss:$4 sm:$0xff] %v1584
      %v1590 = vld.sshfl [vmem:[#allocation1] sm:$0xff pattern:$0x73625140]
      %1592 = vrot.lane.b32.xlu0 %v1590, 104
      %v1593 = vpop.permute.xlu0 %1592
      %1594 = vst [vmem:[#allocation1] ss:$4 sm:$0xff] %v1584
      %v1595 = vld.sshfl [vmem:[#allocation1] sm:$0xff pattern:$0x73625140]
      %1597 = vrot.lane.b32.xlu0 %v1595, 72
      %v1598 = vpop.permute.xlu0 %1597
      %v1600 = vsel %vm540, %v1593, 0
      %v1603 = vsel %vm540, %v1598, 0
      %1605 = vmatpush.bf16.xpose.msra.mxu0 0
      %1606 = vmatpush.bf16.xpose.msra.mxu0 0
      %1607 = vmatpush.bf16.xpose.msra.mxu0 0
      %1608 = vmatpush.bf16.xpose.msra.mxu0 0
      %1609 = vmatpush.bf16.xpose.msra.mxu0 0
      %1610 = vmatpush.bf16.xpose.msra.mxu0 0
      %1611 = vmatpush.bf16.xpose.msra.mxu0 0
      %1612 = vmatpush.bf16.xpose.msra.mxu0 %v1603
      %1613 = vmatmul.bf16.gmra.mxu0 %v1600
      %v1614 = vpop.f32.mrf.mxu0
      %v1615 = vadd.f32 0.0, %v1614
      %v1616 = vpop.f32.mrf.mxu0
      %1617 = vdwg.mxu0
      %1619 = vst [vmem:[#allocation1] ss:$4 sm:$0xff] %v1585
      %v1620 = vld.sshfl [vmem:[#allocation1] sm:$0xff pattern:$0x73625140]
      %1622 = vrot.lane.b32.xlu0 %v1620, 104
      %v1623 = vpop.permute.xlu0 %1622
      %1624 = vst [vmem:[#allocation1] ss:$4 sm:$0xff] %v1585
      %v1625 = vld.sshfl [vmem:[#allocation1] sm:$0xff pattern:$0x73625140]
      %1627 = vrot.lane.b32.xlu0 %v1625, 72
      %v1628 = vpop.permute.xlu0 %1627
      %v1630 = vsel %vm540, %v1623, 0
      %v1633 = vsel %vm540, %v1628, 0
      %1635 = vmatpush.bf16.xpose.msra.mxu0 0
      %1636 = vmatpush.bf16.xpose.msra.mxu0 0
      %1637 = vmatpush.bf16.xpose.msra.mxu0 0
      %1638 = vmatpush.bf16.xpose.msra.mxu0 0
      %1639 = vmatpush.bf16.xpose.msra.mxu0 0
      %1640 = vmatpush.bf16.xpose.msra.mxu0 0
      %1641 = vmatpush.bf16.xpose.msra.mxu0 0
      %1642 = vmatpush.bf16.xpose.msra.mxu0 %v1633
      %1643 = vmatmul.bf16.gmra.mxu0 %v1630
      %v1644 = vpop.f32.mrf.mxu0
      %v1645 = vadd.f32 0.0, %v1644
      %v1646 = vpop.f32.mrf.mxu0
      %1647 = vdwg.mxu0
      %1649 = vst [vmem:[#allocation1] ss:$4 sm:$0xff] %v1586
      %v1650 = vld.sshfl [vmem:[#allocation1] sm:$0xff pattern:$0x73625140]
      %1652 = vrot.lane.b32.xlu0 %v1650, 104
      %v1653 = vpop.permute.xlu0 %1652
      %1654 = vst [vmem:[#allocation1] ss:$4 sm:$0xff] %v1586
      %v1655 = vld.sshfl [vmem:[#allocation1] sm:$0xff pattern:$0x73625140]
      %1657 = vrot.lane.b32.xlu0 %v1655, 72
      %v1658 = vpop.permute.xlu0 %1657
      %v1660 = vsel %vm540, %v1653, 0
      %v1663 = vsel %vm540, %v1658, 0
      %1665 = vmatpush.bf16.xpose.msra.mxu0 0
      %1666 = vmatpush.bf16.xpose.msra.mxu0 0
      %1667 = vmatpush.bf16.xpose.msra.mxu0 0
      %1668 = vmatpush.bf16.xpose.msra.mxu0 0
      %1669 = vmatpush.bf16.xpose.msra.mxu0 0
      %1670 = vmatpush.bf16.xpose.msra.mxu0 0
      %1671 = vmatpush.bf16.xpose.msra.mxu0 0
      %1672 = vmatpush.bf16.xpose.msra.mxu0 %v1663
      %1673 = vmatmul.bf16.gmra.mxu0 %v1660
      %v1674 = vpop.f32.mrf.mxu0
      %v1675 = vadd.f32 0.0, %v1674
      %v1676 = vpop.f32.mrf.mxu0
      %1677 = vdwg.mxu0
      %1679 = vst [vmem:[#allocation1] ss:$4 sm:$0xff] %v1587
      %v1680 = vld.sshfl [vmem:[#allocation1] sm:$0xff pattern:$0x73625140]
      %1682 = vrot.lane.b32.xlu0 %v1680, 104
      %v1683 = vpop.permute.xlu0 %1682
      %1684 = vst [vmem:[#allocation1] ss:$4 sm:$0xff] %v1587
      %v1685 = vld.sshfl [vmem:[#allocation1] sm:$0xff pattern:$0x73625140]
      %1687 = vrot.lane.b32.xlu0 %v1685, 72
      %v1688 = vpop.permute.xlu0 %1687
      %v1690 = vsel %vm540, %v1683, 0
      %v1693 = vsel %vm540, %v1688, 0
      %1695 = vmatpush.bf16.xpose.msra.mxu0 0
      %1696 = vmatpush.bf16.xpose.msra.mxu0 0
      %1697 = vmatpush.bf16.xpose.msra.mxu0 0
      %1698 = vmatpush.bf16.xpose.msra.mxu0 0
      %1699 = vmatpush.bf16.xpose.msra.mxu0 0
      %1700 = vmatpush.bf16.xpose.msra.mxu0 0
      %1701 = vmatpush.bf16.xpose.msra.mxu0 0
      %1702 = vmatpush.bf16.xpose.msra.mxu0 %v1693
      %1703 = vmatmul.bf16.gmra.mxu0 %v1690
      %v1704 = vpop.f32.mrf.mxu0
      %v1705 = vadd.f32 0.0, %v1704
      %v1706 = vpop.f32.mrf.mxu0
      %1707 = vdwg.mxu0
      %v1708 = vsel %vm631, %v1615, -inf
      %1709 = vmax.xlane.f32.xlu0 %v1708
      %v1710 = vpop.xlane.xlu0 %1709
      %v1711 = vsel %vm631, %v1645, -inf
      %1712 = vmax.xlane.f32.xlu0 %v1711
      %v1713 = vpop.xlane.xlu0 %1712
      %v1714 = vsel %vm631, %v1675, -inf
      %1715 = vmax.xlane.f32.xlu0 %v1714
      %v1716 = vpop.xlane.xlu0 %1715
      %v1717 = vsel %vm631, %v1705, -inf
      %1718 = vmax.xlane.f32.xlu0 %v1717
      %v1719 = vpop.xlane.xlu0 %1718
      %v1720 = vsub.f32 %v1615, %v1710
      %v1721 = vsub.f32 %v1645, %v1713
      %v1722 = vsub.f32 %v1675, %v1716
      %v1723 = vsub.f32 %v1705, %v1719
      %v1724 = vmul.f32 %v1720, 1.442695
      %v1725 = vpow.pop %v1724
      %v1726 = vmul.f32 %v1721, 1.442695
      %v1727 = vpow.pop %v1726
      %v1728 = vmul.f32 %v1722, 1.442695
      %v1729 = vpow.pop %v1728
      %v1730 = vmul.f32 %v1723, 1.442695
      %v1731 = vpow.pop %v1730
      %v1732 = vsel %vm631, %v1725, 0.0
      %1733 = vadd.xlane.f32.xlu0 %v1732
      %v1734 = vpop.xlane.xlu0 %1733
      %v1735 = vsel %vm631, %v1727, 0.0
      %1736 = vadd.xlane.f32.xlu0 %v1735
      %v1737 = vpop.xlane.xlu0 %1736
      %v1738 = vsel %vm631, %v1729, 0.0
      %1739 = vadd.xlane.f32.xlu0 %v1738
      %v1740 = vpop.xlane.xlu0 %1739
      %v1741 = vsel %vm631, %v1731, 0.0
      %1742 = vadd.xlane.f32.xlu0 %v1741
      %v1743 = vpop.xlane.xlu0 %1742
      %v1744 = vrcp.pop %v1734
      %v1745 = vmul.f32 %v1734, %v1744
      %v1746 = vsub.f32 1.0, %v1745
      %v1747 = vmul.f32 %v1744, %v1746
      %v1748 = vadd.f32 %v1744, %v1747
      %vm1749 = vweird.f32 %v1734
      %vm1750 = vweird.f32 %v1744
      %vm1751 = vmor %vm1749, %vm1750
      %v1752 = vsel %vm1751, %v1744, %v1748
      %v1753 = vand.u32 2147483647, %v1734
      %vm1754 = vcmp.eq.f32.partialorder %v1753, 8.507059e+37
      %v1755 = vand.u32 %v1734, 2147483648
      %v1756 = vor.u32 1.1754944e-38, %v1755
      %v1757 = vsel %vm1754, %v1756, %v1752
      %v1758 = vmul.f32 %v1725, %v1757
      %v1759 = vrcp.pop %v1737
      %v1760 = vmul.f32 %v1737, %v1759
      %v1761 = vsub.f32 1.0, %v1760
      %v1762 = vmul.f32 %v1759, %v1761
      %v1763 = vadd.f32 %v1759, %v1762
      %vm1764 = vweird.f32 %v1737
      %vm1765 = vweird.f32 %v1759
      %vm1766 = vmor %vm1764, %vm1765
      %v1767 = vsel %vm1766, %v1759, %v1763
      %v1768 = vand.u32 2147483647, %v1737
      %vm1769 = vcmp.eq.f32.partialorder %v1768, 8.507059e+37
      %v1770 = vand.u32 %v1737, 2147483648
      %v1771 = vor.u32 1.1754944e-38, %v1770
      %v1772 = vsel %vm1769, %v1771, %v1767
      %v1773 = vmul.f32 %v1727, %v1772
      %v1774 = vrcp.pop %v1740
      %v1775 = vmul.f32 %v1740, %v1774
      %v1776 = vsub.f32 1.0, %v1775
      %v1777 = vmul.f32 %v1774, %v1776
      %v1778 = vadd.f32 %v1774, %v1777
      %vm1779 = vweird.f32 %v1740
      %vm1780 = vweird.f32 %v1774
      %vm1781 = vmor %vm1779, %vm1780
      %v1782 = vsel %vm1781, %v1774, %v1778
      %v1783 = vand.u32 2147483647, %v1740
      %vm1784 = vcmp.eq.f32.partialorder %v1783, 8.507059e+37
      %v1785 = vand.u32 %v1740, 2147483648
      %v1786 = vor.u32 1.1754944e-38, %v1785
      %v1787 = vsel %vm1784, %v1786, %v1782
      %v1788 = vmul.f32 %v1729, %v1787
      %v1789 = vrcp.pop %v1743
      %v1790 = vmul.f32 %v1743, %v1789
      %v1791 = vsub.f32 1.0, %v1790
      %v1792 = vmul.f32 %v1789, %v1791
      %v1793 = vadd.f32 %v1789, %v1792
      %vm1794 = vweird.f32 %v1743
      %vm1795 = vweird.f32 %v1789
      %vm1796 = vmor %vm1794, %vm1795
      %v1797 = vsel %vm1796, %v1789, %v1793
      %v1798 = vand.u32 2147483647, %v1743
      %vm1799 = vcmp.eq.f32.partialorder %v1798, 8.507059e+37
      %v1800 = vand.u32 %v1743, 2147483648
      %v1801 = vor.u32 1.1754944e-38, %v1800
      %v1802 = vsel %vm1799, %v1801, %v1797
      %v1803 = vmul.f32 %v1731, %v1802
      %v1804 = vpack.c.bf16 %v1758, %v1758
      %v1805 = vpack.c.bf16 %v1773, %v1773
      %v1806 = vpack.c.bf16 %v1788, %v1788
      %v1807 = vpack.c.bf16 %v1803, %v1803
      %1808 = vst [vmem:[#allocation1] ss:$4 sm:$0xff] %v1584
      %v1809 = vld.sshfl [vmem:[#allocation1] sm:$0xff pattern:$0x73625140]
      %1811 = vrot.lane.b32.xlu0 %v1809, 40
      %v1812 = vpop.permute.xlu0 %1811
      %v1814 = vsel %vm737, %v1804, 0
      %v1817 = vsel %vm741, %v1812, 0
      %1819 = vmatpush.bf16.msra.mxu0 0
      %1820 = vmatpush.bf16.msra.mxu0 0
      %1821 = vmatpush.bf16.msra.mxu0 0
      %1822 = vmatpush.bf16.msra.mxu0 0
      %1823 = vmatpush.bf16.msra.mxu0 0
      %1824 = vmatpush.bf16.msra.mxu0 0
      %1825 = vmatpush.bf16.msra.mxu0 0
      %1826 = vmatpush.bf16.msra.mxu0 %v1817
      %1827 = vmatmul.bf16.gmra.mxu0 %v1814
      %v1828 = vpop.f32.mrf.mxu0
      %v1829 = vadd.f32 0.0, %v1828
      %v1830 = vpop.f32.mrf.mxu0
      %1831 = vdwg.mxu0
      %1832 = vst [vmem:[#allocation1] ss:$4 sm:$0xff] %v1585
      %v1833 = vld.sshfl [vmem:[#allocation1] sm:$0xff pattern:$0x73625140]
      %1835 = vrot.lane.b32.xlu0 %v1833, 40
      %v1836 = vpop.permute.xlu0 %1835
      %v1838 = vsel %vm737, %v1805, 0
      %v1841 = vsel %vm741, %v1836, 0
      %1843 = vmatpush.bf16.msra.mxu0 0
      %1844 = vmatpush.bf16.msra.mxu0 0
      %1845 = vmatpush.bf16.msra.mxu0 0
      %1846 = vmatpush.bf16.msra.mxu0 0
      %1847 = vmatpush.bf16.msra.mxu0 0
      %1848 = vmatpush.bf16.msra.mxu0 0
      %1849 = vmatpush.bf16.msra.mxu0 0
      %1850 = vmatpush.bf16.msra.mxu0 %v1841
      %1851 = vmatmul.bf16.gmra.mxu0 %v1838
      %v1852 = vpop.f32.mrf.mxu0
      %v1853 = vadd.f32 0.0, %v1852
      %v1854 = vpop.f32.mrf.mxu0
      %1855 = vdwg.mxu0
      %1856 = vst [vmem:[#allocation1] ss:$4 sm:$0xff] %v1586
      %v1857 = vld.sshfl [vmem:[#allocation1] sm:$0xff pattern:$0x73625140]
      %1859 = vrot.lane.b32.xlu0 %v1857, 40
      %v1860 = vpop.permute.xlu0 %1859
      %v1862 = vsel %vm737, %v1806, 0
      %v1865 = vsel %vm741, %v1860, 0
      %1867 = vmatpush.bf16.msra.mxu0 0
      %1868 = vmatpush.bf16.msra.mxu0 0
      %1869 = vmatpush.bf16.msra.mxu0 0
      %1870 = vmatpush.bf16.msra.mxu0 0
      %1871 = vmatpush.bf16.msra.mxu0 0
      %1872 = vmatpush.bf16.msra.mxu0 0
      %1873 = vmatpush.bf16.msra.mxu0 0
      %1874 = vmatpush.bf16.msra.mxu0 %v1865
      %1875 = vmatmul.bf16.gmra.mxu0 %v1862
      %v1876 = vpop.f32.mrf.mxu0
      %v1877 = vadd.f32 0.0, %v1876
      %v1878 = vpop.f32.mrf.mxu0
      %1879 = vdwg.mxu0
      %1880 = vst [vmem:[#allocation1] ss:$4 sm:$0xff] %v1587
      %v1881 = vld.sshfl [vmem:[#allocation1] sm:$0xff pattern:$0x73625140]
      %1883 = vrot.lane.b32.xlu0 %v1881, 40
      %v1884 = vpop.permute.xlu0 %1883
      %v1886 = vsel %vm737, %v1807, 0
      %v1889 = vsel %vm741, %v1884, 0
      %1891 = vmatpush.bf16.msra.mxu0 0
      %1892 = vmatpush.bf16.msra.mxu0 0
      %1893 = vmatpush.bf16.msra.mxu0 0
      %1894 = vmatpush.bf16.msra.mxu0 0
      %1895 = vmatpush.bf16.msra.mxu0 0
      %1896 = vmatpush.bf16.msra.mxu0 0
      %1897 = vmatpush.bf16.msra.mxu0 0
      %1898 = vmatpush.bf16.msra.mxu0 %v1889
      %1899 = vmatmul.bf16.gmra.mxu0 %v1886
      %v1900 = vpop.f32.mrf.mxu0
      %v1901 = vadd.f32 0.0, %v1900
      %v1902 = vpop.f32.mrf.mxu0
      %1903 = vdwg.mxu0
      %1908 = vst [vmem:[#allocation1] ss:$2 sm:$0xff] %v1829
      %s1909 = scalar_lea.vmem [#allocation1], 1
      %1910 = vst [vmem:[%s1909] ss:$2 sm:$0xff] %v1853
      %s1911 = scalar_lea.vmem [#allocation1], 16
      %1912 = vst [vmem:[%s1911] ss:$2 sm:$0xff] %v1877
      %s1913 = scalar_lea.vmem [#allocation1], 17
      %1914 = vst [vmem:[%s1913] ss:$2 sm:$0xff] %v1901
      %v1915 = vld.sshfl [vmem:[#allocation1] sm:$0xff pattern:$0x75316420]
      %v1916 = vld.sshfl [vmem:[#allocation1 + $0x10] sm:$0xff pattern:$0x75316420]
      %v1919 = vpack.c.bf16 %v1916, %v1915
      %v1920 = vld [vmem:[%s4 + $0xc] sm:$0xf]
      %v1922 = vsel %vm540, %v1919, 0
      %v1925 = vsel %vm1187, %v1920, 0
      %1927 = vmatpush.bf16.msra.mxu0 0
      %1928 = vmatpush.bf16.msra.mxu0 0
      %1929 = vmatpush.bf16.msra.mxu0 0
      %1930 = vmatpush.bf16.msra.mxu0 0
      %1931 = vmatpush.bf16.msra.mxu0 0
      %1932 = vmatpush.bf16.msra.mxu0 0
      %1933 = vmatpush.bf16.msra.mxu0 0
      %1934 = vmatpush.bf16.msra.mxu0 %v1925
      %1935 = vmatmul.bf16.gmra.mxu0 %v1922
      %v1936 = vpop.f32.mrf.mxu0
      %v1937 = vadd.f32 0.0, %v1936
      %v1938 = vpop.f32.mrf.mxu0
      %v1939 = vadd.f32 0.0, %v1938
      %1940 = vdwg.mxu0
      %v1941 = vadd.f32 %v1582, %v1937
      %v1942 = vadd.f32 %v1583, %v1939
      %v1943 = vld [vmem:[%s5] sm:$0x1]
      %v1945 = vperm.slane %v1943, 0
      %v1947 = vadd.f32 %v1941, %v1945
      %v1948 = vadd.f32 %v1942, %v1945
      %v1949 = vpack.c.bf16 %v1948, %v1947
      %v1950 = vld [vmem:[%s6] sm:$0xf]
      %v1951 = vld [vmem:[%s6 + $0x4] sm:$0xf]
      %v1952 = vld [vmem:[%s6 + $0x8] sm:$0xf]
      %v1953 = vld [vmem:[%s6 + $0xc] sm:$0xf]
      %v1954 = vld [vmem:[%s7] sm:$0x1]
      %v1956 = vperm.slane %v1954, 0
      %v1962 = vunpack.c.l.b16 %v1950
      %v1963 = vunpack.c.l.b16 %v1951
      %v1964 = vunpack.c.l.b16 %v1952
      %v1965 = vunpack.c.l.b16 %v1953
      %v1966 = vpack.c.b16 %v1963, %v1962
      %v1967 = vpack.c.b16 %v1965, %v1964
      %v1971 = vsel %vm331, %v1949, 0
      %1973 = vmatpush.bf16.msra.mxu0 0
      %1974 = vmatpush.bf16.msra.mxu0 0
      %1975 = vmatpush.bf16.msra.mxu0 0
      %1976 = vmatpush.bf16.msra.mxu0 0
      %1977 = vmatpush.bf16.msra.mxu0 0
      %1978 = vmatpush.bf16.msra.mxu0 0
      %1979 = vmatpush.bf16.msra.mxu0 %v1967
      %1980 = vmatpush.bf16.msra.mxu0 %v1966
      %1981 = vmatmul.bf16.gmra.mxu0 %v1971
      %v1982 = vpop.f32.mrf.mxu0
      %v1983 = vadd.f32 %v1956, %v1982
      %v1984 = vpop.f32.mrf.mxu0
      %v1985 = vadd.f32 %v1956, %v1984
      %1986 = vdwg.mxu0
      %v1989 = vrot.slane %v1983, 4
      %v1990 = vrot.slane %v1985, 4
      %v1993 = vld [vmem:[%s301] sm:$0xf]
      %v1994 = vld [vmem:[%s301 + $0x4] sm:$0xf]
      %v1995 = vld [vmem:[%s301 + $0x8] sm:$0xf]
      %v1996 = vld [vmem:[%s301 + $0xc] sm:$0xf]
      %v1997 = vadd.f32 %v1983, %v1993
      %v1998 = vadd.f32 %v1989, %v1994
      %v1999 = vadd.f32 %v1985, %v1995
      %v2000 = vadd.f32 %v1990, %v1996
      %vm2001 = vcmask 257024
      %2002 = vst.msk [vmem:[%s307] sm:$0xf] %vm2001, %v1997
      %2003 = vst.msk [vmem:[%s307 + $0x4] sm:$0xf] %vm2001, %v1998
      %2004 = vst.msk [vmem:[%s307 + $0x8] sm:$0xf] %vm2001, %v1999
      %2005 = vst.msk [vmem:[%s307 + $0xc] sm:$0xf] %vm2001, %v2000
      %s2006 = smul.u32 4, %s19
      %p2007 = scmp.lt.s32.totalorder %s2006, 7
      %s2008 = scalar_select %p2007, %s2006, 7
      %s2009 = smul.addr %s2008, 4
      %s2010 = scalar_lea.vmem %s8, %s2009
      // Predicated region
      $region53: #{block_forward.3} parent=51 // pred_check
        %p2011 = pneg %p210
      $region54: #{block_forward.3} parent=51 // pred_check_branch
        %2013 = sbr.rel (%p2011) target = $region56
      $region55: #{block_forward.3} parent=51 // pred_region
        %s2014 = smul.u32 4, %s19
      $region56: #{block_forward.3} parent=51 // pred_fallthru
        _
    $region52: #{block_forward.3} parent=5 // pred_fallthru
      _
    %p2015 = scmp.le.s32.totalorder 2, %s14
    // Predicated region
    $region57: #{block_forward.3} parent=5 // pred_check
      %p2016 = pneg %p2015
    $region58: #{block_forward.3} parent=5 // pred_check_branch
      %2018 = sbr.rel (%p2016) target = $region60
    $region59: #{block_forward.3} parent=5 // pred_region
      %s2019 = ssub.s32 %s14, 2
      // Predicated region
      $region61: #{block_forward.3} parent=59 // pred_check
        %p2020 = pneg %p216
      $region62: #{block_forward.3} parent=59 // pred_check_branch
        %2022 = sbr.rel (%p2020) target = $region64
      $region63: #{block_forward.3} parent=59 // pred_region
        %s2023 = smul.u32 4, %s20
        %p2024 = scmp.lt.s32.totalorder %s2023, 7
        %s2025 = scalar_select %p2024, %s2023, 7
        %s2026 = smul.addr %s2025, 4
        %s2027 = scalar_lea.vmem %s8, %s2026
      $region64: #{block_forward.3} parent=59 // pred_fallthru
        _
    $region60: #{block_forward.3} parent=5 // pred_fallthru
      _
  $region6: #{block_forward.3} parent=0 // loop_footer
    %s18 = sadd.s32 1, %s14
  $region7: #{block_forward.3} parent=0 // loop_footer_branch
    %13 = sbr.rel target = $region3
  $region8: #{block_forward.3} parent=0 // loop_exit
    _

// kernel: block_forward.4
$region0: #{block_forward.4}
  #allocation0 [shape = 'u32[]', space=smem, size = 0x4, offset = 0x4, fixed_abs, tag = 'smem constant byte address 0x4 - core index']
  #allocation1 [shape = 'u32[72,128]{1,0:T(1,128)}', space=vmem, size = 0x9000, scoped, tag = 'internal scratch']
  #allocation2 [shape = 'bf16[4,5,96]{2,1,0:T(8,128)(2,1)}', space=vmem, size = 0x2000, scoped, tag = 'scratch operand']
  %s0 = inlined_call_operand.vmem [shape: f32[8,5,32], index: 0, kind: input, shape index: {}]
  %s1 = inlined_call_operand.vmem [shape: f32[1,32], index: 1, kind: input, shape index: {}]
  %s2 = inlined_call_operand.vmem [shape: f32[1,32], index: 2, kind: input, shape index: {}]
  %s3 = inlined_call_operand.vmem [shape: bf16[32,96], index: 3, kind: input, shape index: {}]
  %s4 = inlined_call_operand.vmem [shape: bf16[32,32], index: 4, kind: input, shape index: {}]
  %s5 = inlined_call_operand.vmem [shape: f32[1,32], index: 5, kind: input, shape index: {}]
  %s6 = inlined_call_operand.vmem [shape: bf16[8,5,32], index: 6, kind: output, shape index: {}]
  %s7 = sld [smem:[#allocation0]]
  $region57: #{block_forward.4} parent=0
    _
  %s9 = ssub.s32 1, %s7
  %s10 = scalar_select 0, %s9, %s7
  loop: start=0, step=1, limit=4
  $region2: #{block_forward.4} parent=0 // loop_pre_header
    _
  $region3: #{block_forward.4} parent=0 // loop_header
    %s12 = sphi 0, %s16
    %p13 = scmp.ge.s32.totalorder %s12, 4
    %s22 = sphi 0, %s24
    %s25 = sphi 0, %s22
    %s26 = sphi 0, %s25
    %s42 = sphi 0, %s26
    %s46 = sphi 0, %s46
    %s48 = sphi 0, %s46
    %s49 = sphi 0, %s48
    %s63 = sphi 0, %s49
    %s67 = sphi 0, %s67
    %s69 = sphi 0, %s67
    %s70 = sphi 0, %s69
    %s84 = sphi 0, %s70
    %s88 = sphi 0, %s88
    %s90 = sphi 0, %s88
    %s91 = sphi 0, %s90
    %s105 = sphi 0, %s91
    %s109 = sphi 0, %s109
    %s111 = sphi 0, %s109
    %s112 = sphi 0, %s111
    %s126 = sphi 0, %s112
    %s130 = sphi 0, %s130
    %s132 = sphi 0, %s130
    %s133 = sphi 0, %s132
    %s147 = sphi 0, %s133
    %s153 = sphi 0, %s155
    %s156 = sphi 0, %s153
    %s157 = sphi 0, %s156
    %s173 = sphi 0, %s157
  $region4: #{block_forward.4} parent=0 // loop_header_branch
    %15 = sbr.rel (%p13) target = $region8
  $region5: #{block_forward.4} parent=0 // loop_body
    %s17 = ssub.s32 %s12, 1
    %s18 = ssub.s32 %s12, 2
    %s19 = sadd.s32 %s12, 1
    %s20 = ssub.s32 %s12, %s19
    %p21 = scmp.eq.s32.totalorder %s20, 0
    %s23 = sadd.s32 %s22, 1
    %s24 = scalar_select %p21, %s22, %s23
    %p27 = pneg %p21
    %p28 = scmp.eq.s32.totalorder %s12, 1
    %p29 = por %p27, %p28
    %p30 = scmp.ne.s32.totalorder %s22, %s25
    %p31 = scmp.eq.s32.totalorder %s12, 0
    %p32 = por %p30, %p31
    %p33 = scmp.ne.s32.totalorder %s22, %s25
    %p34 = scmp.eq.s32.totalorder %s17, 1
    %p35 = por %p33, %p34
    %p36 = scmp.ne.s32.totalorder %s25, %s26
    %p37 = scmp.eq.s32.totalorder %s17, 0
    %p38 = por %p36, %p37
    %p39 = scmp.ne.s32.totalorder %s25, %s26
    %p40 = scmp.eq.s32.totalorder %s18, 1
    %p41 = por %p39, %p40
    %p43 = scmp.ne.s32.totalorder %s26, %s42
    %p44 = scmp.eq.s32.totalorder %s18, 0
    %p45 = por %p43, %p44
    %s47 = sadd.s32 %s46, 1
    %p50 = scmp.eq.s32.totalorder %s12, 1
    %p51 = scmp.ne.s32.totalorder %s46, %s48
    %p52 = scmp.eq.s32.totalorder %s12, 0
    %p53 = por %p51, %p52
    %p54 = scmp.ne.s32.totalorder %s46, %s48
    %p55 = scmp.eq.s32.totalorder %s17, 1
    %p56 = por %p54, %p55
    %p57 = scmp.ne.s32.totalorder %s48, %s49
    %p58 = scmp.eq.s32.totalorder %s17, 0
    %p59 = por %p57, %p58
    %p60 = scmp.ne.s32.totalorder %s48, %s49
    %p61 = scmp.eq.s32.totalorder %s18, 1
    %p62 = por %p60, %p61
    %p64 = scmp.ne.s32.totalorder %s49, %s63
    %p65 = scmp.eq.s32.totalorder %s18, 0
    %p66 = por %p64, %p65
    %s68 = sadd.s32 %s67, 1
    %p71 = scmp.eq.s32.totalorder %s12, 1
    %p72 = scmp.ne.s32.totalorder %s67, %s69
    %p73 = scmp.eq.s32.totalorder %s12, 0
    %p74 = por %p72, %p73
    %p75 = scmp.ne.s32.totalorder %s67, %s69
    %p76 = scmp.eq.s32.totalorder %s17, 1
    %p77 = por %p75, %p76
    %p78 = scmp.ne.s32.totalorder %s69, %s70
    %p79 = scmp.eq.s32.totalorder %s17, 0
    %p80 = por %p78, %p79
    %p81 = scmp.ne.s32.totalorder %s69, %s70
    %p82 = scmp.eq.s32.totalorder %s18, 1
    %p83 = por %p81, %p82
    %p85 = scmp.ne.s32.totalorder %s70, %s84
    %p86 = scmp.eq.s32.totalorder %s18, 0
    %p87 = por %p85, %p86
    %s89 = sadd.s32 %s88, 1
    %p92 = scmp.eq.s32.totalorder %s12, 1
    %p93 = scmp.ne.s32.totalorder %s88, %s90
    %p94 = scmp.eq.s32.totalorder %s12, 0
    %p95 = por %p93, %p94
    %p96 = scmp.ne.s32.totalorder %s88, %s90
    %p97 = scmp.eq.s32.totalorder %s17, 1
    %p98 = por %p96, %p97
    %p99 = scmp.ne.s32.totalorder %s90, %s91
    %p100 = scmp.eq.s32.totalorder %s17, 0
    %p101 = por %p99, %p100
    %p102 = scmp.ne.s32.totalorder %s90, %s91
    %p103 = scmp.eq.s32.totalorder %s18, 1
    %p104 = por %p102, %p103
    %p106 = scmp.ne.s32.totalorder %s91, %s105
    %p107 = scmp.eq.s32.totalorder %s18, 0
    %p108 = por %p106, %p107
    %s110 = sadd.s32 %s109, 1
    %p113 = scmp.eq.s32.totalorder %s12, 1
    %p114 = scmp.ne.s32.totalorder %s109, %s111
    %p115 = scmp.eq.s32.totalorder %s12, 0
    %p116 = por %p114, %p115
    %p117 = scmp.ne.s32.totalorder %s109, %s111
    %p118 = scmp.eq.s32.totalorder %s17, 1
    %p119 = por %p117, %p118
    %p120 = scmp.ne.s32.totalorder %s111, %s112
    %p121 = scmp.eq.s32.totalorder %s17, 0
    %p122 = por %p120, %p121
    %p123 = scmp.ne.s32.totalorder %s111, %s112
    %p124 = scmp.eq.s32.totalorder %s18, 1
    %p125 = por %p123, %p124
    %p127 = scmp.ne.s32.totalorder %s112, %s126
    %p128 = scmp.eq.s32.totalorder %s18, 0
    %p129 = por %p127, %p128
    %s131 = sadd.s32 %s130, 1
    %p134 = scmp.eq.s32.totalorder %s12, 1
    %p135 = scmp.ne.s32.totalorder %s130, %s132
    %p136 = scmp.eq.s32.totalorder %s12, 0
    %p137 = por %p135, %p136
    %p138 = scmp.ne.s32.totalorder %s130, %s132
    %p139 = scmp.eq.s32.totalorder %s17, 1
    %p140 = por %p138, %p139
    %p141 = scmp.ne.s32.totalorder %s132, %s133
    %p142 = scmp.eq.s32.totalorder %s17, 0
    %p143 = por %p141, %p142
    %p144 = scmp.ne.s32.totalorder %s132, %s133
    %p145 = scmp.eq.s32.totalorder %s18, 1
    %p146 = por %p144, %p145
    %p148 = scmp.ne.s32.totalorder %s133, %s147
    %p149 = scmp.eq.s32.totalorder %s18, 0
    %p150 = por %p148, %p149
    %s151 = ssub.s32 %s12, %s19
    %p152 = scmp.eq.s32.totalorder %s151, 0
    %s154 = sadd.s32 %s153, 1
    %s155 = scalar_select %p152, %s153, %s154
    %p158 = pneg %p152
    %p159 = scmp.eq.s32.totalorder %s12, 1
    %p160 = por %p158, %p159
    %p161 = scmp.ne.s32.totalorder %s153, %s156
    %p162 = scmp.eq.s32.totalorder %s12, 0
    %p163 = por %p161, %p162
    %p164 = scmp.ne.s32.totalorder %s153, %s156
    %p165 = scmp.eq.s32.totalorder %s17, 1
    %p166 = por %p164, %p165
    %p167 = scmp.ne.s32.totalorder %s156, %s157
    %p168 = scmp.eq.s32.totalorder %s17, 0
    %p169 = por %p167, %p168
    %p170 = scmp.ne.s32.totalorder %s156, %s157
    %p171 = scmp.eq.s32.totalorder %s18, 1
    %p172 = por %p170, %p171
    %p174 = scmp.ne.s32.totalorder %s157, %s173
    %p175 = scmp.eq.s32.totalorder %s18, 0
    %p176 = por %p174, %p175
    %p177 = scmp.le.s32.totalorder 1, %s12
    %p178 = scmp.lt.s32.totalorder %s12, 3
    %p179 = pnand %p177, %p178
    %p180 = pneg %p179
    // Predicated region
    $region9: #{block_forward.4} parent=5 // pred_check
      _
    $region10: #{block_forward.4} parent=5 // pred_check_branch
      %182 = sbr.rel (%p179) target = $region12
    $region11: #{block_forward.4} parent=5 // pred_region
      %s183 = ssub.s32 %s12, 1
      // Predicated region
      $region13: #{block_forward.4} parent=11 // pred_check
        %p184 = pneg %p59
      $region14: #{block_forward.4} parent=11 // pred_check_branch
        %186 = sbr.rel (%p184) target = $region16
      $region15: #{block_forward.4} parent=11 // pred_region
        _
      $region16: #{block_forward.4} parent=11 // pred_fallthru
        _
      // Predicated region
      $region17: #{block_forward.4} parent=11 // pred_check
        %p187 = pneg %p80
      $region18: #{block_forward.4} parent=11 // pred_check_branch
        %189 = sbr.rel (%p187) target = $region20
      $region19: #{block_forward.4} parent=11 // pred_region
        _
      $region20: #{block_forward.4} parent=11 // pred_fallthru
        _
      // Predicated region
      $region21: #{block_forward.4} parent=11 // pred_check
        %p190 = pneg %p101
      $region22: #{block_forward.4} parent=11 // pred_check_branch
        %192 = sbr.rel (%p190) target = $region24
      $region23: #{block_forward.4} parent=11 // pred_region
        _
      $region24: #{block_forward.4} parent=11 // pred_fallthru
        _
      // Predicated region
      $region25: #{block_forward.4} parent=11 // pred_check
        %p193 = pneg %p122
      $region26: #{block_forward.4} parent=11 // pred_check_branch
        %195 = sbr.rel (%p193) target = $region28
      $region27: #{block_forward.4} parent=11 // pred_region
        _
      $region28: #{block_forward.4} parent=11 // pred_fallthru
        _
      // Predicated region
      $region29: #{block_forward.4} parent=11 // pred_check
        %p196 = pneg %p143
      $region30: #{block_forward.4} parent=11 // pred_check_branch
        %198 = sbr.rel (%p196) target = $region32
      $region31: #{block_forward.4} parent=11 // pred_region
        _
      $region32: #{block_forward.4} parent=11 // pred_fallthru
        _
    $region12: #{block_forward.4} parent=5 // pred_fallthru
      _
    %p199 = scmp.lt.s32.totalorder %s12, 2
    // Predicated region
    $region33: #{block_forward.4} parent=5 // pred_check
      %p200 = pneg %p199
    $region34: #{block_forward.4} parent=5 // pred_check_branch
      %202 = sbr.rel (%p200) target = $region36
    $region35: #{block_forward.4} parent=5 // pred_region
      // Predicated region
      $region37: #{block_forward.4} parent=35 // pred_check
        %p203 = pneg %p32
      $region38: #{block_forward.4} parent=35 // pred_check_branch
        %205 = sbr.rel (%p203) target = $region40
      $region39: #{block_forward.4} parent=35 // pred_region
        %s206 = smul.u32 4, %s12
        %p207 = scmp.lt.s32.totalorder %s206, 7
        %s208 = scalar_select %p207, %s206, 7
        %s209 = smul.addr %s208, 8
        %s210 = scalar_lea.vmem %s0, %s209
        %s211 = smul.u32 4, %s12
      $region40: #{block_forward.4} parent=35 // pred_fallthru
        _
    $region36: #{block_forward.4} parent=5 // pred_fallthru
      _
    %p212 = scmp.le.s32.totalorder 1, %s12
    %p213 = scmp.lt.s32.totalorder %s12, 3
    %p214 = pnand %p212, %p213
    %p215 = pneg %p214
    // Predicated region
    $region41: #{block_forward.4} parent=5 // pred_check
      _
    $region42: #{block_forward.4} parent=5 // pred_check_branch
      %217 = sbr.rel (%p214) target = $region44
    $region43: #{block_forward.4} parent=5 // pred_region
      %s218 = ssub.s32 %s12, 1
      %s219 = smul.u32 4, %s17
      %p220 = scmp.lt.s32.totalorder %s219, 7
      %s221 = scalar_select %p220, %s219, 7
      %s222 = smul.addr %s221, 8
      %s223 = scalar_lea.vmem %s0, %s222
      %p224 = pneg %p38
      %p225 = pneg %p35
      %p226 = pneg %p59
      %p227 = pneg %p56
      %p228 = pneg %p80
      %p229 = pneg %p77
      %p230 = pneg %p101
      %p231 = pneg %p98
      %p232 = pneg %p122
      %p233 = pneg %p119
      %p234 = pneg %p143
      %p235 = pneg %p140
      %p236 = pneg %p169
      %p237 = pneg %p166
      %s238 = smul.u32 4, %s17
      %p239 = scmp.lt.s32.totalorder %s238, 7
      %s240 = scalar_select %p239, %s238, 7
      %s241 = smul.addr %s240, 4
      %s242 = scalar_lea.vmem %s6, %s241
      %s243 = smul.u32 4, %s17
      %p244 = scmp.lt.s32.totalorder %s243, 7
      %s245 = scalar_select %p244, %s243, 7
      %s246 = smul.addr %s245, 8
      %s247 = scalar_lea.vmem %s0, %s246
      %s248 = smul.u32 4, %s17
      %s249 = smul.u32 4, %s17
      %p250 = scmp.lt.s32.totalorder %s249, 7
      %s251 = scalar_select %p250, %s249, 7
      %s252 = smul.addr %s251, 4
      %s253 = scalar_lea.vmem %s6, %s252
      %s254 = smul.u32 4, %s17
      %v256 = vld [vmem:[%s247] sm:$0x1f]
      %v257 = vld [vmem:[%s247 + $0x8] sm:$0x1f]
      %v258 = vld [vmem:[%s247 + $0x10] sm:$0x1f]
      %v259 = vld [vmem:[%s247 + $0x18] sm:$0x1f]
      %v264 = vrot.slane %v256, 1
      %v265 = vrot.slane %v256, 2
      %v266 = vrot.slane %v256, 3
      %v267 = vrot.slane %v256, 4
      %v268 = vrot.slane %v257, 1
      %v269 = vrot.slane %v257, 2
      %v270 = vrot.slane %v257, 3
      %v271 = vrot.slane %v257, 4
      %v272 = vrot.slane %v258, 1
      %v273 = vrot.slane %v258, 2
      %v274 = vrot.slane %v258, 3
      %v275 = vrot.slane %v258, 4
      %v276 = vrot.slane %v259, 1
      %v277 = vrot.slane %v259, 2
      %v278 = vrot.slane %v259, 3
      %v279 = vrot.slane %v259, 4
      %v296 = vld [vmem:[%s1] sm:$0x1]
      %v297 = vld [vmem:[%s2] sm:$0x1]
      %298 = vst [vmem:[#allocation1] ss:$9 sm:$0xff] %v256
      %s299 = scalar_lea.vmem [#allocation1], 1
      %300 = vst [vmem:[%s299] ss:$9 sm:$0xff] %v264
      %s301 = scalar_lea.vmem [#allocation1], 2
      %302 = vst [vmem:[%s301] ss:$9 sm:$0xff] %v265
      %s303 = scalar_lea.vmem [#allocation1], 3
      %304 = vst [vmem:[%s303] ss:$9 sm:$0xff] %v266
      %s305 = scalar_lea.vmem [#allocation1], 4
      %306 = vst [vmem:[%s305] ss:$9 sm:$0xff] %v267
      %s307 = scalar_lea.vmem [#allocation1], 5
      %308 = vst [vmem:[%s307] ss:$9 sm:$0xff] %v257
      %s309 = scalar_lea.vmem [#allocation1], 6
      %310 = vst [vmem:[%s309] ss:$9 sm:$0xff] %v268
      %s311 = scalar_lea.vmem [#allocation1], 7
      %312 = vst [vmem:[%s311] ss:$9 sm:$0xff] %v269
      %v313 = vld [vmem:[#allocation1] sm:$0xff]
      %314 = vst [vmem:[#allocation1] ss:$9 sm:$0xff] %v270
      %315 = vst [vmem:[%s299] ss:$9 sm:$0xff] %v271
      %316 = vst [vmem:[%s301] ss:$9 sm:$0xff] %v258
      %317 = vst [vmem:[%s303] ss:$9 sm:$0xff] %v272
      %318 = vst [vmem:[%s305] ss:$9 sm:$0xff] %v273
      %319 = vst [vmem:[%s307] ss:$9 sm:$0xff] %v274
      %320 = vst [vmem:[%s309] ss:$9 sm:$0xff] %v275
      %321 = vst [vmem:[%s311] ss:$9 sm:$0xff] %v259
      %v322 = vld [vmem:[#allocation1] sm:$0xff]
      %323 = vst [vmem:[#allocation1] ss:$9 sm:$0xff] %v276
      %324 = vst [vmem:[%s299] ss:$9 sm:$0xff] %v277
      %325 = vst [vmem:[%s301] ss:$9 sm:$0xff] %v278
      %326 = vst [vmem:[%s303] ss:$9 sm:$0xff] %v279
      %v327 = vld [vmem:[#allocation1] sm:$0xff]
      %vm331 = vcmask 261120
      %v332 = vsel %vm331, %v313, 0.0
      %333 = vadd.xlane.f32.xlu0 %v332
      %v334 = vpop.xlane.xlu0 %333
      %v335 = vsel %vm331, %v322, 0.0
      %336 = vadd.xlane.f32.xlu0 %v335
      %v337 = vpop.xlane.xlu0 %336
      %vm338 = vcmask 257024
      %v339 = vsel %vm338, %v327, 0.0
      %340 = vadd.xlane.f32.xlu0 %v339
      %v341 = vpop.xlane.xlu0 %340
      %v342 = vrcp.pop 32.0
      %v343 = vmul.f32 32.0, %v342
      %v344 = vsub.f32 1.0, %v343
      %v345 = vmul.f32 %v342, %v344
      %v346 = vadd.f32 %v342, %v345
      %vm347 = vweird.f32 %v342
      %v348 = vsel %vm347, %v342, %v346
      %v349 = vmul.f32 %v334, %v348
      %v350 = vmul.f32 %v337, %v348
      %v351 = vmul.f32 %v341, %v348
      %v355 = vperm.slane %v349, 0
      %v356 = vperm.slane %v349, 1
      %v357 = vperm.slane %v349, 2
      %v358 = vperm.slane %v349, 3
      %v359 = vperm.slane %v349, 4
      %v360 = vperm.slane %v349, 5
      %v361 = vperm.slane %v349, 6
      %v362 = vperm.slane %v349, 7
      %v363 = vperm.slane %v350, 0
      %v364 = vperm.slane %v350, 1
      %v365 = vperm.slane %v350, 2
      %v366 = vperm.slane %v350, 3
      %v367 = vperm.slane %v350, 4
      %v368 = vperm.slane %v350, 5
      %v369 = vperm.slane %v350, 6
      %v370 = vperm.slane %v350, 7
      %v371 = vperm.slane %v351, 0
      %v372 = vperm.slane %v351, 1
      %v373 = vperm.slane %v351, 2
      %v374 = vperm.slane %v351, 3
      %v395 = vsub.f32 %v256, %v355
      %v396 = vsub.f32 %v264, %v356
      %v397 = vsub.f32 %v265, %v357
      %v398 = vsub.f32 %v266, %v358
      %v399 = vsub.f32 %v267, %v359
      %v400 = vsub.f32 %v257, %v360
      %v401 = vsub.f32 %v268, %v361
      %v402 = vsub.f32 %v269, %v362
      %v403 = vsub.f32 %v270, %v363
      %v404 = vsub.f32 %v271, %v364
      %v405 = vsub.f32 %v258, %v365
      %v406 = vsub.f32 %v272, %v366
      %v407 = vsub.f32 %v273, %v367
      %v408 = vsub.f32 %v274, %v368
      %v409 = vsub.f32 %v275, %v369
      %v410 = vsub.f32 %v259, %v370
      %v411 = vsub.f32 %v276, %v371
      %v412 = vsub.f32 %v277, %v372
      %v413 = vsub.f32 %v278, %v373
      %v414 = vsub.f32 %v279, %v374
      %v415 = vmul.f32 %v395, %v395
      %v416 = vmul.f32 %v396, %v396
      %v417 = vmul.f32 %v397, %v397
      %v418 = vmul.f32 %v398, %v398
      %v419 = vmul.f32 %v399, %v399
      %v420 = vmul.f32 %v400, %v400
      %v421 = vmul.f32 %v401, %v401
      %v422 = vmul.f32 %v402, %v402
      %v423 = vmul.f32 %v403, %v403
      %v424 = vmul.f32 %v404, %v404
      %v425 = vmul.f32 %v405, %v405
      %v426 = vmul.f32 %v406, %v406
      %v427 = vmul.f32 %v407, %v407
      %v428 = vmul.f32 %v408, %v408
      %v429 = vmul.f32 %v409, %v409
      %v430 = vmul.f32 %v410, %v410
      %v431 = vmul.f32 %v411, %v411
      %v432 = vmul.f32 %v412, %v412
      %v433 = vmul.f32 %v413, %v413
      %v434 = vmul.f32 %v414, %v414
      %455 = vst [vmem:[#allocation1] ss:$9 sm:$0xff] %v415
      %s456 = scalar_lea.vmem [#allocation1], 1
      %457 = vst [vmem:[%s456] ss:$9 sm:$0xff] %v416
      %s458 = scalar_lea.vmem [#allocation1], 2
      %459 = vst [vmem:[%s458] ss:$9 sm:$0xff] %v417
      %s460 = scalar_lea.vmem [#allocation1], 3
      %461 = vst [vmem:[%s460] ss:$9 sm:$0xff] %v418
      %s462 = scalar_lea.vmem [#allocation1], 4
      %463 = vst [vmem:[%s462] ss:$9 sm:$0xff] %v419
      %s464 = scalar_lea.vmem [#allocation1], 5
      %465 = vst [vmem:[%s464] ss:$9 sm:$0xff] %v420
      %s466 = scalar_lea.vmem [#allocation1], 6
      %467 = vst [vmem:[%s466] ss:$9 sm:$0xff] %v421
      %s468 = scalar_lea.vmem [#allocation1], 7
      %469 = vst [vmem:[%s468] ss:$9 sm:$0xff] %v422
      %v470 = vld [vmem:[#allocation1] sm:$0xff]
      %471 = vst [vmem:[#allocation1] ss:$9 sm:$0xff] %v423
      %472 = vst [vmem:[%s456] ss:$9 sm:$0xff] %v424
      %473 = vst [vmem:[%s458] ss:$9 sm:$0xff] %v425
      %474 = vst [vmem:[%s460] ss:$9 sm:$0xff] %v426
      %475 = vst [vmem:[%s462] ss:$9 sm:$0xff] %v427
      %476 = vst [vmem:[%s464] ss:$9 sm:$0xff] %v428
      %477 = vst [vmem:[%s466] ss:$9 sm:$0xff] %v429
      %478 = vst [vmem:[%s468] ss:$9 sm:$0xff] %v430
      %v479 = vld [vmem:[#allocation1] sm:$0xff]
      %480 = vst [vmem:[#allocation1] ss:$9 sm:$0xff] %v431
      %481 = vst [vmem:[%s456] ss:$9 sm:$0xff] %v432
      %482 = vst [vmem:[%s458] ss:$9 sm:$0xff] %v433
      %483 = vst [vmem:[%s460] ss:$9 sm:$0xff] %v434
      %v484 = vld [vmem:[#allocation1] sm:$0xff]
      %v488 = vsel %vm331, %v470, 0.0
      %489 = vadd.xlane.f32.xlu0 %v488
      %v490 = vpop.xlane.xlu0 %489
      %v491 = vsel %vm331, %v479, 0.0
      %492 = vadd.xlane.f32.xlu0 %v491
      %v493 = vpop.xlane.xlu0 %492
      %v494 = vsel %vm338, %v484, 0.0
      %495 = vadd.xlane.f32.xlu0 %v494
      %v496 = vpop.xlane.xlu0 %495
      %v497 = vmul.f32 %v490, %v348
      %v498 = vmul.f32 %v493, %v348
      %v499 = vmul.f32 %v496, %v348
      %v500 = vadd.f32 %v497, 1e-05
      %v501 = vadd.f32 %v498, 1e-05
      %v502 = vadd.f32 %v499, 1e-05
      %v503 = vrsqrt.pop %v500
      %v504 = vmul.f32 %v503, %v500
      %v505 = vmul.f32 %v504, %v503
      %v506 = vmul.f32 0.5, %v505
      %v507 = vsub.f32 1.5, %v506
      %v508 = vmul.f32 %v503, %v507
      %vm509 = vweird.f32 %v500
      %vm510 = vweird.f32 %v503
      %vm511 = vmor %vm509, %vm510
      %v512 = vsel %vm511, %v503, %v508
      %v513 = vrsqrt.pop %v501
      %v514 = vmul.f32 %v513, %v501
      %v515 = vmul.f32 %v514, %v513
      %v516 = vmul.f32 0.5, %v515
      %v517 = vsub.f32 1.5, %v516
      %v518 = vmul.f32 %v513, %v517
      %vm519 = vweird.f32 %v501
      %vm520 = vweird.f32 %v513
      %vm521 = vmor %vm519, %vm520
      %v522 = vsel %vm521, %v513, %v518
      %v523 = vrsqrt.pop %v502
      %v524 = vmul.f32 %v523, %v502
      %v525 = vmul.f32 %v524, %v523
      %v526 = vmul.f32 0.5, %v525
      %v527 = vsub.f32 1.5, %v526
      %v528 = vmul.f32 %v523, %v527
      %vm529 = vweird.f32 %v502
      %vm530 = vweird.f32 %v523
      %vm531 = vmor %vm529, %vm530
      %v532 = vsel %vm531, %v523, %v528
      %v536 = vperm.slane %v512, 0
      %v537 = vperm.slane %v512, 1
      %v538 = vperm.slane %v512, 2
      %v539 = vperm.slane %v512, 3
      %v540 = vperm.slane %v512, 4
      %v541 = vperm.slane %v512, 5
      %v542 = vperm.slane %v512, 6
      %v543 = vperm.slane %v512, 7
      %v544 = vperm.slane %v522, 0
      %v545 = vperm.slane %v522, 1
      %v546 = vperm.slane %v522, 2
      %v547 = vperm.slane %v522, 3
      %v548 = vperm.slane %v522, 4
      %v549 = vperm.slane %v522, 5
      %v550 = vperm.slane %v522, 6
      %v551 = vperm.slane %v522, 7
      %v552 = vperm.slane %v532, 0
      %v553 = vperm.slane %v532, 1
      %v554 = vperm.slane %v532, 2
      %v555 = vperm.slane %v532, 3
      %v576 = vmul.f32 %v395, %v536
      %v577 = vmul.f32 %v396, %v537
      %v578 = vmul.f32 %v397, %v538
      %v579 = vmul.f32 %v398, %v539
      %v580 = vmul.f32 %v399, %v540
      %v581 = vmul.f32 %v400, %v541
      %v582 = vmul.f32 %v401, %v542
      %v583 = vmul.f32 %v402, %v543
      %v584 = vmul.f32 %v403, %v544
      %v585 = vmul.f32 %v404, %v545
      %v586 = vmul.f32 %v405, %v546
      %v587 = vmul.f32 %v406, %v547
      %v588 = vmul.f32 %v407, %v548
      %v589 = vmul.f32 %v408, %v549
      %v590 = vmul.f32 %v409, %v550
      %v591 = vmul.f32 %v410, %v551
      %v592 = vmul.f32 %v411, %v552
      %v593 = vmul.f32 %v412, %v553
      %v594 = vmul.f32 %v413, %v554
      %v595 = vmul.f32 %v414, %v555
      %v597 = vperm.slane %v296, 0
      %v599 = vrot.slane %v597, 1
      %v600 = vrot.slane %v597, 2
      %v601 = vrot.slane %v597, 3
      %v602 = vrot.slane %v597, 4
      %v603 = vrot.slane %v597, 5
      %v604 = vrot.slane %v597, 6
      %v605 = vrot.slane %v597, 7
      %v613 = vmul.f32 %v576, %v597
      %v614 = vmul.f32 %v577, %v599
      %v615 = vmul.f32 %v578, %v600
      %v616 = vmul.f32 %v579, %v601
      %v617 = vmul.f32 %v580, %v602
      %v618 = vmul.f32 %v581, %v603
      %v619 = vmul.f32 %v582, %v604
      %v620 = vmul.f32 %v583, %v605
      %v621 = vmul.f32 %v584, %v597
      %v622 = vmul.f32 %v585, %v599
      %v623 = vmul.f32 %v586, %v600
      %v624 = vmul.f32 %v587, %v601
      %v625 = vmul.f32 %v588, %v602
      %v626 = vmul.f32 %v589, %v603
      %v627 = vmul.f32 %v590, %v604
      %v628 = vmul.f32 %v591, %v605
      %v629 = vmul.f32 %v592, %v597
      %v630 = vmul.f32 %v593, %v599
      %v631 = vmul.f32 %v594, %v600
      %v632 = vmul.f32 %v595, %v601
      %v634 = vperm.slane %v297, 0
      %v636 = vrot.slane %v634, 1
      %v637 = vrot.slane %v634, 2
      %v638 = vrot.slane %v634, 3
      %v639 = vrot.slane %v634, 4
      %v640 = vrot.slane %v634, 5
      %v641 = vrot.slane %v634, 6
      %v642 = vrot.slane %v634, 7
      %v650 = vadd.f32 %v613, %v634
      %v651 = vadd.f32 %v614, %v636
      %v652 = vadd.f32 %v615, %v637
      %v653 = vadd.f32 %v616, %v638
      %v654 = vadd.f32 %v617, %v639
      %v655 = vadd.f32 %v618, %v640
      %v656 = vadd.f32 %v619, %v641
      %v657 = vadd.f32 %v620, %v642
      %v658 = vadd.f32 %v621, %v634
      %v659 = vadd.f32 %v622, %v636
      %v660 = vadd.f32 %v623, %v637
      %v661 = vadd.f32 %v624, %v638
      %v662 = vadd.f32 %v625, %v639
      %v663 = vadd.f32 %v626, %v640
      %v664 = vadd.f32 %v627, %v641
      %v665 = vadd.f32 %v628, %v642
      %v666 = vadd.f32 %v629, %v634
      %v667 = vadd.f32 %v630, %v636
      %v668 = vadd.f32 %v631, %v637
      %v669 = vadd.f32 %v632, %v638
      %690 = vst [vmem:[#allocation1] ss:$9 sm:$0xff] %v650
      %s691 = scalar_lea.vmem [#allocation1], 1
      %692 = vst [vmem:[%s691] ss:$9 sm:$0xff] %v651
      %s693 = scalar_lea.vmem [#allocation1], 2
      %694 = vst [vmem:[%s693] ss:$9 sm:$0xff] %v652
      %s695 = scalar_lea.vmem [#allocation1], 3
      %696 = vst [vmem:[%s695] ss:$9 sm:$0xff] %v653
      %s697 = scalar_lea.vmem [#allocation1], 4
      %698 = vst [vmem:[%s697] ss:$9 sm:$0xff] %v654
      %s699 = scalar_lea.vmem [#allocation1], 5
      %700 = vst [vmem:[%s699] ss:$9 sm:$0xff] %v655
      %s701 = scalar_lea.vmem [#allocation1], 6
      %702 = vst [vmem:[%s701] ss:$9 sm:$0xff] %v656
      %s703 = scalar_lea.vmem [#allocation1], 7
      %704 = vst [vmem:[%s703] ss:$9 sm:$0xff] %v657
      %v705 = vld [vmem:[#allocation1] sm:$0xff]
      %706 = vst [vmem:[#allocation1] ss:$9 sm:$0xff] %v658
      %707 = vst [vmem:[%s691] ss:$9 sm:$0xff] %v659
      %708 = vst [vmem:[%s693] ss:$9 sm:$0xff] %v660
      %709 = vst [vmem:[%s695] ss:$9 sm:$0xff] %v661
      %710 = vst [vmem:[%s697] ss:$9 sm:$0xff] %v662
      %711 = vst [vmem:[%s699] ss:$9 sm:$0xff] %v663
      %712 = vst [vmem:[%s701] ss:$9 sm:$0xff] %v664
      %713 = vst [vmem:[%s703] ss:$9 sm:$0xff] %v665
      %v714 = vld [vmem:[#allocation1] sm:$0xff]
      %715 = vst [vmem:[#allocation1] ss:$9 sm:$0xff] %v666
      %716 = vst [vmem:[%s691] ss:$9 sm:$0xff] %v667
      %717 = vst [vmem:[%s693] ss:$9 sm:$0xff] %v668
      %718 = vst [vmem:[%s695] ss:$9 sm:$0xff] %v669
      %v719 = vld [vmem:[#allocation1] sm:$0xff]
      %v723 = vpack.c.bf16 %v714, %v705
      %v724 = vpack.c.bf16 %v719, %v719
      %v725 = vld [vmem:[%s3] sm:$0xf]
      %v726 = vld [vmem:[%s3 + $0x4] sm:$0xf]
      %v727 = vld [vmem:[%s3 + $0x8] sm:$0xf]
      %v728 = vld [vmem:[%s3 + $0xc] sm:$0xf]
      %v733 = vunpack.c.l.b16 %v725
      %v734 = vunpack.c.l.b16 %v726
      %v735 = vunpack.c.l.b16 %v727
      %v736 = vunpack.c.l.b16 %v728
      %v737 = vpack.c.b16 %v734, %v733
      %v738 = vpack.c.b16 %v736, %v735
      %v742 = vsel %vm331, %v723, 0
      %v745 = vsel %vm331, %v724, 0
      %747 = vmatpush.bf16.msra.mxu0 0
      %748 = vmatpush.bf16.msra.mxu0 0
      %749 = vmatpush.bf16.msra.mxu0 0
      %750 = vmatpush.bf16.msra.mxu0 0
      %751 = vmatpush.bf16.msra.mxu0 0
      %752 = vmatpush.bf16.msra.mxu0 0
      %753 = vmatpush.bf16.msra.mxu0 %v738
      %754 = vmatpush.bf16.msra.mxu0 %v737
      %755 = vmatmul.bf16.gmra.mxu0 %v742
      %v756 = vpop.f32.mrf.mxu0
      %v757 = vadd.f32 0.0, %v756
      %v758 = vpop.f32.mrf.mxu0
      %v759 = vadd.f32 0.0, %v758
      %760 = vmatmul.bf16.gmra.mxu0 %v745
      %v761 = vpop.f32.mrf.mxu0
      %v762 = vadd.f32 0.0, %v761
      %v763 = vpop.f32.mrf.mxu0
      %764 = vdwg.mxu0
      %v768 = vrot.slane %v757, 1
      %v769 = vrot.slane %v757, 2
      %v770 = vrot.slane %v757, 3
      %v771 = vrot.slane %v757, 4
      %v772 = vrot.slane %v757, 5
      %v773 = vrot.slane %v757, 6
      %v774 = vrot.slane %v757, 7
      %v775 = vrot.slane %v759, 1
      %v776 = vrot.slane %v759, 2
      %v777 = vrot.slane %v759, 3
      %v778 = vrot.slane %v759, 4
      %v779 = vrot.slane %v759, 5
      %v780 = vrot.slane %v759, 6
      %v781 = vrot.slane %v759, 7
      %v782 = vrot.slane %v762, 1
      %v783 = vrot.slane %v762, 2
      %v784 = vrot.slane %v762, 3
      %785 = vst [vmem:[#allocation1] ss:$9 sm:$0xff] %v757
      %s786 = scalar_lea.vmem [#allocation1], 1
      %787 = vst [vmem:[%s786] ss:$9 sm:$0xff] %v768
      %s788 = scalar_lea.vmem [#allocation1], 2
      %789 = vst [vmem:[%s788] ss:$9 sm:$0xff] %v769
      %s790 = scalar_lea.vmem [#allocation1], 3
      %791 = vst [vmem:[%s790] ss:$9 sm:$0xff] %v770
      %s792 = scalar_lea.vmem [#allocation1], 4
      %793 = vst [vmem:[%s792] ss:$9 sm:$0xff] %v771
      %v794 = vld [vmem:[#allocation1] sm:$0xff]
      %795 = vst [vmem:[#allocation1] ss:$9 sm:$0xff] %v772
      %796 = vst [vmem:[%s786] ss:$9 sm:$0xff] %v773
      %797 = vst [vmem:[%s788] ss:$9 sm:$0xff] %v774
      %798 = vst [vmem:[%s790] ss:$9 sm:$0xff] %v759
      %799 = vst [vmem:[%s792] ss:$9 sm:$0xff] %v775
      %v800 = vld [vmem:[#allocation1] sm:$0xff]
      %801 = vst [vmem:[#allocation1] ss:$9 sm:$0xff] %v776
      %802 = vst [vmem:[%s786] ss:$9 sm:$0xff] %v777
      %803 = vst [vmem:[%s788] ss:$9 sm:$0xff] %v778
      %804 = vst [vmem:[%s790] ss:$9 sm:$0xff] %v779
      %805 = vst [vmem:[%s792] ss:$9 sm:$0xff] %v780
      %v806 = vld [vmem:[#allocation1] sm:$0xff]
      %807 = vst [vmem:[#allocation1] ss:$9 sm:$0xff] %v781
      %808 = vst [vmem:[%s786] ss:$9 sm:$0xff] %v762
      %809 = vst [vmem:[%s788] ss:$9 sm:$0xff] %v782
      %810 = vst [vmem:[%s790] ss:$9 sm:$0xff] %v783
      %811 = vst [vmem:[%s792] ss:$9 sm:$0xff] %v784
      %v812 = vld [vmem:[#allocation1] sm:$0xff]
      %v817 = vpack.c.bf16 %v794, %v794
      %v818 = vpack.c.bf16 %v800, %v800
      %v819 = vpack.c.bf16 %v806, %v806
      %v820 = vpack.c.bf16 %v812, %v812
      %vm821 = vcmask 780288
      %vm822 = vsmask.f32 2304
      %vm823 = vmand %vm821, %vm822
      %v824 = vld [vmem:[#allocation2] sm:$0x7]
      %v825 = vsel %vm823, %v817, %v824
      %826 = vst [vmem:[#allocation2] sm:$0x7] %v825
      %v827 = vld [vmem:[#allocation2 + $0x4] sm:$0x7]
      %v828 = vsel %vm823, %v818, %v827
      %829 = vst [vmem:[#allocation2 + $0x4] sm:$0x7] %v828
      %v830 = vld [vmem:[#allocation2 + $0x8] sm:$0x7]
      %v831 = vsel %vm823, %v819, %v830
      %832 = vst [vmem:[#allocation2 + $0x8] sm:$0x7] %v831
      %v833 = vld [vmem:[#allocation2 + $0xc] sm:$0x7]
      %v834 = vsel %vm823, %v820, %v833
      %835 = vst [vmem:[#allocation2 + $0xc] sm:$0x7] %v834
      %v836 = vld [vmem:[#allocation2] sm:$0x7]
      %v837 = vld [vmem:[#allocation2 + $0x4] sm:$0x7]
      %v838 = vld [vmem:[#allocation2 + $0x8] sm:$0x7]
      %v839 = vld [vmem:[#allocation2 + $0xc] sm:$0x7]
      %v841 = vunpack.c.l.b16 %v836
      %v842 = vpack.c.b16 %v841, %v841
      %843 = vrot.lane.b32.xlu0 %v842, 96
      %v844 = vpop.permute.xlu0 %843
      %vm845 = vcmask 64512
      %v847 = vsel %vm845, %v836, 0
      %v850 = vsel %vm845, %v844, 0
      %852 = vmatpush.bf16.xpose.msra.mxu0 0
      %853 = vmatpush.bf16.xpose.msra.mxu0 0
      %854 = vmatpush.bf16.xpose.msra.mxu0 0
      %855 = vmatpush.bf16.xpose.msra.mxu0 0
      %856 = vmatpush.bf16.xpose.msra.mxu0 0
      %857 = vmatpush.bf16.xpose.msra.mxu0 0
      %858 = vmatpush.bf16.xpose.msra.mxu0 0
      %859 = vmatpush.bf16.xpose.msra.mxu0 %v850
      %860 = vmatmul.bf16.gmra.mxu0 %v847
      %v861 = vpop.f32.mrf.mxu0
      %v862 = vadd.f32 0.0, %v861
      %v863 = vpop.f32.mrf.mxu0
      %864 = vdwg.mxu0
      %v866 = vunpack.c.l.b16 %v837
      %v867 = vpack.c.b16 %v866, %v866
      %868 = vrot.lane.b32.xlu0 %v867, 96
      %v869 = vpop.permute.xlu0 %868
      %v871 = vsel %vm845, %v837, 0
      %v874 = vsel %vm845, %v869, 0
      %876 = vmatpush.bf16.xpose.msra.mxu0 0
      %877 = vmatpush.bf16.xpose.msra.mxu0 0
      %878 = vmatpush.bf16.xpose.msra.mxu0 0
      %879 = vmatpush.bf16.xpose.msra.mxu0 0
      %880 = vmatpush.bf16.xpose.msra.mxu0 0
      %881 = vmatpush.bf16.xpose.msra.mxu0 0
      %882 = vmatpush.bf16.xpose.msra.mxu0 0
      %883 = vmatpush.bf16.xpose.msra.mxu0 %v874
      %884 = vmatmul.bf16.gmra.mxu0 %v871
      %v885 = vpop.f32.mrf.mxu0
      %v886 = vadd.f32 0.0, %v885
      %v887 = vpop.f32.mrf.mxu0
      %888 = vdwg.mxu0
      %v890 = vunpack.c.l.b16 %v838
      %v891 = vpack.c.b16 %v890, %v890
      %892 = vrot.lane.b32.xlu0 %v891, 96
      %v893 = vpop.permute.xlu0 %892
      %v895 = vsel %vm845, %v838, 0
      %v898 = vsel %vm845, %v893, 0
      %900 = vmatpush.bf16.xpose.msra.mxu0 0
      %901 = vmatpush.bf16.xpose.msra.mxu0 0
      %902 = vmatpush.bf16.xpose.msra.mxu0 0
      %903 = vmatpush.bf16.xpose.msra.mxu0 0
      %904 = vmatpush.bf16.xpose.msra.mxu0 0
      %905 = vmatpush.bf16.xpose.msra.mxu0 0
      %906 = vmatpush.bf16.xpose.msra.mxu0 0
      %907 = vmatpush.bf16.xpose.msra.mxu0 %v898
      %908 = vmatmul.bf16.gmra.mxu0 %v895
      %v909 = vpop.f32.mrf.mxu0
      %v910 = vadd.f32 0.0, %v909
      %v911 = vpop.f32.mrf.mxu0
      %912 = vdwg.mxu0
      %v914 = vunpack.c.l.b16 %v839
      %v915 = vpack.c.b16 %v914, %v914
      %916 = vrot.lane.b32.xlu0 %v915, 96
      %v917 = vpop.permute.xlu0 %916
      %v919 = vsel %vm845, %v839, 0
      %v922 = vsel %vm845, %v917, 0
      %924 = vmatpush.bf16.xpose.msra.mxu0 0
      %925 = vmatpush.bf16.xpose.msra.mxu0 0
      %926 = vmatpush.bf16.xpose.msra.mxu0 0
      %927 = vmatpush.bf16.xpose.msra.mxu0 0
      %928 = vmatpush.bf16.xpose.msra.mxu0 0
      %929 = vmatpush.bf16.xpose.msra.mxu0 0
      %930 = vmatpush.bf16.xpose.msra.mxu0 0
      %931 = vmatpush.bf16.xpose.msra.mxu0 %v922
      %932 = vmatmul.bf16.gmra.mxu0 %v919
      %v933 = vpop.f32.mrf.mxu0
      %v934 = vadd.f32 0.0, %v933
      %v935 = vpop.f32.mrf.mxu0
      %936 = vdwg.mxu0
      %vm937 = vcmask 36864
      %v938 = vsel %vm937, %v862, -inf
      %939 = vmax.xlane.f32.xlu0 %v938
      %v940 = vpop.xlane.xlu0 %939
      %v941 = vsel %vm937, %v886, -inf
      %942 = vmax.xlane.f32.xlu0 %v941
      %v943 = vpop.xlane.xlu0 %942
      %v944 = vsel %vm937, %v910, -inf
      %945 = vmax.xlane.f32.xlu0 %v944
      %v946 = vpop.xlane.xlu0 %945
      %v947 = vsel %vm937, %v934, -inf
      %948 = vmax.xlane.f32.xlu0 %v947
      %v949 = vpop.xlane.xlu0 %948
      %v950 = vsub.f32 %v862, %v940
      %v951 = vsub.f32 %v886, %v943
      %v952 = vsub.f32 %v910, %v946
      %v953 = vsub.f32 %v934, %v949
      %v954 = vmul.f32 %v950, 1.442695
      %v955 = vpow.pop %v954
      %v956 = vmul.f32 %v951, 1.442695
      %v957 = vpow.pop %v956
      %v958 = vmul.f32 %v952, 1.442695
      %v959 = vpow.pop %v958
      %v960 = vmul.f32 %v953, 1.442695
      %v961 = vpow.pop %v960
      %v962 = vsel %vm937, %v955, 0.0
      %963 = vadd.xlane.f32.xlu0 %v962
      %v964 = vpop.xlane.xlu0 %963
      %v965 = vsel %vm937, %v957, 0.0
      %966 = vadd.xlane.f32.xlu0 %v965
      %v967 = vpop.xlane.xlu0 %966
      %v968 = vsel %vm937, %v959, 0.0
      %969 = vadd.xlane.f32.xlu0 %v968
      %v970 = vpop.xlane.xlu0 %969
      %v971 = vsel %vm937, %v961, 0.0
      %972 = vadd.xlane.f32.xlu0 %v971
      %v973 = vpop.xlane.xlu0 %972
      %v974 = vrcp.pop %v964
      %v975 = vmul.f32 %v964, %v974
      %v976 = vsub.f32 1.0, %v975
      %v977 = vmul.f32 %v974, %v976
      %v978 = vadd.f32 %v974, %v977
      %vm979 = vweird.f32 %v964
      %vm980 = vweird.f32 %v974
      %vm981 = vmor %vm979, %vm980
      %v982 = vsel %vm981, %v974, %v978
      %v983 = vand.u32 2147483647, %v964
      %vm984 = vcmp.eq.f32.partialorder %v983, 8.507059e+37
      %v985 = vand.u32 %v964, 2147483648
      %v986 = vor.u32 1.1754944e-38, %v985
      %v987 = vsel %vm984, %v986, %v982
      %v988 = vmul.f32 %v955, %v987
      %v989 = vrcp.pop %v967
      %v990 = vmul.f32 %v967, %v989
      %v991 = vsub.f32 1.0, %v990
      %v992 = vmul.f32 %v989, %v991
      %v993 = vadd.f32 %v989, %v992
      %vm994 = vweird.f32 %v967
      %vm995 = vweird.f32 %v989
      %vm996 = vmor %vm994, %vm995
      %v997 = vsel %vm996, %v989, %v993
      %v998 = vand.u32 2147483647, %v967
      %vm999 = vcmp.eq.f32.partialorder %v998, 8.507059e+37
      %v1000 = vand.u32 %v967, 2147483648
      %v1001 = vor.u32 1.1754944e-38, %v1000
      %v1002 = vsel %vm999, %v1001, %v997
      %v1003 = vmul.f32 %v957, %v1002
      %v1004 = vrcp.pop %v970
      %v1005 = vmul.f32 %v970, %v1004
      %v1006 = vsub.f32 1.0, %v1005
      %v1007 = vmul.f32 %v1004, %v1006
      %v1008 = vadd.f32 %v1004, %v1007
      %vm1009 = vweird.f32 %v970
      %vm1010 = vweird.f32 %v1004
      %vm1011 = vmor %vm1009, %vm1010
      %v1012 = vsel %vm1011, %v1004, %v1008
      %v1013 = vand.u32 2147483647, %v970
      %vm1014 = vcmp.eq.f32.partialorder %v1013, 8.507059e+37
      %v1015 = vand.u32 %v970, 2147483648
      %v1016 = vor.u32 1.1754944e-38, %v1015
      %v1017 = vsel %vm1014, %v1016, %v1012
      %v1018 = vmul.f32 %v959, %v1017
      %v1019 = vrcp.pop %v973
      %v1020 = vmul.f32 %v973, %v1019
      %v1021 = vsub.f32 1.0, %v1020
      %v1022 = vmul.f32 %v1019, %v1021
      %v1023 = vadd.f32 %v1019, %v1022
      %vm1024 = vweird.f32 %v973
      %vm1025 = vweird.f32 %v1019
      %vm1026 = vmor %vm1024, %vm1025
      %v1027 = vsel %vm1026, %v1019, %v1023
      %v1028 = vand.u32 2147483647, %v973
      %vm1029 = vcmp.eq.f32.partialorder %v1028, 8.507059e+37
      %v1030 = vand.u32 %v973, 2147483648
      %v1031 = vor.u32 1.1754944e-38, %v1030
      %v1032 = vsel %vm1029, %v1031, %v1027
      %v1033 = vmul.f32 %v961, %v1032
      %v1034 = vpack.c.bf16 %v988, %v988
      %v1035 = vpack.c.bf16 %v1003, %v1003
      %v1036 = vpack.c.bf16 %v1018, %v1018
      %v1037 = vpack.c.bf16 %v1033, %v1033
      %1038 = vrot.lane.b32.xlu0 %v842, 64
      %v1039 = vpop.permute.xlu0 %1038
      %vm1040 = vcmask 39936
      %v1042 = vsel %vm1040, %v1034, 0
      %vm1044 = vcmask 1041408
      %vm1045 = vcmask 1042432
      %v1046 = vsel %vm1044, 4294967295, 65535
      %v1047 = vsel %vm1045, %v1046, 0
      %v1049 = vand.u32 %v1039, %v1047
      %1051 = vmatpush.bf16.msra.mxu0 0
      %1052 = vmatpush.bf16.msra.mxu0 0
      %1053 = vmatpush.bf16.msra.mxu0 0
      %1054 = vmatpush.bf16.msra.mxu0 0
      %1055 = vmatpush.bf16.msra.mxu0 0
      %1056 = vmatpush.bf16.msra.mxu0 0
      %1057 = vmatpush.bf16.msra.mxu0 0
      %1058 = vmatpush.bf16.msra.mxu0 %v1049
      %1059 = vmatmul.bf16.gmra.mxu0 %v1042
      %v1060 = vpop.f32.mrf.mxu0
      %v1061 = vadd.f32 0.0, %v1060
      %v1062 = vpop.f32.mrf.mxu0
      %1063 = vdwg.mxu0
      %1064 = vrot.lane.b32.xlu0 %v867, 64
      %v1065 = vpop.permute.xlu0 %1064
      %v1067 = vsel %vm1040, %v1035, 0
      %v1070 = vand.u32 %v1065, %v1047
      %1072 = vmatpush.bf16.msra.mxu0 0
      %1073 = vmatpush.bf16.msra.mxu0 0
      %1074 = vmatpush.bf16.msra.mxu0 0
      %1075 = vmatpush.bf16.msra.mxu0 0
      %1076 = vmatpush.bf16.msra.mxu0 0
      %1077 = vmatpush.bf16.msra.mxu0 0
      %1078 = vmatpush.bf16.msra.mxu0 0
      %1079 = vmatpush.bf16.msra.mxu0 %v1070
      %1080 = vmatmul.bf16.gmra.mxu0 %v1067
      %v1081 = vpop.f32.mrf.mxu0
      %v1082 = vadd.f32 0.0, %v1081
      %v1083 = vpop.f32.mrf.mxu0
      %1084 = vdwg.mxu0
      %1085 = vrot.lane.b32.xlu0 %v891, 64
      %v1086 = vpop.permute.xlu0 %1085
      %v1088 = vsel %vm1040, %v1036, 0
      %v1091 = vand.u32 %v1086, %v1047
      %1093 = vmatpush.bf16.msra.mxu0 0
      %1094 = vmatpush.bf16.msra.mxu0 0
      %1095 = vmatpush.bf16.msra.mxu0 0
      %1096 = vmatpush.bf16.msra.mxu0 0
      %1097 = vmatpush.bf16.msra.mxu0 0
      %1098 = vmatpush.bf16.msra.mxu0 0
      %1099 = vmatpush.bf16.msra.mxu0 0
      %1100 = vmatpush.bf16.msra.mxu0 %v1091
      %1101 = vmatmul.bf16.gmra.mxu0 %v1088
      %v1102 = vpop.f32.mrf.mxu0
      %v1103 = vadd.f32 0.0, %v1102
      %v1104 = vpop.f32.mrf.mxu0
      %1105 = vdwg.mxu0
      %1106 = vrot.lane.b32.xlu0 %v915, 64
      %v1107 = vpop.permute.xlu0 %1106
      %v1109 = vsel %vm1040, %v1037, 0
      %v1112 = vand.u32 %v1107, %v1047
      %1114 = vmatpush.bf16.msra.mxu0 0
      %1115 = vmatpush.bf16.msra.mxu0 0
      %1116 = vmatpush.bf16.msra.mxu0 0
      %1117 = vmatpush.bf16.msra.mxu0 0
      %1118 = vmatpush.bf16.msra.mxu0 0
      %1119 = vmatpush.bf16.msra.mxu0 0
      %1120 = vmatpush.bf16.msra.mxu0 0
      %1121 = vmatpush.bf16.msra.mxu0 %v1112
      %1122 = vmatmul.bf16.gmra.mxu0 %v1109
      %v1123 = vpop.f32.mrf.mxu0
      %v1124 = vadd.f32 0.0, %v1123
      %v1125 = vpop.f32.mrf.mxu0
      %1126 = vdwg.mxu0
      %v1131 = vrot.slane %v1061, 1
      %v1132 = vrot.slane %v1061, 2
      %v1133 = vrot.slane %v1061, 3
      %v1134 = vrot.slane %v1061, 4
      %v1135 = vrot.slane %v1082, 1
      %v1136 = vrot.slane %v1082, 2
      %v1137 = vrot.slane %v1082, 3
      %v1138 = vrot.slane %v1082, 4
      %v1139 = vrot.slane %v1103, 1
      %v1140 = vrot.slane %v1103, 2
      %v1141 = vrot.slane %v1103, 3
      %v1142 = vrot.slane %v1103, 4
      %v1143 = vrot.slane %v1124, 1
      %v1144 = vrot.slane %v1124, 2
      %v1145 = vrot.slane %v1124, 3
      %v1146 = vrot.slane %v1124, 4
      %1147 = vst [vmem:[#allocation1] ss:$9 sm:$0xff] %v1061
      %s1148 = scalar_lea.vmem [#allocation1], 1
      %1149 = vst [vmem:[%s1148] ss:$9 sm:$0xff] %v1131
      %s1150 = scalar_lea.vmem [#allocation1], 2
      %1151 = vst [vmem:[%s1150] ss:$9 sm:$0xff] %v1132
      %s1152 = scalar_lea.vmem [#allocation1], 3
      %1153 = vst [vmem:[%s1152] ss:$9 sm:$0xff] %v1133
      %s1154 = scalar_lea.vmem [#allocation1], 4
      %1155 = vst [vmem:[%s1154] ss:$9 sm:$0xff] %v1134
      %s1156 = scalar_lea.vmem [#allocation1], 5
      %1157 = vst [vmem:[%s1156] ss:$9 sm:$0xff] %v1082
      %s1158 = scalar_lea.vmem [#allocation1], 6
      %1159 = vst [vmem:[%s1158] ss:$9 sm:$0xff] %v1135
      %s1160 = scalar_lea.vmem [#allocation1], 7
      %1161 = vst [vmem:[%s1160] ss:$9 sm:$0xff] %v1136
      %v1162 = vld [vmem:[#allocation1] sm:$0xff]
      %1163 = vst [vmem:[#allocation1] ss:$9 sm:$0xff] %v1137
      %1164 = vst [vmem:[%s1148] ss:$9 sm:$0xff] %v1138
      %1165 = vst [vmem:[%s1150] ss:$9 sm:$0xff] %v1103
      %1166 = vst [vmem:[%s1152] ss:$9 sm:$0xff] %v1139
      %1167 = vst [vmem:[%s1154] ss:$9 sm:$0xff] %v1140
      %1168 = vst [vmem:[%s1156] ss:$9 sm:$0xff] %v1141
      %1169 = vst [vmem:[%s1158] ss:$9 sm:$0xff] %v1142
      %1170 = vst [vmem:[%s1160] ss:$9 sm:$0xff] %v1124
      %v1171 = vld [vmem:[#allocation1] sm:$0xff]
      %1172 = vst [vmem:[#allocation1] ss:$9 sm:$0xff] %v1143
      %1173 = vst [vmem:[%s1148] ss:$9 sm:$0xff] %v1144
      %1174 = vst [vmem:[%s1150] ss:$9 sm:$0xff] %v1145
      %1175 = vst [vmem:[%s1152] ss:$9 sm:$0xff] %v1146
      %v1176 = vld [vmem:[#allocation1] sm:$0xff]
      %v1180 = vpack.c.bf16 %v1171, %v1162
      %v1181 = vpack.c.bf16 %v1176, %v1176
      %v1182 = vld [vmem:[%s4] sm:$0xf]
      %v1183 = vld [vmem:[#allocation2] sm:$0x7]
      %v1184 = vld [vmem:[#allocation2 + $0x4] sm:$0x7]
      %v1185 = vld [vmem:[#allocation2 + $0x8] sm:$0x7]
      %v1186 = vld [vmem:[#allocation2 + $0xc] sm:$0x7]
      %v1188 = vunpack.c.l.b16 %v1183
      %v1189 = vpack.c.b16 %v1188, %v1188
      %1190 = vrot.lane.b32.xlu0 %v1189, 120
      %v1191 = vpop.permute.xlu0 %1190
      %1192 = vrot.lane.b32.xlu0 %v1189, 88
      %v1193 = vpop.permute.xlu0 %1192
      %v1195 = vsel %vm845, %v1191, 0
      %v1198 = vsel %vm845, %v1193, 0
      %1200 = vmatpush.bf16.xpose.msra.mxu0 0
      %1201 = vmatpush.bf16.xpose.msra.mxu0 0
      %1202 = vmatpush.bf16.xpose.msra.mxu0 0
      %1203 = vmatpush.bf16.xpose.msra.mxu0 0
      %1204 = vmatpush.bf16.xpose.msra.mxu0 0
      %1205 = vmatpush.bf16.xpose.msra.mxu0 0
      %1206 = vmatpush.bf16.xpose.msra.mxu0 0
      %1207 = vmatpush.bf16.xpose.msra.mxu0 %v1198
      %1208 = vmatmul.bf16.gmra.mxu0 %v1195
      %v1209 = vpop.f32.mrf.mxu0
      %v1210 = vadd.f32 0.0, %v1209
      %v1211 = vpop.f32.mrf.mxu0
      %1212 = vdwg.mxu0
      %v1214 = vunpack.c.l.b16 %v1184
      %v1215 = vpack.c.b16 %v1214, %v1214
      %1216 = vrot.lane.b32.xlu0 %v1215, 120
      %v1217 = vpop.permute.xlu0 %1216
      %1218 = vrot.lane.b32.xlu0 %v1215, 88
      %v1219 = vpop.permute.xlu0 %1218
      %v1221 = vsel %vm845, %v1217, 0
      %v1224 = vsel %vm845, %v1219, 0
      %1226 = vmatpush.bf16.xpose.msra.mxu0 0
      %1227 = vmatpush.bf16.xpose.msra.mxu0 0
      %1228 = vmatpush.bf16.xpose.msra.mxu0 0
      %1229 = vmatpush.bf16.xpose.msra.mxu0 0
      %1230 = vmatpush.bf16.xpose.msra.mxu0 0
      %1231 = vmatpush.bf16.xpose.msra.mxu0 0
      %1232 = vmatpush.bf16.xpose.msra.mxu0 0
      %1233 = vmatpush.bf16.xpose.msra.mxu0 %v1224
      %1234 = vmatmul.bf16.gmra.mxu0 %v1221
      %v1235 = vpop.f32.mrf.mxu0
      %v1236 = vadd.f32 0.0, %v1235
      %v1237 = vpop.f32.mrf.mxu0
      %1238 = vdwg.mxu0
      %v1240 = vunpack.c.l.b16 %v1185
      %v1241 = vpack.c.b16 %v1240, %v1240
      %1242 = vrot.lane.b32.xlu0 %v1241, 120
      %v1243 = vpop.permute.xlu0 %1242
      %1244 = vrot.lane.b32.xlu0 %v1241, 88
      %v1245 = vpop.permute.xlu0 %1244
      %v1247 = vsel %vm845, %v1243, 0
      %v1250 = vsel %vm845, %v1245, 0
      %1252 = vmatpush.bf16.xpose.msra.mxu0 0
      %1253 = vmatpush.bf16.xpose.msra.mxu0 0
      %1254 = vmatpush.bf16.xpose.msra.mxu0 0
      %1255 = vmatpush.bf16.xpose.msra.mxu0 0
      %1256 = vmatpush.bf16.xpose.msra.mxu0 0
      %1257 = vmatpush.bf16.xpose.msra.mxu0 0
      %1258 = vmatpush.bf16.xpose.msra.mxu0 0
      %1259 = vmatpush.bf16.xpose.msra.mxu0 %v1250
      %1260 = vmatmul.bf16.gmra.mxu0 %v1247
      %v1261 = vpop.f32.mrf.mxu0
      %v1262 = vadd.f32 0.0, %v1261
      %v1263 = vpop.f32.mrf.mxu0
      %1264 = vdwg.mxu0
      %v1266 = vunpack.c.l.b16 %v1186
      %v1267 = vpack.c.b16 %v1266, %v1266
      %1268 = vrot.lane.b32.xlu0 %v1267, 120
      %v1269 = vpop.permute.xlu0 %1268
      %1270 = vrot.lane.b32.xlu0 %v1267, 88
      %v1271 = vpop.permute.xlu0 %1270
      %v1273 = vsel %vm845, %v1269, 0
      %v1276 = vsel %vm845, %v1271, 0
      %1278 = vmatpush.bf16.xpose.msra.mxu0 0
      %1279 = vmatpush.bf16.xpose.msra.mxu0 0
      %1280 = vmatpush.bf16.xpose.msra.mxu0 0
      %1281 = vmatpush.bf16.xpose.msra.mxu0 0
      %1282 = vmatpush.bf16.xpose.msra.mxu0 0
      %1283 = vmatpush.bf16.xpose.msra.mxu0 0
      %1284 = vmatpush.bf16.xpose.msra.mxu0 0
      %1285 = vmatpush.bf16.xpose.msra.mxu0 %v1276
      %1286 = vmatmul.bf16.gmra.mxu0 %v1273
      %v1287 = vpop.f32.mrf.mxu0
      %v1288 = vadd.f32 0.0, %v1287
      %v1289 = vpop.f32.mrf.mxu0
      %1290 = vdwg.mxu0
      %v1291 = vsel %vm937, %v1210, -inf
      %1292 = vmax.xlane.f32.xlu0 %v1291
      %v1293 = vpop.xlane.xlu0 %1292
      %v1294 = vsel %vm937, %v1236, -inf
      %1295 = vmax.xlane.f32.xlu0 %v1294
      %v1296 = vpop.xlane.xlu0 %1295
      %v1297 = vsel %vm937, %v1262, -inf
      %1298 = vmax.xlane.f32.xlu0 %v1297
      %v1299 = vpop.xlane.xlu0 %1298
      %v1300 = vsel %vm937, %v1288, -inf
      %1301 = vmax.xlane.f32.xlu0 %v1300
      %v1302 = vpop.xlane.xlu0 %1301
      %v1303 = vsub.f32 %v1210, %v1293
      %v1304 = vsub.f32 %v1236, %v1296
      %v1305 = vsub.f32 %v1262, %v1299
      %v1306 = vsub.f32 %v1288, %v1302
      %v1307 = vmul.f32 %v1303, 1.442695
      %v1308 = vpow.pop %v1307
      %v1309 = vmul.f32 %v1304, 1.442695
      %v1310 = vpow.pop %v1309
      %v1311 = vmul.f32 %v1305, 1.442695
      %v1312 = vpow.pop %v1311
      %v1313 = vmul.f32 %v1306, 1.442695
      %v1314 = vpow.pop %v1313
      %v1315 = vsel %vm937, %v1308, 0.0
      %1316 = vadd.xlane.f32.xlu0 %v1315
      %v1317 = vpop.xlane.xlu0 %1316
      %v1318 = vsel %vm937, %v1310, 0.0
      %1319 = vadd.xlane.f32.xlu0 %v1318
      %v1320 = vpop.xlane.xlu0 %1319
      %v1321 = vsel %vm937, %v1312, 0.0
      %1322 = vadd.xlane.f32.xlu0 %v1321
      %v1323 = vpop.xlane.xlu0 %1322
      %v1324 = vsel %vm937, %v1314, 0.0
      %1325 = vadd.xlane.f32.xlu0 %v1324
      %v1326 = vpop.xlane.xlu0 %1325
      %v1327 = vrcp.pop %v1317
      %v1328 = vmul.f32 %v1317, %v1327
      %v1329 = vsub.f32 1.0, %v1328
      %v1330 = vmul.f32 %v1327, %v1329
      %v1331 = vadd.f32 %v1327, %v1330
      %vm1332 = vweird.f32 %v1317
      %vm1333 = vweird.f32 %v1327
      %vm1334 = vmor %vm1332, %vm1333
      %v1335 = vsel %vm1334, %v1327, %v1331
      %v1336 = vand.u32 2147483647, %v1317
      %vm1337 = vcmp.eq.f32.partialorder %v1336, 8.507059e+37
      %v1338 = vand.u32 %v1317, 2147483648
      %v1339 = vor.u32 1.1754944e-38, %v1338
      %v1340 = vsel %vm1337, %v1339, %v1335
      %v1341 = vmul.f32 %v1308, %v1340
      %v1342 = vrcp.pop %v1320
      %v1343 = vmul.f32 %v1320, %v1342
      %v1344 = vsub.f32 1.0, %v1343
      %v1345 = vmul.f32 %v1342, %v1344
      %v1346 = vadd.f32 %v1342, %v1345
      %vm1347 = vweird.f32 %v1320
      %vm1348 = vweird.f32 %v1342
      %vm1349 = vmor %vm1347, %vm1348
      %v1350 = vsel %vm1349, %v1342, %v1346
      %v1351 = vand.u32 2147483647, %v1320
      %vm1352 = vcmp.eq.f32.partialorder %v1351, 8.507059e+37
      %v1353 = vand.u32 %v1320, 2147483648
      %v1354 = vor.u32 1.1754944e-38, %v1353
      %v1355 = vsel %vm1352, %v1354, %v1350
      %v1356 = vmul.f32 %v1310, %v1355
      %v1357 = vrcp.pop %v1323
      %v1358 = vmul.f32 %v1323, %v1357
      %v1359 = vsub.f32 1.0, %v1358
      %v1360 = vmul.f32 %v1357, %v1359
      %v1361 = vadd.f32 %v1357, %v1360
      %vm1362 = vweird.f32 %v1323
      %vm1363 = vweird.f32 %v1357
      %vm1364 = vmor %vm1362, %vm1363
      %v1365 = vsel %vm1364, %v1357, %v1361
      %v1366 = vand.u32 2147483647, %v1323
      %vm1367 = vcmp.eq.f32.partialorder %v1366, 8.507059e+37
      %v1368 = vand.u32 %v1323, 2147483648
      %v1369 = vor.u32 1.1754944e-38, %v1368
      %v1370 = vsel %vm1367, %v1369, %v1365
      %v1371 = vmul.f32 %v1312, %v1370
      %v1372 = vrcp.pop %v1326
      %v1373 = vmul.f32 %v1326, %v1372
      %v1374 = vsub.f32 1.0, %v1373
      %v1375 = vmul.f32 %v1372, %v1374
      %v1376 = vadd.f32 %v1372, %v1375
      %vm1377 = vweird.f32 %v1326
      %vm1378 = vweird.f32 %v1372
      %vm1379 = vmor %vm1377, %vm1378
      %v1380 = vsel %vm1379, %v1372, %v1376
      %v1381 = vand.u32 2147483647, %v1326
      %vm1382 = vcmp.eq.f32.partialorder %v1381, 8.507059e+37
      %v1383 = vand.u32 %v1326, 2147483648
      %v1384 = vor.u32 1.1754944e-38, %v1383
      %v1385 = vsel %vm1382, %v1384, %v1380
      %v1386 = vmul.f32 %v1314, %v1385
      %v1387 = vpack.c.bf16 %v1341, %v1341
      %v1388 = vpack.c.bf16 %v1356, %v1356
      %v1389 = vpack.c.bf16 %v1371, %v1371
      %v1390 = vpack.c.bf16 %v1386, %v1386
      %1391 = vrot.lane.b32.xlu0 %v1189, 56
      %v1392 = vpop.permute.xlu0 %1391
      %v1394 = vsel %vm1040, %v1387, 0
      %v1397 = vand.u32 %v1392, %v1047
      %1399 = vmatpush.bf16.msra.mxu0 0
      %1400 = vmatpush.bf16.msra.mxu0 0
      %1401 = vmatpush.bf16.msra.mxu0 0
      %1402 = vmatpush.bf16.msra.mxu0 0
      %1403 = vmatpush.bf16.msra.mxu0 0
      %1404 = vmatpush.bf16.msra.mxu0 0
      %1405 = vmatpush.bf16.msra.mxu0 0
      %1406 = vmatpush.bf16.msra.mxu0 %v1397
      %1407 = vmatmul.bf16.gmra.mxu0 %v1394
      %v1408 = vpop.f32.mrf.mxu0
      %v1409 = vadd.f32 0.0, %v1408
      %v1410 = vpop.f32.mrf.mxu0
      %1411 = vdwg.mxu0
      %1412 = vrot.lane.b32.xlu0 %v1215, 56
      %v1413 = vpop.permute.xlu0 %1412
      %v1415 = vsel %vm1040, %v1388, 0
      %v1418 = vand.u32 %v1413, %v1047
      %1420 = vmatpush.bf16.msra.mxu0 0
      %1421 = vmatpush.bf16.msra.mxu0 0
      %1422 = vmatpush.bf16.msra.mxu0 0
      %1423 = vmatpush.bf16.msra.mxu0 0
      %1424 = vmatpush.bf16.msra.mxu0 0
      %1425 = vmatpush.bf16.msra.mxu0 0
      %1426 = vmatpush.bf16.msra.mxu0 0
      %1427 = vmatpush.bf16.msra.mxu0 %v1418
      %1428 = vmatmul.bf16.gmra.mxu0 %v1415
      %v1429 = vpop.f32.mrf.mxu0
      %v1430 = vadd.f32 0.0, %v1429
      %v1431 = vpop.f32.mrf.mxu0
      %1432 = vdwg.mxu0
      %1433 = vrot.lane.b32.xlu0 %v1241, 56
      %v1434 = vpop.permute.xlu0 %1433
      %v1436 = vsel %vm1040, %v1389, 0
      %v1439 = vand.u32 %v1434, %v1047
      %1441 = vmatpush.bf16.msra.mxu0 0
      %1442 = vmatpush.bf16.msra.mxu0 0
      %1443 = vmatpush.bf16.msra.mxu0 0
      %1444 = vmatpush.bf16.msra.mxu0 0
      %1445 = vmatpush.bf16.msra.mxu0 0
      %1446 = vmatpush.bf16.msra.mxu0 0
      %1447 = vmatpush.bf16.msra.mxu0 0
      %1448 = vmatpush.bf16.msra.mxu0 %v1439
      %1449 = vmatmul.bf16.gmra.mxu0 %v1436
      %v1450 = vpop.f32.mrf.mxu0
      %v1451 = vadd.f32 0.0, %v1450
      %v1452 = vpop.f32.mrf.mxu0
      %1453 = vdwg.mxu0
      %1454 = vrot.lane.b32.xlu0 %v1267, 56
      %v1455 = vpop.permute.xlu0 %1454
      %v1457 = vsel %vm1040, %v1390, 0
      %v1460 = vand.u32 %v1455, %v1047
      %1462 = vmatpush.bf16.msra.mxu0 0
      %1463 = vmatpush.bf16.msra.mxu0 0
      %1464 = vmatpush.bf16.msra.mxu0 0
      %1465 = vmatpush.bf16.msra.mxu0 0
      %1466 = vmatpush.bf16.msra.mxu0 0
      %1467 = vmatpush.bf16.msra.mxu0 0
      %1468 = vmatpush.bf16.msra.mxu0 0
      %1469 = vmatpush.bf16.msra.mxu0 %v1460
      %1470 = vmatmul.bf16.gmra.mxu0 %v1457
      %v1471 = vpop.f32.mrf.mxu0
      %v1472 = vadd.f32 0.0, %v1471
      %v1473 = vpop.f32.mrf.mxu0
      %1474 = vdwg.mxu0
      %v1479 = vrot.slane %v1409, 1
      %v1480 = vrot.slane %v1409, 2
      %v1481 = vrot.slane %v1409, 3
      %v1482 = vrot.slane %v1409, 4
      %v1483 = vrot.slane %v1430, 1
      %v1484 = vrot.slane %v1430, 2
      %v1485 = vrot.slane %v1430, 3
      %v1486 = vrot.slane %v1430, 4
      %v1487 = vrot.slane %v1451, 1
      %v1488 = vrot.slane %v1451, 2
      %v1489 = vrot.slane %v1451, 3
      %v1490 = vrot.slane %v1451, 4
      %v1491 = vrot.slane %v1472, 1
      %v1492 = vrot.slane %v1472, 2
      %v1493 = vrot.slane %v1472, 3
      %v1494 = vrot.slane %v1472, 4
      %1495 = vst [vmem:[#allocation1] ss:$9 sm:$0xff] %v1409
      %s1496 = scalar_lea.vmem [#allocation1], 1
      %1497 = vst [vmem:[%s1496] ss:$9 sm:$0xff] %v1479
      %s1498 = scalar_lea.vmem [#allocation1], 2
      %1499 = vst [vmem:[%s1498] ss:$9 sm:$0xff] %v1480
      %s1500 = scalar_lea.vmem [#allocation1], 3
      %1501 = vst [vmem:[%s1500] ss:$9 sm:$0xff] %v1481
      %s1502 = scalar_lea.vmem [#allocation1], 4
      %1503 = vst [vmem:[%s1502] ss:$9 sm:$0xff] %v1482
      %s1504 = scalar_lea.vmem [#allocation1], 5
      %1505 = vst [vmem:[%s1504] ss:$9 sm:$0xff] %v1430
      %s1506 = scalar_lea.vmem [#allocation1], 6
      %1507 = vst [vmem:[%s1506] ss:$9 sm:$0xff] %v1483
      %s1508 = scalar_lea.vmem [#allocation1], 7
      %1509 = vst [vmem:[%s1508] ss:$9 sm:$0xff] %v1484
      %v1510 = vld [vmem:[#allocation1] sm:$0xff]
      %1511 = vst [vmem:[#allocation1] ss:$9 sm:$0xff] %v1485
      %1512 = vst [vmem:[%s1496] ss:$9 sm:$0xff] %v1486
      %1513 = vst [vmem:[%s1498] ss:$9 sm:$0xff] %v1451
      %1514 = vst [vmem:[%s1500] ss:$9 sm:$0xff] %v1487
      %1515 = vst [vmem:[%s1502] ss:$9 sm:$0xff] %v1488
      %1516 = vst [vmem:[%s1504] ss:$9 sm:$0xff] %v1489
      %1517 = vst [vmem:[%s1506] ss:$9 sm:$0xff] %v1490
      %1518 = vst [vmem:[%s1508] ss:$9 sm:$0xff] %v1472
      %v1519 = vld [vmem:[#allocation1] sm:$0xff]
      %1520 = vst [vmem:[#allocation1] ss:$9 sm:$0xff] %v1491
      %1521 = vst [vmem:[%s1496] ss:$9 sm:$0xff] %v1492
      %1522 = vst [vmem:[%s1498] ss:$9 sm:$0xff] %v1493
      %1523 = vst [vmem:[%s1500] ss:$9 sm:$0xff] %v1494
      %v1524 = vld [vmem:[#allocation1] sm:$0xff]
      %v1528 = vpack.c.bf16 %v1519, %v1510
      %v1529 = vpack.c.bf16 %v1524, %v1524
      %v1530 = vld [vmem:[%s4 + $0x4] sm:$0xf]
      %v1532 = vsel %vm845, %v1528, 0
      %v1535 = vsel %vm845, %v1529, 0
      %vm1537 = vcmask 1043456
      %v1539 = vsel %vm1537, %v1530, 0
      %1541 = vmatpush.bf16.msra.mxu0 0
      %1542 = vmatpush.bf16.msra.mxu0 0
      %1543 = vmatpush.bf16.msra.mxu0 0
      %1544 = vmatpush.bf16.msra.mxu0 0
      %1545 = vmatpush.bf16.msra.mxu0 0
      %1546 = vmatpush.bf16.msra.mxu0 0
      %1547 = vmatpush.bf16.msra.mxu0 0
      %1548 = vmatpush.bf16.msra.mxu0 %v1539
      %1549 = vmatmul.bf16.gmra.mxu0 %v1532
      %v1550 = vpop.f32.mrf.mxu0
      %v1551 = vadd.f32 0.0, %v1550
      %v1552 = vpop.f32.mrf.mxu0
      %v1553 = vadd.f32 0.0, %v1552
      %1554 = vmatmul.bf16.gmra.mxu0 %v1535
      %v1555 = vpop.f32.mrf.mxu0
      %v1556 = vadd.f32 0.0, %v1555
      %v1557 = vpop.f32.mrf.mxu0
      %1558 = vdwg.mxu0
      %v1560 = vsel %vm845, %v1180, 0
      %v1563 = vsel %vm845, %v1181, 0
      %v1566 = vsel %vm1537, %v1182, 0
      %1568 = vmatpush.bf16.msra.mxu0 0
      %1569 = vmatpush.bf16.msra.mxu0 0
      %1570 = vmatpush.bf16.msra.mxu0 0
      %1571 = vmatpush.bf16.msra.mxu0 0
      %1572 = vmatpush.bf16.msra.mxu0 0
      %1573 = vmatpush.bf16.msra.mxu0 0
      %1574 = vmatpush.bf16.msra.mxu0 0
      %1575 = vmatpush.bf16.msra.mxu0 %v1566
      %1576 = vmatmul.bf16.gmra.mxu0 %v1560
      %v1577 = vpop.f32.mrf.mxu0
      %v1578 = vadd.f32 %v1551, %v1577
      %v1579 = vpop.f32.mrf.mxu0
      %v1580 = vadd.f32 %v1553, %v1579
      %1581 = vmatmul.bf16.gmra.mxu0 %v1563
      %v1582 = vpop.f32.mrf.mxu0
      %v1583 = vadd.f32 %v1556, %v1582
      %v1584 = vpop.f32.mrf.mxu0
      %1585 = vdwg.mxu0
      %v1586 = vld [vmem:[#allocation2] sm:$0x7]
      %v1587 = vld [vmem:[#allocation2 + $0x4] sm:$0x7]
      %v1588 = vld [vmem:[#allocation2 + $0x8] sm:$0x7]
      %v1589 = vld [vmem:[#allocation2 + $0xc] sm:$0x7]
      %v1591 = vunpack.c.l.b16 %v1586
      %v1592 = vpack.c.b16 %v1591, %v1591
      %1593 = vrot.lane.b32.xlu0 %v1592, 112
      %v1594 = vpop.permute.xlu0 %1593
      %1595 = vrot.lane.b32.xlu0 %v1592, 80
      %v1596 = vpop.permute.xlu0 %1595
      %v1598 = vsel %vm845, %v1594, 0
      %v1601 = vsel %vm845, %v1596, 0
      %1603 = vmatpush.bf16.xpose.msra.mxu0 0
      %1604 = vmatpush.bf16.xpose.msra.mxu0 0
      %1605 = vmatpush.bf16.xpose.msra.mxu0 0
      %1606 = vmatpush.bf16.xpose.msra.mxu0 0
      %1607 = vmatpush.bf16.xpose.msra.mxu0 0
      %1608 = vmatpush.bf16.xpose.msra.mxu0 0
      %1609 = vmatpush.bf16.xpose.msra.mxu0 0
      %1610 = vmatpush.bf16.xpose.msra.mxu0 %v1601
      %1611 = vmatmul.bf16.gmra.mxu0 %v1598
      %v1612 = vpop.f32.mrf.mxu0
      %v1613 = vadd.f32 0.0, %v1612
      %v1614 = vpop.f32.mrf.mxu0
      %1615 = vdwg.mxu0
      %v1617 = vunpack.c.l.b16 %v1587
      %v1618 = vpack.c.b16 %v1617, %v1617
      %1619 = vrot.lane.b32.xlu0 %v1618, 112
      %v1620 = vpop.permute.xlu0 %1619
      %1621 = vrot.lane.b32.xlu0 %v1618, 80
      %v1622 = vpop.permute.xlu0 %1621
      %v1624 = vsel %vm845, %v1620, 0
      %v1627 = vsel %vm845, %v1622, 0
      %1629 = vmatpush.bf16.xpose.msra.mxu0 0
      %1630 = vmatpush.bf16.xpose.msra.mxu0 0
      %1631 = vmatpush.bf16.xpose.msra.mxu0 0
      %1632 = vmatpush.bf16.xpose.msra.mxu0 0
      %1633 = vmatpush.bf16.xpose.msra.mxu0 0
      %1634 = vmatpush.bf16.xpose.msra.mxu0 0
      %1635 = vmatpush.bf16.xpose.msra.mxu0 0
      %1636 = vmatpush.bf16.xpose.msra.mxu0 %v1627
      %1637 = vmatmul.bf16.gmra.mxu0 %v1624
      %v1638 = vpop.f32.mrf.mxu0
      %v1639 = vadd.f32 0.0, %v1638
      %v1640 = vpop.f32.mrf.mxu0
      %1641 = vdwg.mxu0
      %v1643 = vunpack.c.l.b16 %v1588
      %v1644 = vpack.c.b16 %v1643, %v1643
      %1645 = vrot.lane.b32.xlu0 %v1644, 112
      %v1646 = vpop.permute.xlu0 %1645
      %1647 = vrot.lane.b32.xlu0 %v1644, 80
      %v1648 = vpop.permute.xlu0 %1647
      %v1650 = vsel %vm845, %v1646, 0
      %v1653 = vsel %vm845, %v1648, 0
      %1655 = vmatpush.bf16.xpose.msra.mxu0 0
      %1656 = vmatpush.bf16.xpose.msra.mxu0 0
      %1657 = vmatpush.bf16.xpose.msra.mxu0 0
      %1658 = vmatpush.bf16.xpose.msra.mxu0 0
      %1659 = vmatpush.bf16.xpose.msra.mxu0 0
      %1660 = vmatpush.bf16.xpose.msra.mxu0 0
      %1661 = vmatpush.bf16.xpose.msra.mxu0 0
      %1662 = vmatpush.bf16.xpose.msra.mxu0 %v1653
      %1663 = vmatmul.bf16.gmra.mxu0 %v1650
      %v1664 = vpop.f32.mrf.mxu0
      %v1665 = vadd.f32 0.0, %v1664
      %v1666 = vpop.f32.mrf.mxu0
      %1667 = vdwg.mxu0
      %v1669 = vunpack.c.l.b16 %v1589
      %v1670 = vpack.c.b16 %v1669, %v1669
      %1671 = vrot.lane.b32.xlu0 %v1670, 112
      %v1672 = vpop.permute.xlu0 %1671
      %1673 = vrot.lane.b32.xlu0 %v1670, 80
      %v1674 = vpop.permute.xlu0 %1673
      %v1676 = vsel %vm845, %v1672, 0
      %v1679 = vsel %vm845, %v1674, 0
      %1681 = vmatpush.bf16.xpose.msra.mxu0 0
      %1682 = vmatpush.bf16.xpose.msra.mxu0 0
      %1683 = vmatpush.bf16.xpose.msra.mxu0 0
      %1684 = vmatpush.bf16.xpose.msra.mxu0 0
      %1685 = vmatpush.bf16.xpose.msra.mxu0 0
      %1686 = vmatpush.bf16.xpose.msra.mxu0 0
      %1687 = vmatpush.bf16.xpose.msra.mxu0 0
      %1688 = vmatpush.bf16.xpose.msra.mxu0 %v1679
      %1689 = vmatmul.bf16.gmra.mxu0 %v1676
      %v1690 = vpop.f32.mrf.mxu0
      %v1691 = vadd.f32 0.0, %v1690
      %v1692 = vpop.f32.mrf.mxu0
      %1693 = vdwg.mxu0
      %v1694 = vsel %vm937, %v1613, -inf
      %1695 = vmax.xlane.f32.xlu0 %v1694
      %v1696 = vpop.xlane.xlu0 %1695
      %v1697 = vsel %vm937, %v1639, -inf
      %1698 = vmax.xlane.f32.xlu0 %v1697
      %v1699 = vpop.xlane.xlu0 %1698
      %v1700 = vsel %vm937, %v1665, -inf
      %1701 = vmax.xlane.f32.xlu0 %v1700
      %v1702 = vpop.xlane.xlu0 %1701
      %v1703 = vsel %vm937, %v1691, -inf
      %1704 = vmax.xlane.f32.xlu0 %v1703
      %v1705 = vpop.xlane.xlu0 %1704
      %v1706 = vsub.f32 %v1613, %v1696
      %v1707 = vsub.f32 %v1639, %v1699
      %v1708 = vsub.f32 %v1665, %v1702
      %v1709 = vsub.f32 %v1691, %v1705
      %v1710 = vmul.f32 %v1706, 1.442695
      %v1711 = vpow.pop %v1710
      %v1712 = vmul.f32 %v1707, 1.442695
      %v1713 = vpow.pop %v1712
      %v1714 = vmul.f32 %v1708, 1.442695
      %v1715 = vpow.pop %v1714
      %v1716 = vmul.f32 %v1709, 1.442695
      %v1717 = vpow.pop %v1716
      %v1718 = vsel %vm937, %v1711, 0.0
      %1719 = vadd.xlane.f32.xlu0 %v1718
      %v1720 = vpop.xlane.xlu0 %1719
      %v1721 = vsel %vm937, %v1713, 0.0
      %1722 = vadd.xlane.f32.xlu0 %v1721
      %v1723 = vpop.xlane.xlu0 %1722
      %v1724 = vsel %vm937, %v1715, 0.0
      %1725 = vadd.xlane.f32.xlu0 %v1724
      %v1726 = vpop.xlane.xlu0 %1725
      %v1727 = vsel %vm937, %v1717, 0.0
      %1728 = vadd.xlane.f32.xlu0 %v1727
      %v1729 = vpop.xlane.xlu0 %1728
      %v1730 = vrcp.pop %v1720
      %v1731 = vmul.f32 %v1720, %v1730
      %v1732 = vsub.f32 1.0, %v1731
      %v1733 = vmul.f32 %v1730, %v1732
      %v1734 = vadd.f32 %v1730, %v1733
      %vm1735 = vweird.f32 %v1720
      %vm1736 = vweird.f32 %v1730
      %vm1737 = vmor %vm1735, %vm1736
      %v1738 = vsel %vm1737, %v1730, %v1734
      %v1739 = vand.u32 2147483647, %v1720
      %vm1740 = vcmp.eq.f32.partialorder %v1739, 8.507059e+37
      %v1741 = vand.u32 %v1720, 2147483648
      %v1742 = vor.u32 1.1754944e-38, %v1741
      %v1743 = vsel %vm1740, %v1742, %v1738
      %v1744 = vmul.f32 %v1711, %v1743
      %v1745 = vrcp.pop %v1723
      %v1746 = vmul.f32 %v1723, %v1745
      %v1747 = vsub.f32 1.0, %v1746
      %v1748 = vmul.f32 %v1745, %v1747
      %v1749 = vadd.f32 %v1745, %v1748
      %vm1750 = vweird.f32 %v1723
      %vm1751 = vweird.f32 %v1745
      %vm1752 = vmor %vm1750, %vm1751
      %v1753 = vsel %vm1752, %v1745, %v1749
      %v1754 = vand.u32 2147483647, %v1723
      %vm1755 = vcmp.eq.f32.partialorder %v1754, 8.507059e+37
      %v1756 = vand.u32 %v1723, 2147483648
      %v1757 = vor.u32 1.1754944e-38, %v1756
      %v1758 = vsel %vm1755, %v1757, %v1753
      %v1759 = vmul.f32 %v1713, %v1758
      %v1760 = vrcp.pop %v1726
      %v1761 = vmul.f32 %v1726, %v1760
      %v1762 = vsub.f32 1.0, %v1761
      %v1763 = vmul.f32 %v1760, %v1762
      %v1764 = vadd.f32 %v1760, %v1763
      %vm1765 = vweird.f32 %v1726
      %vm1766 = vweird.f32 %v1760
      %vm1767 = vmor %vm1765, %vm1766
      %v1768 = vsel %vm1767, %v1760, %v1764
      %v1769 = vand.u32 2147483647, %v1726
      %vm1770 = vcmp.eq.f32.partialorder %v1769, 8.507059e+37
      %v1771 = vand.u32 %v1726, 2147483648
      %v1772 = vor.u32 1.1754944e-38, %v1771
      %v1773 = vsel %vm1770, %v1772, %v1768
      %v1774 = vmul.f32 %v1715, %v1773
      %v1775 = vrcp.pop %v1729
      %v1776 = vmul.f32 %v1729, %v1775
      %v1777 = vsub.f32 1.0, %v1776
      %v1778 = vmul.f32 %v1775, %v1777
      %v1779 = vadd.f32 %v1775, %v1778
      %vm1780 = vweird.f32 %v1729
      %vm1781 = vweird.f32 %v1775
      %vm1782 = vmor %vm1780, %vm1781
      %v1783 = vsel %vm1782, %v1775, %v1779
      %v1784 = vand.u32 2147483647, %v1729
      %vm1785 = vcmp.eq.f32.partialorder %v1784, 8.507059e+37
      %v1786 = vand.u32 %v1729, 2147483648
      %v1787 = vor.u32 1.1754944e-38, %v1786
      %v1788 = vsel %vm1785, %v1787, %v1783
      %v1789 = vmul.f32 %v1717, %v1788
      %v1790 = vpack.c.bf16 %v1744, %v1744
      %v1791 = vpack.c.bf16 %v1759, %v1759
      %v1792 = vpack.c.bf16 %v1774, %v1774
      %v1793 = vpack.c.bf16 %v1789, %v1789
      %1794 = vrot.lane.b32.xlu0 %v1592, 48
      %v1795 = vpop.permute.xlu0 %1794
      %v1797 = vsel %vm1040, %v1790, 0
      %v1800 = vand.u32 %v1795, %v1047
      %1802 = vmatpush.bf16.msra.mxu0 0
      %1803 = vmatpush.bf16.msra.mxu0 0
      %1804 = vmatpush.bf16.msra.mxu0 0
      %1805 = vmatpush.bf16.msra.mxu0 0
      %1806 = vmatpush.bf16.msra.mxu0 0
      %1807 = vmatpush.bf16.msra.mxu0 0
      %1808 = vmatpush.bf16.msra.mxu0 0
      %1809 = vmatpush.bf16.msra.mxu0 %v1800
      %1810 = vmatmul.bf16.gmra.mxu0 %v1797
      %v1811 = vpop.f32.mrf.mxu0
      %v1812 = vadd.f32 0.0, %v1811
      %v1813 = vpop.f32.mrf.mxu0
      %1814 = vdwg.mxu0
      %1815 = vrot.lane.b32.xlu0 %v1618, 48
      %v1816 = vpop.permute.xlu0 %1815
      %v1818 = vsel %vm1040, %v1791, 0
      %v1821 = vand.u32 %v1816, %v1047
      %1823 = vmatpush.bf16.msra.mxu0 0
      %1824 = vmatpush.bf16.msra.mxu0 0
      %1825 = vmatpush.bf16.msra.mxu0 0
      %1826 = vmatpush.bf16.msra.mxu0 0
      %1827 = vmatpush.bf16.msra.mxu0 0
      %1828 = vmatpush.bf16.msra.mxu0 0
      %1829 = vmatpush.bf16.msra.mxu0 0
      %1830 = vmatpush.bf16.msra.mxu0 %v1821
      %1831 = vmatmul.bf16.gmra.mxu0 %v1818
      %v1832 = vpop.f32.mrf.mxu0
      %v1833 = vadd.f32 0.0, %v1832
      %v1834 = vpop.f32.mrf.mxu0
      %1835 = vdwg.mxu0
      %1836 = vrot.lane.b32.xlu0 %v1644, 48
      %v1837 = vpop.permute.xlu0 %1836
      %v1839 = vsel %vm1040, %v1792, 0
      %v1842 = vand.u32 %v1837, %v1047
      %1844 = vmatpush.bf16.msra.mxu0 0
      %1845 = vmatpush.bf16.msra.mxu0 0
      %1846 = vmatpush.bf16.msra.mxu0 0
      %1847 = vmatpush.bf16.msra.mxu0 0
      %1848 = vmatpush.bf16.msra.mxu0 0
      %1849 = vmatpush.bf16.msra.mxu0 0
      %1850 = vmatpush.bf16.msra.mxu0 0
      %1851 = vmatpush.bf16.msra.mxu0 %v1842
      %1852 = vmatmul.bf16.gmra.mxu0 %v1839
      %v1853 = vpop.f32.mrf.mxu0
      %v1854 = vadd.f32 0.0, %v1853
      %v1855 = vpop.f32.mrf.mxu0
      %1856 = vdwg.mxu0
      %1857 = vrot.lane.b32.xlu0 %v1670, 48
      %v1858 = vpop.permute.xlu0 %1857
      %v1860 = vsel %vm1040, %v1793, 0
      %v1863 = vand.u32 %v1858, %v1047
      %1865 = vmatpush.bf16.msra.mxu0 0
      %1866 = vmatpush.bf16.msra.mxu0 0
      %1867 = vmatpush.bf16.msra.mxu0 0
      %1868 = vmatpush.bf16.msra.mxu0 0
      %1869 = vmatpush.bf16.msra.mxu0 0
      %1870 = vmatpush.bf16.msra.mxu0 0
      %1871 = vmatpush.bf16.msra.mxu0 0
      %1872 = vmatpush.bf16.msra.mxu0 %v1863
      %1873 = vmatmul.bf16.gmra.mxu0 %v1860
      %v1874 = vpop.f32.mrf.mxu0
      %v1875 = vadd.f32 0.0, %v1874
      %v1876 = vpop.f32.mrf.mxu0
      %1877 = vdwg.mxu0
      %v1882 = vrot.slane %v1812, 1
      %v1883 = vrot.slane %v1812, 2
      %v1884 = vrot.slane %v1812, 3
      %v1885 = vrot.slane %v1812, 4
      %v1886 = vrot.slane %v1833, 1
      %v1887 = vrot.slane %v1833, 2
      %v1888 = vrot.slane %v1833, 3
      %v1889 = vrot.slane %v1833, 4
      %v1890 = vrot.slane %v1854, 1
      %v1891 = vrot.slane %v1854, 2
      %v1892 = vrot.slane %v1854, 3
      %v1893 = vrot.slane %v1854, 4
      %v1894 = vrot.slane %v1875, 1
      %v1895 = vrot.slane %v1875, 2
      %v1896 = vrot.slane %v1875, 3
      %v1897 = vrot.slane %v1875, 4
      %1898 = vst [vmem:[#allocation1] ss:$9 sm:$0xff] %v1812
      %s1899 = scalar_lea.vmem [#allocation1], 1
      %1900 = vst [vmem:[%s1899] ss:$9 sm:$0xff] %v1882
      %s1901 = scalar_lea.vmem [#allocation1], 2
      %1902 = vst [vmem:[%s1901] ss:$9 sm:$0xff] %v1883
      %s1903 = scalar_lea.vmem [#allocation1], 3
      %1904 = vst [vmem:[%s1903] ss:$9 sm:$0xff] %v1884
      %s1905 = scalar_lea.vmem [#allocation1], 4
      %1906 = vst [vmem:[%s1905] ss:$9 sm:$0xff] %v1885
      %s1907 = scalar_lea.vmem [#allocation1], 5
      %1908 = vst [vmem:[%s1907] ss:$9 sm:$0xff] %v1833
      %s1909 = scalar_lea.vmem [#allocation1], 6
      %1910 = vst [vmem:[%s1909] ss:$9 sm:$0xff] %v1886
      %s1911 = scalar_lea.vmem [#allocation1], 7
      %1912 = vst [vmem:[%s1911] ss:$9 sm:$0xff] %v1887
      %v1913 = vld [vmem:[#allocation1] sm:$0xff]
      %1914 = vst [vmem:[#allocation1] ss:$9 sm:$0xff] %v1888
      %1915 = vst [vmem:[%s1899] ss:$9 sm:$0xff] %v1889
      %1916 = vst [vmem:[%s1901] ss:$9 sm:$0xff] %v1854
      %1917 = vst [vmem:[%s1903] ss:$9 sm:$0xff] %v1890
      %1918 = vst [vmem:[%s1905] ss:$9 sm:$0xff] %v1891
      %1919 = vst [vmem:[%s1907] ss:$9 sm:$0xff] %v1892
      %1920 = vst [vmem:[%s1909] ss:$9 sm:$0xff] %v1893
      %1921 = vst [vmem:[%s1911] ss:$9 sm:$0xff] %v1875
      %v1922 = vld [vmem:[#allocation1] sm:$0xff]
      %1923 = vst [vmem:[#allocation1] ss:$9 sm:$0xff] %v1894
      %1924 = vst [vmem:[%s1899] ss:$9 sm:$0xff] %v1895
      %1925 = vst [vmem:[%s1901] ss:$9 sm:$0xff] %v1896
      %1926 = vst [vmem:[%s1903] ss:$9 sm:$0xff] %v1897
      %v1927 = vld [vmem:[#allocation1] sm:$0xff]
      %v1931 = vpack.c.bf16 %v1922, %v1913
      %v1932 = vpack.c.bf16 %v1927, %v1927
      %v1933 = vld [vmem:[%s4 + $0x8] sm:$0xf]
      %v1935 = vsel %vm845, %v1931, 0
      %v1938 = vsel %vm845, %v1932, 0
      %v1941 = vsel %vm1537, %v1933, 0
      %1943 = vmatpush.bf16.msra.mxu0 0
      %1944 = vmatpush.bf16.msra.mxu0 0
      %1945 = vmatpush.bf16.msra.mxu0 0
      %1946 = vmatpush.bf16.msra.mxu0 0
      %1947 = vmatpush.bf16.msra.mxu0 0
      %1948 = vmatpush.bf16.msra.mxu0 0
      %1949 = vmatpush.bf16.msra.mxu0 0
      %1950 = vmatpush.bf16.msra.mxu0 %v1941
      %1951 = vmatmul.bf16.gmra.mxu0 %v1935
      %v1952 = vpop.f32.mrf.mxu0
      %v1953 = vadd.f32 0.0, %v1952
      %v1954 = vpop.f32.mrf.mxu0
      %v1955 = vadd.f32 0.0, %v1954
      %1956 = vmatmul.bf16.gmra.mxu0 %v1938
      %v1957 = vpop.f32.mrf.mxu0
      %v1958 = vadd.f32 0.0, %v1957
      %v1959 = vpop.f32.mrf.mxu0
      %1960 = vdwg.mxu0
      %v1961 = vadd.f32 %v1578, %v1953
      %v1962 = vadd.f32 %v1580, %v1955
      %v1963 = vadd.f32 %v1583, %v1958
      %v1964 = vld [vmem:[#allocation2] sm:$0x7]
      %v1965 = vld [vmem:[#allocation2 + $0x4] sm:$0x7]
      %v1966 = vld [vmem:[#allocation2 + $0x8] sm:$0x7]
      %v1967 = vld [vmem:[#allocation2 + $0xc] sm:$0x7]
      %v1969 = vunpack.c.l.b16 %v1964
      %v1970 = vpack.c.b16 %v1969, %v1969
      %1971 = vrot.lane.b32.xlu0 %v1970, 104
      %v1972 = vpop.permute.xlu0 %1971
      %1973 = vrot.lane.b32.xlu0 %v1970, 72
      %v1974 = vpop.permute.xlu0 %1973
      %v1976 = vsel %vm845, %v1972, 0
      %v1979 = vsel %vm845, %v1974, 0
      %1981 = vmatpush.bf16.xpose.msra.mxu0 0
      %1982 = vmatpush.bf16.xpose.msra.mxu0 0
      %1983 = vmatpush.bf16.xpose.msra.mxu0 0
      %1984 = vmatpush.bf16.xpose.msra.mxu0 0
      %1985 = vmatpush.bf16.xpose.msra.mxu0 0
      %1986 = vmatpush.bf16.xpose.msra.mxu0 0
      %1987 = vmatpush.bf16.xpose.msra.mxu0 0
      %1988 = vmatpush.bf16.xpose.msra.mxu0 %v1979
      %1989 = vmatmul.bf16.gmra.mxu0 %v1976
      %v1990 = vpop.f32.mrf.mxu0
      %v1991 = vadd.f32 0.0, %v1990
      %v1992 = vpop.f32.mrf.mxu0
      %1993 = vdwg.mxu0
      %v1995 = vunpack.c.l.b16 %v1965
      %v1996 = vpack.c.b16 %v1995, %v1995
      %1997 = vrot.lane.b32.xlu0 %v1996, 104
      %v1998 = vpop.permute.xlu0 %1997
      %1999 = vrot.lane.b32.xlu0 %v1996, 72
      %v2000 = vpop.permute.xlu0 %1999
      %v2002 = vsel %vm845, %v1998, 0
      %v2005 = vsel %vm845, %v2000, 0
      %2007 = vmatpush.bf16.xpose.msra.mxu0 0
      %2008 = vmatpush.bf16.xpose.msra.mxu0 0
      %2009 = vmatpush.bf16.xpose.msra.mxu0 0
      %2010 = vmatpush.bf16.xpose.msra.mxu0 0
      %2011 = vmatpush.bf16.xpose.msra.mxu0 0
      %2012 = vmatpush.bf16.xpose.msra.mxu0 0
      %2013 = vmatpush.bf16.xpose.msra.mxu0 0
      %2014 = vmatpush.bf16.xpose.msra.mxu0 %v2005
      %2015 = vmatmul.bf16.gmra.mxu0 %v2002
      %v2016 = vpop.f32.mrf.mxu0
      %v2017 = vadd.f32 0.0, %v2016
      %v2018 = vpop.f32.mrf.mxu0
      %2019 = vdwg.mxu0
      %v2021 = vunpack.c.l.b16 %v1966
      %v2022 = vpack.c.b16 %v2021, %v2021
      %2023 = vrot.lane.b32.xlu0 %v2022, 104
      %v2024 = vpop.permute.xlu0 %2023
      %2025 = vrot.lane.b32.xlu0 %v2022, 72
      %v2026 = vpop.permute.xlu0 %2025
      %v2028 = vsel %vm845, %v2024, 0
      %v2031 = vsel %vm845, %v2026, 0
      %2033 = vmatpush.bf16.xpose.msra.mxu0 0
      %2034 = vmatpush.bf16.xpose.msra.mxu0 0
      %2035 = vmatpush.bf16.xpose.msra.mxu0 0
      %2036 = vmatpush.bf16.xpose.msra.mxu0 0
      %2037 = vmatpush.bf16.xpose.msra.mxu0 0
      %2038 = vmatpush.bf16.xpose.msra.mxu0 0
      %2039 = vmatpush.bf16.xpose.msra.mxu0 0
      %2040 = vmatpush.bf16.xpose.msra.mxu0 %v2031
      %2041 = vmatmul.bf16.gmra.mxu0 %v2028
      %v2042 = vpop.f32.mrf.mxu0
      %v2043 = vadd.f32 0.0, %v2042
      %v2044 = vpop.f32.mrf.mxu0
      %2045 = vdwg.mxu0
      %v2047 = vunpack.c.l.b16 %v1967
      %v2048 = vpack.c.b16 %v2047, %v2047
      %2049 = vrot.lane.b32.xlu0 %v2048, 104
      %v2050 = vpop.permute.xlu0 %2049
      %2051 = vrot.lane.b32.xlu0 %v2048, 72
      %v2052 = vpop.permute.xlu0 %2051
      %v2054 = vsel %vm845, %v2050, 0
      %v2057 = vsel %vm845, %v2052, 0
      %2059 = vmatpush.bf16.xpose.msra.mxu0 0
      %2060 = vmatpush.bf16.xpose.msra.mxu0 0
      %2061 = vmatpush.bf16.xpose.msra.mxu0 0
      %2062 = vmatpush.bf16.xpose.msra.mxu0 0
      %2063 = vmatpush.bf16.xpose.msra.mxu0 0
      %2064 = vmatpush.bf16.xpose.msra.mxu0 0
      %2065 = vmatpush.bf16.xpose.msra.mxu0 0
      %2066 = vmatpush.bf16.xpose.msra.mxu0 %v2057
      %2067 = vmatmul.bf16.gmra.mxu0 %v2054
      %v2068 = vpop.f32.mrf.mxu0
      %v2069 = vadd.f32 0.0, %v2068
      %v2070 = vpop.f32.mrf.mxu0
      %2071 = vdwg.mxu0
      %v2072 = vsel %vm937, %v1991, -inf
      %2073 = vmax.xlane.f32.xlu0 %v2072
      %v2074 = vpop.xlane.xlu0 %2073
      %v2075 = vsel %vm937, %v2017, -inf
      %2076 = vmax.xlane.f32.xlu0 %v2075
      %v2077 = vpop.xlane.xlu0 %2076
      %v2078 = vsel %vm937, %v2043, -inf
      %2079 = vmax.xlane.f32.xlu0 %v2078
      %v2080 = vpop.xlane.xlu0 %2079
      %v2081 = vsel %vm937, %v2069, -inf
      %2082 = vmax.xlane.f32.xlu0 %v2081
      %v2083 = vpop.xlane.xlu0 %2082
      %v2084 = vsub.f32 %v1991, %v2074
      %v2085 = vsub.f32 %v2017, %v2077
      %v2086 = vsub.f32 %v2043, %v2080
      %v2087 = vsub.f32 %v2069, %v2083
      %v2088 = vmul.f32 %v2084, 1.442695
      %v2089 = vpow.pop %v2088
      %v2090 = vmul.f32 %v2085, 1.442695
      %v2091 = vpow.pop %v2090
      %v2092 = vmul.f32 %v2086, 1.442695
      %v2093 = vpow.pop %v2092
      %v2094 = vmul.f32 %v2087, 1.442695
      %v2095 = vpow.pop %v2094
      %v2096 = vsel %vm937, %v2089, 0.0
      %2097 = vadd.xlane.f32.xlu0 %v2096
      %v2098 = vpop.xlane.xlu0 %2097
      %v2099 = vsel %vm937, %v2091, 0.0
      %2100 = vadd.xlane.f32.xlu0 %v2099
      %v2101 = vpop.xlane.xlu0 %2100
      %v2102 = vsel %vm937, %v2093, 0.0
      %2103 = vadd.xlane.f32.xlu0 %v2102
      %v2104 = vpop.xlane.xlu0 %2103
      %v2105 = vsel %vm937, %v2095, 0.0
      %2106 = vadd.xlane.f32.xlu0 %v2105
      %v2107 = vpop.xlane.xlu0 %2106
      %v2108 = vrcp.pop %v2098
      %v2109 = vmul.f32 %v2098, %v2108
      %v2110 = vsub.f32 1.0, %v2109
      %v2111 = vmul.f32 %v2108, %v2110
      %v2112 = vadd.f32 %v2108, %v2111
      %vm2113 = vweird.f32 %v2098
      %vm2114 = vweird.f32 %v2108
      %vm2115 = vmor %vm2113, %vm2114
      %v2116 = vsel %vm2115, %v2108, %v2112
      %v2117 = vand.u32 2147483647, %v2098
      %vm2118 = vcmp.eq.f32.partialorder %v2117, 8.507059e+37
      %v2119 = vand.u32 %v2098, 2147483648
      %v2120 = vor.u32 1.1754944e-38, %v2119
      %v2121 = vsel %vm2118, %v2120, %v2116
      %v2122 = vmul.f32 %v2089, %v2121
      %v2123 = vrcp.pop %v2101
      %v2124 = vmul.f32 %v2101, %v2123
      %v2125 = vsub.f32 1.0, %v2124
      %v2126 = vmul.f32 %v2123, %v2125
      %v2127 = vadd.f32 %v2123, %v2126
      %vm2128 = vweird.f32 %v2101
      %vm2129 = vweird.f32 %v2123
      %vm2130 = vmor %vm2128, %vm2129
      %v2131 = vsel %vm2130, %v2123, %v2127
      %v2132 = vand.u32 2147483647, %v2101
      %vm2133 = vcmp.eq.f32.partialorder %v2132, 8.507059e+37
      %v2134 = vand.u32 %v2101, 2147483648
      %v2135 = vor.u32 1.1754944e-38, %v2134
      %v2136 = vsel %vm2133, %v2135, %v2131
      %v2137 = vmul.f32 %v2091, %v2136
      %v2138 = vrcp.pop %v2104
      %v2139 = vmul.f32 %v2104, %v2138
      %v2140 = vsub.f32 1.0, %v2139
      %v2141 = vmul.f32 %v2138, %v2140
      %v2142 = vadd.f32 %v2138, %v2141
      %vm2143 = vweird.f32 %v2104
      %vm2144 = vweird.f32 %v2138
      %vm2145 = vmor %vm2143, %vm2144
      %v2146 = vsel %vm2145, %v2138, %v2142
      %v2147 = vand.u32 2147483647, %v2104
      %vm2148 = vcmp.eq.f32.partialorder %v2147, 8.507059e+37
      %v2149 = vand.u32 %v2104, 2147483648
      %v2150 = vor.u32 1.1754944e-38, %v2149
      %v2151 = vsel %vm2148, %v2150, %v2146
      %v2152 = vmul.f32 %v2093, %v2151
      %v2153 = vrcp.pop %v2107
      %v2154 = vmul.f32 %v2107, %v2153
      %v2155 = vsub.f32 1.0, %v2154
      %v2156 = vmul.f32 %v2153, %v2155
      %v2157 = vadd.f32 %v2153, %v2156
      %vm2158 = vweird.f32 %v2107
      %vm2159 = vweird.f32 %v2153
      %vm2160 = vmor %vm2158, %vm2159
      %v2161 = vsel %vm2160, %v2153, %v2157
      %v2162 = vand.u32 2147483647, %v2107
      %vm2163 = vcmp.eq.f32.partialorder %v2162, 8.507059e+37
      %v2164 = vand.u32 %v2107, 2147483648
      %v2165 = vor.u32 1.1754944e-38, %v2164
      %v2166 = vsel %vm2163, %v2165, %v2161
      %v2167 = vmul.f32 %v2095, %v2166
      %v2168 = vpack.c.bf16 %v2122, %v2122
      %v2169 = vpack.c.bf16 %v2137, %v2137
      %v2170 = vpack.c.bf16 %v2152, %v2152
      %v2171 = vpack.c.bf16 %v2167, %v2167
      %2172 = vrot.lane.b32.xlu0 %v1970, 40
      %v2173 = vpop.permute.xlu0 %2172
      %v2175 = vsel %vm1040, %v2168, 0
      %v2178 = vand.u32 %v2173, %v1047
      %2180 = vmatpush.bf16.msra.mxu0 0
      %2181 = vmatpush.bf16.msra.mxu0 0
      %2182 = vmatpush.bf16.msra.mxu0 0
      %2183 = vmatpush.bf16.msra.mxu0 0
      %2184 = vmatpush.bf16.msra.mxu0 0
      %2185 = vmatpush.bf16.msra.mxu0 0
      %2186 = vmatpush.bf16.msra.mxu0 0
      %2187 = vmatpush.bf16.msra.mxu0 %v2178
      %2188 = vmatmul.bf16.gmra.mxu0 %v2175
      %v2189 = vpop.f32.mrf.mxu0
      %v2190 = vadd.f32 0.0, %v2189
      %v2191 = vpop.f32.mrf.mxu0
      %2192 = vdwg.mxu0
      %2193 = vrot.lane.b32.xlu0 %v1996, 40
      %v2194 = vpop.permute.xlu0 %2193
      %v2196 = vsel %vm1040, %v2169, 0
      %v2199 = vand.u32 %v2194, %v1047
      %2201 = vmatpush.bf16.msra.mxu0 0
      %2202 = vmatpush.bf16.msra.mxu0 0
      %2203 = vmatpush.bf16.msra.mxu0 0
      %2204 = vmatpush.bf16.msra.mxu0 0
      %2205 = vmatpush.bf16.msra.mxu0 0
      %2206 = vmatpush.bf16.msra.mxu0 0
      %2207 = vmatpush.bf16.msra.mxu0 0
      %2208 = vmatpush.bf16.msra.mxu0 %v2199
      %2209 = vmatmul.bf16.gmra.mxu0 %v2196
      %v2210 = vpop.f32.mrf.mxu0
      %v2211 = vadd.f32 0.0, %v2210
      %v2212 = vpop.f32.mrf.mxu0
      %2213 = vdwg.mxu0
      %2214 = vrot.lane.b32.xlu0 %v2022, 40
      %v2215 = vpop.permute.xlu0 %2214
      %v2217 = vsel %vm1040, %v2170, 0
      %v2220 = vand.u32 %v2215, %v1047
      %2222 = vmatpush.bf16.msra.mxu0 0
      %2223 = vmatpush.bf16.msra.mxu0 0
      %2224 = vmatpush.bf16.msra.mxu0 0
      %2225 = vmatpush.bf16.msra.mxu0 0
      %2226 = vmatpush.bf16.msra.mxu0 0
      %2227 = vmatpush.bf16.msra.mxu0 0
      %2228 = vmatpush.bf16.msra.mxu0 0
      %2229 = vmatpush.bf16.msra.mxu0 %v2220
      %2230 = vmatmul.bf16.gmra.mxu0 %v2217
      %v2231 = vpop.f32.mrf.mxu0
      %v2232 = vadd.f32 0.0, %v2231
      %v2233 = vpop.f32.mrf.mxu0
      %2234 = vdwg.mxu0
      %2235 = vrot.lane.b32.xlu0 %v2048, 40
      %v2236 = vpop.permute.xlu0 %2235
      %v2238 = vsel %vm1040, %v2171, 0
      %v2241 = vand.u32 %v2236, %v1047
      %2243 = vmatpush.bf16.msra.mxu0 0
      %2244 = vmatpush.bf16.msra.mxu0 0
      %2245 = vmatpush.bf16.msra.mxu0 0
      %2246 = vmatpush.bf16.msra.mxu0 0
      %2247 = vmatpush.bf16.msra.mxu0 0
      %2248 = vmatpush.bf16.msra.mxu0 0
      %2249 = vmatpush.bf16.msra.mxu0 0
      %2250 = vmatpush.bf16.msra.mxu0 %v2241
      %2251 = vmatmul.bf16.gmra.mxu0 %v2238
      %v2252 = vpop.f32.mrf.mxu0
      %v2253 = vadd.f32 0.0, %v2252
      %v2254 = vpop.f32.mrf.mxu0
      %2255 = vdwg.mxu0
      %v2260 = vrot.slane %v2190, 1
      %v2261 = vrot.slane %v2190, 2
      %v2262 = vrot.slane %v2190, 3
      %v2263 = vrot.slane %v2190, 4
      %v2264 = vrot.slane %v2211, 1
      %v2265 = vrot.slane %v2211, 2
      %v2266 = vrot.slane %v2211, 3
      %v2267 = vrot.slane %v2211, 4
      %v2268 = vrot.slane %v2232, 1
      %v2269 = vrot.slane %v2232, 2
      %v2270 = vrot.slane %v2232, 3
      %v2271 = vrot.slane %v2232, 4
      %v2272 = vrot.slane %v2253, 1
      %v2273 = vrot.slane %v2253, 2
      %v2274 = vrot.slane %v2253, 3
      %v2275 = vrot.slane %v2253, 4
      %2276 = vst [vmem:[#allocation1] ss:$9 sm:$0xff] %v2190
      %s2277 = scalar_lea.vmem [#allocation1], 1
      %2278 = vst [vmem:[%s2277] ss:$9 sm:$0xff] %v2260
      %s2279 = scalar_lea.vmem [#allocation1], 2
      %2280 = vst [vmem:[%s2279] ss:$9 sm:$0xff] %v2261
      %s2281 = scalar_lea.vmem [#allocation1], 3
      %2282 = vst [vmem:[%s2281] ss:$9 sm:$0xff] %v2262
      %s2283 = scalar_lea.vmem [#allocation1], 4
      %2284 = vst [vmem:[%s2283] ss:$9 sm:$0xff] %v2263
      %s2285 = scalar_lea.vmem [#allocation1], 5
      %2286 = vst [vmem:[%s2285] ss:$9 sm:$0xff] %v2211
      %s2287 = scalar_lea.vmem [#allocation1], 6
      %2288 = vst [vmem:[%s2287] ss:$9 sm:$0xff] %v2264
      %s2289 = scalar_lea.vmem [#allocation1], 7
      %2290 = vst [vmem:[%s2289] ss:$9 sm:$0xff] %v2265
      %v2291 = vld [vmem:[#allocation1] sm:$0xff]
      %2292 = vst [vmem:[#allocation1] ss:$9 sm:$0xff] %v2266
      %2293 = vst [vmem:[%s2277] ss:$9 sm:$0xff] %v2267
      %2294 = vst [vmem:[%s2279] ss:$9 sm:$0xff] %v2232
      %2295 = vst [vmem:[%s2281] ss:$9 sm:$0xff] %v2268
      %2296 = vst [vmem:[%s2283] ss:$9 sm:$0xff] %v2269
      %2297 = vst [vmem:[%s2285] ss:$9 sm:$0xff] %v2270
      %2298 = vst [vmem:[%s2287] ss:$9 sm:$0xff] %v2271
      %2299 = vst [vmem:[%s2289] ss:$9 sm:$0xff] %v2253
      %v2300 = vld [vmem:[#allocation1] sm:$0xff]
      %2301 = vst [vmem:[#allocation1] ss:$9 sm:$0xff] %v2272
      %2302 = vst [vmem:[%s2277] ss:$9 sm:$0xff] %v2273
      %2303 = vst [vmem:[%s2279] ss:$9 sm:$0xff] %v2274
      %2304 = vst [vmem:[%s2281] ss:$9 sm:$0xff] %v2275
      %v2305 = vld [vmem:[#allocation1] sm:$0xff]
      %v2309 = vpack.c.bf16 %v2300, %v2291
      %v2310 = vpack.c.bf16 %v2305, %v2305
      %v2311 = vld [vmem:[%s4 + $0xc] sm:$0xf]
      %v2313 = vsel %vm845, %v2309, 0
      %v2316 = vsel %vm845, %v2310, 0
      %v2319 = vsel %vm1537, %v2311, 0
      %2321 = vmatpush.bf16.msra.mxu0 0
      %2322 = vmatpush.bf16.msra.mxu0 0
      %2323 = vmatpush.bf16.msra.mxu0 0
      %2324 = vmatpush.bf16.msra.mxu0 0
      %2325 = vmatpush.bf16.msra.mxu0 0
      %2326 = vmatpush.bf16.msra.mxu0 0
      %2327 = vmatpush.bf16.msra.mxu0 0
      %2328 = vmatpush.bf16.msra.mxu0 %v2319
      %2329 = vmatmul.bf16.gmra.mxu0 %v2313
      %v2330 = vpop.f32.mrf.mxu0
      %v2331 = vadd.f32 0.0, %v2330
      %v2332 = vpop.f32.mrf.mxu0
      %v2333 = vadd.f32 0.0, %v2332
      %2334 = vmatmul.bf16.gmra.mxu0 %v2316
      %v2335 = vpop.f32.mrf.mxu0
      %v2336 = vadd.f32 0.0, %v2335
      %v2337 = vpop.f32.mrf.mxu0
      %2338 = vdwg.mxu0
      %v2339 = vadd.f32 %v1961, %v2331
      %v2340 = vadd.f32 %v1962, %v2333
      %v2341 = vadd.f32 %v1963, %v2336
      %v2342 = vld [vmem:[%s5] sm:$0x1]
      %v2344 = vperm.slane %v2342, 0
      %v2346 = vadd.f32 %v2339, %v2344
      %v2347 = vadd.f32 %v2340, %v2344
      %v2348 = vadd.f32 %v2341, %v2344
      %v2352 = vrot.slane %v2346, 1
      %v2353 = vrot.slane %v2346, 2
      %v2354 = vrot.slane %v2346, 3
      %v2355 = vrot.slane %v2346, 4
      %v2356 = vrot.slane %v2346, 5
      %v2357 = vrot.slane %v2346, 6
      %v2358 = vrot.slane %v2346, 7
      %v2359 = vrot.slane %v2347, 1
      %v2360 = vrot.slane %v2347, 2
      %v2361 = vrot.slane %v2347, 3
      %v2362 = vrot.slane %v2347, 4
      %v2363 = vrot.slane %v2347, 5
      %v2364 = vrot.slane %v2347, 6
      %v2365 = vrot.slane %v2347, 7
      %v2366 = vrot.slane %v2348, 1
      %v2367 = vrot.slane %v2348, 2
      %v2368 = vrot.slane %v2348, 3
      %2369 = vst [vmem:[#allocation1] ss:$9 sm:$0xff] %v2346
      %s2370 = scalar_lea.vmem [#allocation1], 1
      %2371 = vst [vmem:[%s2370] ss:$9 sm:$0xff] %v2352
      %s2372 = scalar_lea.vmem [#allocation1], 2
      %2373 = vst [vmem:[%s2372] ss:$9 sm:$0xff] %v2353
      %s2374 = scalar_lea.vmem [#allocation1], 3
      %2375 = vst [vmem:[%s2374] ss:$9 sm:$0xff] %v2354
      %s2376 = scalar_lea.vmem [#allocation1], 4
      %2377 = vst [vmem:[%s2376] ss:$9 sm:$0xff] %v2355
      %v2378 = vld [vmem:[#allocation1] sm:$0xff]
      %2379 = vst [vmem:[#allocation1] ss:$9 sm:$0xff] %v2356
      %2380 = vst [vmem:[%s2370] ss:$9 sm:$0xff] %v2357
      %2381 = vst [vmem:[%s2372] ss:$9 sm:$0xff] %v2358
      %2382 = vst [vmem:[%s2374] ss:$9 sm:$0xff] %v2347
      %2383 = vst [vmem:[%s2376] ss:$9 sm:$0xff] %v2359
      %v2384 = vld [vmem:[#allocation1] sm:$0xff]
      %2385 = vst [vmem:[#allocation1] ss:$9 sm:$0xff] %v2360
      %2386 = vst [vmem:[%s2370] ss:$9 sm:$0xff] %v2361
      %2387 = vst [vmem:[%s2372] ss:$9 sm:$0xff] %v2362
      %2388 = vst [vmem:[%s2374] ss:$9 sm:$0xff] %v2363
      %2389 = vst [vmem:[%s2376] ss:$9 sm:$0xff] %v2364
      %v2390 = vld [vmem:[#allocation1] sm:$0xff]
      %2391 = vst [vmem:[#allocation1] ss:$9 sm:$0xff] %v2365
      %2392 = vst [vmem:[%s2370] ss:$9 sm:$0xff] %v2348
      %2393 = vst [vmem:[%s2372] ss:$9 sm:$0xff] %v2366
      %2394 = vst [vmem:[%s2374] ss:$9 sm:$0xff] %v2367
      %2395 = vst [vmem:[%s2376] ss:$9 sm:$0xff] %v2368
      %v2396 = vld [vmem:[#allocation1] sm:$0xff]
      %v2401 = vpack.c.bf16 %v2378, %v2378
      %v2402 = vpack.c.bf16 %v2384, %v2384
      %v2403 = vpack.c.bf16 %v2390, %v2390
      %v2404 = vpack.c.bf16 %v2396, %v2396
      %vm2405 = vcmask 256000
      %vm2406 = vmand %vm2405, %vm822
      %v2407 = vld [vmem:[%s253] sm:$0x7]
      %v2408 = vsel %vm2406, %v2401, %v2407
      %2409 = vst [vmem:[%s253] sm:$0x7] %v2408
      %v2410 = vld [vmem:[%s253 + $0x4] sm:$0x7]
      %v2411 = vsel %vm2406, %v2402, %v2410
      %2412 = vst [vmem:[%s253 + $0x4] sm:$0x7] %v2411
      %v2413 = vld [vmem:[%s253 + $0x8] sm:$0x7]
      %v2414 = vsel %vm2406, %v2403, %v2413
      %2415 = vst [vmem:[%s253 + $0x8] sm:$0x7] %v2414
      %v2416 = vld [vmem:[%s253 + $0xc] sm:$0x7]
      %v2417 = vsel %vm2406, %v2404, %v2416
      %2418 = vst [vmem:[%s253 + $0xc] sm:$0x7] %v2417
      %s2419 = smul.u32 4, %s17
      %p2420 = scmp.lt.s32.totalorder %s2419, 7
      %s2421 = scalar_select %p2420, %s2419, 7
      %s2422 = smul.addr %s2421, 4
      %s2423 = scalar_lea.vmem %s6, %s2422
      // Predicated region
      $region45: #{block_forward.4} parent=43 // pred_check
        %p2424 = pneg %p166
      $region46: #{block_forward.4} parent=43 // pred_check_branch
        %2426 = sbr.rel (%p2424) target = $region48
      $region47: #{block_forward.4} parent=43 // pred_region
        %s2427 = smul.u32 4, %s17
      $region48: #{block_forward.4} parent=43 // pred_fallthru
        _
    $region44: #{block_forward.4} parent=5 // pred_fallthru
      _
    %p2428 = scmp.le.s32.totalorder 2, %s12
    // Predicated region
    $region49: #{block_forward.4} parent=5 // pred_check
      %p2429 = pneg %p2428
    $region50: #{block_forward.4} parent=5 // pred_check_branch
      %2431 = sbr.rel (%p2429) target = $region52
    $region51: #{block_forward.4} parent=5 // pred_region
      %s2432 = ssub.s32 %s12, 2
      // Predicated region
      $region53: #{block_forward.4} parent=51 // pred_check
        %p2433 = pneg %p172
      $region54: #{block_forward.4} parent=51 // pred_check_branch
        %2435 = sbr.rel (%p2433) target = $region56
      $region55: #{block_forward.4} parent=51 // pred_region
        %s2436 = smul.u32 4, %s18
        %p2437 = scmp.lt.s32.totalorder %s2436, 7
        %s2438 = scalar_select %p2437, %s2436, 7
        %s2439 = smul.addr %s2438, 4
        %s2440 = scalar_lea.vmem %s6, %s2439
      $region56: #{block_forward.4} parent=51 // pred_fallthru
        _
    $region52: #{block_forward.4} parent=5 // pred_fallthru
      _
  $region6: #{block_forward.4} parent=0 // loop_footer
    %s16 = sadd.s32 1, %s12
  $region7: #{block_forward.4} parent=0 // loop_footer_branch
    %11 = sbr.rel target = $region3
  $region8: #{block_forward.4} parent=0 // loop_exit
    _

</llo_original>
